<compile_context>
chip_gen: v6e
topology: v6e:2x2x1
jax: 0.10.0
libtpu: 0.0.40
codegen_flags: <defaults>
</compile_context>

<pallas_src>
import functools

import jax
import jax.numpy as jnp
from jax import lax
from jax.experimental import pallas as pl
from jax.experimental.pallas import tpu as pltpu


def _rcab_kernel(x_ref, m1_ref, m2_ref, sp_ref, out_ref, *, nb, h, w, c, cr):
    """One batch chunk (Nb elements) per grid step; everything resident in VMEM.

    Layouts (lane axis last):
      x_ref  : (Nb, H, W*C)        unpadded input rows (conv input + residual)
      m1_ref : (3, W*C, W*C)       conv1 banded weights, one matrix per ky
      m2_ref : (3, W*C, W*C)       conv2 banded weights
      sp_ref : (4+2*Cr, W*C)       small pack:
                 row 0            b1 tiled over w
                 row 1            b2 tiled over w
                 rows [2, 2+Cr)   pool_wd = tile(wd^T)/(H*W)   (GAP + down-proj fused)
                 rows [2+Cr,2+2Cr) wu rows (first C lanes valid)
                 row 2+2Cr        bd (first Cr lanes valid)
                 row 3+2Cr        bu (first C lanes valid)
    """
    f32 = jnp.float32
    wc = w * c
    m = nb * h

    x3 = x_ref[...]                              # (nb, h, wc)
    xs = x3.reshape(m, wc)                       # lane-dense slab, layout no-op

    sp = sp_ref[...]                             # (4+2cr, wc) -> a few vregs
    b1_row = sp[0:1, :]
    b2_row = sp[1:2, :]

    def conv3x3(slab, wm_ref, brow):
        # P_ky[r] = slab[r] @ wm[ky];   out[r] = P0[r-1] + P1[r] + P2[r+1] + b
        # (width halo is baked into the banded weights; height halo is handled
        #  by per-element row shifts below, never mixing batch elements.)
        p0 = jnp.dot(slab, wm_ref[0], preferred_element_type=f32)
        p1 = jnp.dot(slab, wm_ref[1], preferred_element_type=f32)
        p2 = jnp.dot(slab, wm_ref[2], preferred_element_type=f32)
        z = jnp.zeros((nb, 1, wc), f32)
        up = jnp.concatenate([z, p0.reshape(nb, h, wc)[:, : h - 1, :]], axis=1)
        dn = jnp.concatenate([p2.reshape(nb, h, wc)[:, 1:, :], z], axis=1)
        return (up + dn).reshape(m, wc) + p1 + brow

    h1 = jnp.maximum(conv3x3(xs, m1_ref, b1_row), 0.0)      # (m, wc)
    h2 = conv3x3(h1, m2_ref, b2_row)                         # (m, wc)

    # ---- channel attention (squeeze/excite) on VPU/XLU, no tiny MXU matmuls ----
    h2_3 = h2.reshape(nb, h, wc)
    colsum = jnp.sum(h2_3, axis=1)                           # (nb, wc) sublane reduce
    lin = None
    for j in range(cr):                                      # cr is tiny & static
        pool_wd_j = sp[2 + j: 3 + j, :]                      # (1, wc)
        bd_j = sp[2 + 2 * cr: 3 + 2 * cr, j: j + 1]          # (1, 1)
        wu_j = sp[2 + cr + j: 3 + cr + j, :c]                # (1, c)
        hid_j = jnp.maximum(
            jnp.sum(colsum * pool_wd_j, axis=1, keepdims=True) + bd_j, 0.0)  # (nb,1)
        t = hid_j * wu_j                                     # (nb, c)
        lin = t if lin is None else lin + t
    bu_row = sp[3 + 2 * cr: 4 + 2 * cr, :c]                  # (1, c)
    att = jax.nn.sigmoid(lin + bu_row)                       # (nb, c)
    gate = jnp.tile(att, (1, w))                             # (nb, wc)

    # ---- scale + residual; single lane-dense (W*C wide) unmasked store ----
    out_ref[...] = h2_3 * gate[:, None, :] + x3


def _band_conv_matrices(w_hwio, W):
    """Fold the kx taps of a 3x3 'SAME' conv into banded matrices (one per ky),
    with out-of-range taps omitted (== zero width padding).  Built via exact
    gather/select so packed weights are bit-identical to the originals.

    w_hwio: (3, 3, C, Co)  ->  (3, W*C, W*Co).
    """
    KH, KW, C, Co = w_hwio.shape
    wi = jnp.arange(W)[:, None]                    # input width position
    wo = jnp.arange(W)[None, :]                    # output width position
    kx = wi - wo + (KW // 2)                       # (W, W) tap index
    kxc = jnp.clip(kx, 0, KW - 1)
    gathered = w_hwio[:, kxc, :, :]                # (KH, W, W, C, Co)
    valid = ((kx >= 0) & (kx < KW))[None, :, :, None, None]
    m = jnp.where(valid, gathered, jnp.zeros((), w_hwio.dtype))
    m = jnp.transpose(m, (0, 1, 3, 2, 4))          # (KH, W(in), C, W(out), Co)
    return m.reshape(KH, W * C, W * Co)


def pack_rcab_params(params, H, W):
    """Per-parameter-set packing (hoisted out of the per-forward path)."""
    f32 = jnp.float32
    C = params["w1"].shape[2]
    Cr = params["wd"].shape[1]
    WC = W * C

    m1 = _band_conv_matrices(params["w1"].astype(f32), W)           # (3, WC, WC)
    m2 = _band_conv_matrices(params["w2"].astype(f32), W)           # (3, WC, WC)

    rows = [
        jnp.tile(params["b1"].reshape(1, C), (1, W)).astype(f32),   # b1 row
        jnp.tile(params["b2"].reshape(1, C), (1, W)).astype(f32),   # b2 row
        (jnp.tile(params["wd"].T, (1, W)) / float(H * W)).astype(f32),  # pool_wd (Cr, WC)
        jnp.zeros((Cr, WC), f32).at[:, :C].set(params["wu"]),        # wu rows
        jnp.zeros((1, WC), f32).at[0, :Cr].set(params["bd"].reshape(Cr)),
        jnp.zeros((1, WC), f32).at[0, :C].set(params["bu"].reshape(C)),
    ]
    sp = jnp.concatenate(rows, axis=0)                               # (4+2Cr, WC)
    return {"m1": m1, "m2": m2, "sp": sp}


def _pick_block_batch(n, h, target_rows=256):
    """Largest divisor of n whose slab height nb*h stays near the MXU depth."""
    target = max(1, min(n, max(1, target_rows // max(h, 1))))
    for nb in range(target, 0, -1):
        if n % nb == 0:
            return nb
    return 1


def rcab_forward(x_nchw, packed):
    """x_nchw: (N, C, H, W) float32 -> (N, C, H, W) float32."""
    N, C, H, W = x_nchw.shape
    WC = W * C
    cr = (packed["sp"].shape[0] - 4) // 2
    nb = _pick_block_batch(N, H)
    steps = N // nb

    # NCHW -> (N, H, W*C): channels on lanes, rows on sublanes.
    x_rows = jnp.transpose(x_nchw, (0, 2, 3, 1)).reshape(N, H, WC)

    kernel = functools.partial(_rcab_kernel, nb=nb, h=H, w=W, c=C, cr=cr)

    # VMEM budget derived from actual usage: double-buffered weights + small
    # pack + in/out blocks + slack for in-kernel temporaries.
    weight_bytes = 4 * (packed["m1"].size + packed["m2"].size + packed["sp"].size)
    act_bytes = 4 * nb * H * WC
    vmem_budget = int(2 * weight_bytes + 4 * act_bytes + (8 << 20))

    def _const_index_map(rank):
        zeros = (0,) * rank
        return lambda b: zeros

    def _const(arr):
        return pl.BlockSpec(arr.shape, _const_index_map(arr.ndim))

    out_rows = pl.pallas_call(
        kernel,
        out_shape=jax.ShapeDtypeStruct((N, H, WC), jnp.float32),
        grid_spec=pltpu.PrefetchScalarGridSpec(
            num_scalar_prefetch=0,
            grid=(steps,),
            in_specs=[
                pl.BlockSpec((nb, H, WC), lambda b: (b, 0, 0)),   # input / residual
                _const(packed["m1"]),                              # conv1 banded weights
                _const(packed["m2"]),                              # conv2 banded weights
                _const(packed["sp"]),                              # coalesced small params
            ],
            out_specs=pl.BlockSpec((nb, H, WC), lambda b: (b, 0, 0)),
        ),
        compiler_params=pltpu.CompilerParams(
            # single step (tiny N): "arbitrary" avoids both v7x TCs each pulling
            # a full weight copy; multi-step: shard the batch across cores.
            dimension_semantics=("parallel",) if steps > 1 else ("arbitrary",),
            vmem_limit_bytes=vmem_budget),
    )(x_rows, packed["m1"], packed["m2"], packed["sp"])

    return jnp.transpose(out_rows.reshape(N, H, W, C), (0, 3, 1, 2))


def ref_forward(x_nchw, params):
    """Pure-JAX reference for verification."""
    x = jnp.transpose(x_nchw, (0, 2, 3, 1))
    dn = ("NHWC", "HWIO", "NHWC")
    h = lax.conv_general_dilated(x, params["w1"], (1, 1), "SAME",
                                 dimension_numbers=dn) + params["b1"]
    h = jnp.maximum(h, 0.0)
    h = lax.conv_general_dilated(h, params["w2"], (1, 1), "SAME",
                                 dimension_numbers=dn) + params["b2"]
    y = h.mean(axis=(1, 2), keepdims=True)            # (N,1,1,C)
    y = jnp.maximum(jnp.einsum("nijc,cr->nijr", y, params["wd"]) + params["bd"], 0.0)
    y = jax.nn.sigmoid(jnp.einsum("nijr,rc->nijc", y, params["wu"]) + params["bu"])
    out = h * y + x
    return jnp.transpose(out, (0, 3, 1, 2))


def init_params(key, n_feat, reduction):
    c_red = n_feat // reduction
    ks = jax.random.split(key, 6)
    s = 0.05
    return {
        "w1": s * jax.random.normal(ks[0], (3, 3, n_feat, n_feat), jnp.float32),
        "b1": s * jax.random.normal(ks[1], (1, n_feat), jnp.float32),
        "w2": s * jax.random.normal(ks[2], (3, 3, n_feat, n_feat), jnp.float32),
        "b2": s * jax.random.normal(ks[3], (1, n_feat), jnp.float32),
        "wd": s * jax.random.normal(ks[4], (n_feat, c_red), jnp.float32),
        "bd": jnp.zeros((1, c_red), jnp.float32),
        "wu": s * jax.random.normal(ks[5], (c_red, n_feat), jnp.float32),
        "bu": jnp.zeros((1, n_feat), jnp.float32),
    }


if __name__ == "__main__":
    # RCAB(n_feat=32, kernel_size=3, act=ReLU, reduction=16) on (N=2, C=32, 16x16).
    N, C, H, W = 2, 32, 16, 16
    reduction = 16

    key = jax.random.PRNGKey(0)
    kx, kp = jax.random.split(key)
    x = jax.random.normal(kx, (N, C, H, W), jnp.float32)
    params = init_params(kp, C, reduction)

    # Band/packing happens once per parameter set (hoisted off the forward path).
    packed = pack_rcab_params(params, H, W)

    fwd = jax.jit(rcab_forward)
    out = jax.block_until_ready(fwd(x, packed))
    ref = jax.block_until_ready(ref_forward(x, params))

    assert out.shape == (N, C, H, W)
    assert jnp.allclose(out, ref, atol=1e-4, rtol=1e-4), "mismatch vs JAX reference"
    print("KERNEL_OK")
</pallas_src>

<mosaic_0001>
module attributes {stable_mosaic.version = 11 : i64} {
  func.func @_rcab_kernel(%arg0: i32, %arg1: memref<2x16x512xf32, #tpu.memory_space<vmem>>, %arg2: memref<3x512x512xf32, #tpu.memory_space<vmem>>, %arg3: memref<3x512x512xf32, #tpu.memory_space<vmem>>, %arg4: memref<8x512xf32, #tpu.memory_space<vmem>>, %arg5: memref<2x16x512xf32, #tpu.memory_space<vmem>>) attributes {dimension_semantics = [#tpu.dimension_semantics<arbitrary>], iteration_bounds = array<i64: 1>, scalar_prefetch = 0 : i64, scratch_operands = 0 : i64, tpu.core_type = #tpu.core_type<tc>, window_params = [{transform_indices = @transform_0, window_bounds = array<i64: 2, 16, 512>}, {pipeline_mode = #tpu.pipeline_mode<synchronous>, transform_indices = @transform_1, window_bounds = array<i64: 3, 512, 512>}, {pipeline_mode = #tpu.pipeline_mode<synchronous>, transform_indices = @transform_2, window_bounds = array<i64: 3, 512, 512>}, {pipeline_mode = #tpu.pipeline_mode<synchronous>, transform_indices = @transform_3, window_bounds = array<i64: 8, 512>}, {transform_indices = @transform_4, window_bounds = array<i64: 2, 16, 512>}]} {
    %c0 = arith.constant 0 : index
    %c0_0 = arith.constant 0 : index
    %c0_1 = arith.constant 0 : index
    %0 = vector.load %arg1[%c0, %c0_0, %c0_1] : memref<2x16x512xf32, #tpu.memory_space<vmem>>, vector<2x16x512xf32>
    %1 = vector.shape_cast %0 : vector<2x16x512xf32> to vector<32x512xf32>
    %c0_2 = arith.constant 0 : index
    %c0_3 = arith.constant 0 : index
    %2 = vector.load %arg4[%c0_2, %c0_3] : memref<8x512xf32, #tpu.memory_space<vmem>>, vector<8x512xf32>
    %3 = vector.extract_strided_slice %2 {offsets = [0, 0], sizes = [1, 512], strides = [1, 1]} : vector<8x512xf32> to vector<1x512xf32>
    %4 = vector.extract_strided_slice %2 {offsets = [1, 0], sizes = [1, 512], strides = [1, 1]} : vector<8x512xf32> to vector<1x512xf32>
    %c0_4 = arith.constant 0 : index
    %c0_5 = arith.constant 0 : index
    %c0_6 = arith.constant 0 : index
    %5 = vector.load %arg2[%c0_4, %c0_5, %c0_6] : memref<3x512x512xf32, #tpu.memory_space<vmem>>, vector<1x512x512xf32>
    %6 = vector.shape_cast %5 : vector<1x512x512xf32> to vector<512x512xf32>
    %cst = arith.constant dense<0.000000e+00> : vector<32x512xf32>
    %7 = tpu.matmul %1, %6, %cst {dimension_numbers = #tpu.dot_dimension_numbers<[1], [0], [0], [1], [0, 0, 1, 1], [], []>} : vector<32x512xf32>, vector<512x512xf32>, vector<32x512xf32> -> vector<32x512xf32>
    %c1 = arith.constant 1 : index
    %c0_7 = arith.constant 0 : index
    %c0_8 = arith.constant 0 : index
    %8 = vector.load %arg2[%c1, %c0_7, %c0_8] : memref<3x512x512xf32, #tpu.memory_space<vmem>>, vector<1x512x512xf32>
    %9 = vector.shape_cast %8 : vector<1x512x512xf32> to vector<512x512xf32>
    %cst_9 = arith.constant dense<0.000000e+00> : vector<32x512xf32>
    %10 = tpu.matmul %1, %9, %cst_9 {dimension_numbers = #tpu.dot_dimension_numbers<[1], [0], [0], [1], [0, 0, 1, 1], [], []>} : vector<32x512xf32>, vector<512x512xf32>, vector<32x512xf32> -> vector<32x512xf32>
    %c2 = arith.constant 2 : index
    %c0_10 = arith.constant 0 : index
    %c0_11 = arith.constant 0 : index
    %11 = vector.load %arg2[%c2, %c0_10, %c0_11] : memref<3x512x512xf32, #tpu.memory_space<vmem>>, vector<1x512x512xf32>
    %12 = vector.shape_cast %11 : vector<1x512x512xf32> to vector<512x512xf32>
    %cst_12 = arith.constant dense<0.000000e+00> : vector<32x512xf32>
    %13 = tpu.matmul %1, %12, %cst_12 {dimension_numbers = #tpu.dot_dimension_numbers<[1], [0], [0], [1], [0, 0, 1, 1], [], []>} : vector<32x512xf32>, vector<512x512xf32>, vector<32x512xf32> -> vector<32x512xf32>
    %cst_13 = arith.constant 0.000000e+00 : f32
    %14 = vector.broadcast %cst_13 : f32 to vector<2x1x512xf32>
    %15 = vector.shape_cast %7 : vector<32x512xf32> to vector<2x16x512xf32>
    %16 = vector.extract_strided_slice %15 {offsets = [0, 0, 0], sizes = [2, 15, 512], strides = [1, 1, 1]} : vector<2x16x512xf32> to vector<2x15x512xf32>
    %17 = tpu.concatenate %14, %16 in 1 : vector<2x1x512xf32>, vector<2x15x512xf32> -> vector<2x16x512xf32>
    %18 = vector.shape_cast %13 : vector<32x512xf32> to vector<2x16x512xf32>
    %19 = vector.extract_strided_slice %18 {offsets = [0, 1, 0], sizes = [2, 15, 512], strides = [1, 1, 1]} : vector<2x16x512xf32> to vector<2x15x512xf32>
    %20 = tpu.concatenate %19, %14 in 1 : vector<2x15x512xf32>, vector<2x1x512xf32> -> vector<2x16x512xf32>
    %21 = arith.addf %17, %20 : vector<2x16x512xf32>
    %22 = vector.shape_cast %21 : vector<2x16x512xf32> to vector<32x512xf32>
    %23 = arith.addf %22, %10 : vector<32x512xf32>
    %24 = vector.broadcast %3 : vector<1x512xf32> to vector<32x512xf32>
    %25 = arith.addf %23, %24 : vector<32x512xf32>
    %cst_14 = arith.constant 0.000000e+00 : f32
    %26 = vector.broadcast %cst_14 : f32 to vector<32x512xf32>
    %27 = arith.maximumf %25, %26 : vector<32x512xf32>
    %c0_15 = arith.constant 0 : index
    %c0_16 = arith.constant 0 : index
    %c0_17 = arith.constant 0 : index
    %28 = vector.load %arg3[%c0_15, %c0_16, %c0_17] : memref<3x512x512xf32, #tpu.memory_space<vmem>>, vector<1x512x512xf32>
    %29 = vector.shape_cast %28 : vector<1x512x512xf32> to vector<512x512xf32>
    %cst_18 = arith.constant dense<0.000000e+00> : vector<32x512xf32>
    %30 = tpu.matmul %27, %29, %cst_18 {dimension_numbers = #tpu.dot_dimension_numbers<[1], [0], [0], [1], [0, 0, 1, 1], [], []>} : vector<32x512xf32>, vector<512x512xf32>, vector<32x512xf32> -> vector<32x512xf32>
    %c1_19 = arith.constant 1 : index
    %c0_20 = arith.constant 0 : index
    %c0_21 = arith.constant 0 : index
    %31 = vector.load %arg3[%c1_19, %c0_20, %c0_21] : memref<3x512x512xf32, #tpu.memory_space<vmem>>, vector<1x512x512xf32>
    %32 = vector.shape_cast %31 : vector<1x512x512xf32> to vector<512x512xf32>
    %cst_22 = arith.constant dense<0.000000e+00> : vector<32x512xf32>
    %33 = tpu.matmul %27, %32, %cst_22 {dimension_numbers = #tpu.dot_dimension_numbers<[1], [0], [0], [1], [0, 0, 1, 1], [], []>} : vector<32x512xf32>, vector<512x512xf32>, vector<32x512xf32> -> vector<32x512xf32>
    %c2_23 = arith.constant 2 : index
    %c0_24 = arith.constant 0 : index
    %c0_25 = arith.constant 0 : index
    %34 = vector.load %arg3[%c2_23, %c0_24, %c0_25] : memref<3x512x512xf32, #tpu.memory_space<vmem>>, vector<1x512x512xf32>
    %35 = vector.shape_cast %34 : vector<1x512x512xf32> to vector<512x512xf32>
    %cst_26 = arith.constant dense<0.000000e+00> : vector<32x512xf32>
    %36 = tpu.matmul %27, %35, %cst_26 {dimension_numbers = #tpu.dot_dimension_numbers<[1], [0], [0], [1], [0, 0, 1, 1], [], []>} : vector<32x512xf32>, vector<512x512xf32>, vector<32x512xf32> -> vector<32x512xf32>
    %cst_27 = arith.constant 0.000000e+00 : f32
    %37 = vector.broadcast %cst_27 : f32 to vector<2x1x512xf32>
    %38 = vector.shape_cast %30 : vector<32x512xf32> to vector<2x16x512xf32>
    %39 = vector.extract_strided_slice %38 {offsets = [0, 0, 0], sizes = [2, 15, 512], strides = [1, 1, 1]} : vector<2x16x512xf32> to vector<2x15x512xf32>
    %40 = tpu.concatenate %37, %39 in 1 : vector<2x1x512xf32>, vector<2x15x512xf32> -> vector<2x16x512xf32>
    %41 = vector.shape_cast %36 : vector<32x512xf32> to vector<2x16x512xf32>
    %42 = vector.extract_strided_slice %41 {offsets = [0, 1, 0], sizes = [2, 15, 512], strides = [1, 1, 1]} : vector<2x16x512xf32> to vector<2x15x512xf32>
    %43 = tpu.concatenate %42, %37 in 1 : vector<2x15x512xf32>, vector<2x1x512xf32> -> vector<2x16x512xf32>
    %44 = arith.addf %40, %43 : vector<2x16x512xf32>
    %45 = vector.shape_cast %44 : vector<2x16x512xf32> to vector<32x512xf32>
    %46 = arith.addf %45, %33 : vector<32x512xf32>
    %47 = vector.broadcast %4 : vector<1x512xf32> to vector<32x512xf32>
    %48 = arith.addf %46, %47 : vector<32x512xf32>
    %49 = vector.shape_cast %48 : vector<32x512xf32> to vector<2x16x512xf32>
    %cst_28 = arith.constant dense<0.000000e+00> : vector<2x512xf32>
    %50 = vector.multi_reduction <add>, %49, %cst_28 [1] : vector<2x16x512xf32> to vector<2x512xf32>
    %51 = vector.extract_strided_slice %2 {offsets = [2, 0], sizes = [1, 512], strides = [1, 1]} : vector<8x512xf32> to vector<1x512xf32>
    %52 = vector.extract_strided_slice %2 {offsets = [6, 0], sizes = [1, 1], strides = [1, 1]} : vector<8x512xf32> to vector<1x1xf32>
    %53 = vector.extract_strided_slice %2 {offsets = [4, 0], sizes = [1, 32], strides = [1, 1]} : vector<8x512xf32> to vector<1x32xf32>
    %54 = vector.broadcast %51 : vector<1x512xf32> to vector<2x512xf32>
    %55 = arith.mulf %50, %54 : vector<2x512xf32>
    %cst_29 = arith.constant dense<0.000000e+00> : vector<2xf32>
    %56 = vector.multi_reduction <add>, %55, %cst_29 [1] : vector<2x512xf32> to vector<2xf32>
    %57 = vector.shape_cast %56 : vector<2xf32> to vector<2x1xf32>
    %58 = vector.broadcast %52 : vector<1x1xf32> to vector<2x1xf32>
    %59 = arith.addf %57, %58 : vector<2x1xf32>
    %cst_30 = arith.constant 0.000000e+00 : f32
    %60 = vector.broadcast %cst_30 : f32 to vector<2x1xf32>
    %61 = arith.maximumf %59, %60 : vector<2x1xf32>
    %62 = vector.broadcast %61 : vector<2x1xf32> to vector<2x32xf32>
    %63 = vector.broadcast %53 : vector<1x32xf32> to vector<2x32xf32>
    %64 = arith.mulf %62, %63 : vector<2x32xf32>
    %65 = vector.extract_strided_slice %2 {offsets = [3, 0], sizes = [1, 512], strides = [1, 1]} : vector<8x512xf32> to vector<1x512xf32>
    %66 = vector.extract_strided_slice %2 {offsets = [6, 1], sizes = [1, 1], strides = [1, 1]} : vector<8x512xf32> to vector<1x1xf32>
    %67 = vector.extract_strided_slice %2 {offsets = [5, 0], sizes = [1, 32], strides = [1, 1]} : vector<8x512xf32> to vector<1x32xf32>
    %68 = vector.broadcast %65 : vector<1x512xf32> to vector<2x512xf32>
    %69 = arith.mulf %50, %68 : vector<2x512xf32>
    %cst_31 = arith.constant dense<0.000000e+00> : vector<2xf32>
    %70 = vector.multi_reduction <add>, %69, %cst_31 [1] : vector<2x512xf32> to vector<2xf32>
    %71 = vector.shape_cast %70 : vector<2xf32> to vector<2x1xf32>
    %72 = vector.broadcast %66 : vector<1x1xf32> to vector<2x1xf32>
    %73 = arith.addf %71, %72 : vector<2x1xf32>
    %cst_32 = arith.constant 0.000000e+00 : f32
    %74 = vector.broadcast %cst_32 : f32 to vector<2x1xf32>
    %75 = arith.maximumf %73, %74 : vector<2x1xf32>
    %76 = vector.broadcast %75 : vector<2x1xf32> to vector<2x32xf32>
    %77 = vector.broadcast %67 : vector<1x32xf32> to vector<2x32xf32>
    %78 = arith.mulf %76, %77 : vector<2x32xf32>
    %79 = arith.addf %64, %78 : vector<2x32xf32>
    %80 = vector.extract_strided_slice %2 {offsets = [7, 0], sizes = [1, 32], strides = [1, 1]} : vector<8x512xf32> to vector<1x32xf32>
    %81 = vector.broadcast %80 : vector<1x32xf32> to vector<2x32xf32>
    %82 = arith.addf %79, %81 : vector<2x32xf32>
    %83 = arith.negf %82 : vector<2x32xf32>
    %84 = math.exp %83 : vector<2x32xf32>
    %cst_33 = arith.constant 1.000000e+00 : f32
    %85 = vector.broadcast %cst_33 : f32 to vector<2x32xf32>
    %86 = arith.addf %85, %84 : vector<2x32xf32>
    %87 = arith.divf %85, %86 : vector<2x32xf32>
    %88 = tpu.concatenate %87, %87, %87, %87, %87, %87, %87, %87, %87, %87, %87, %87, %87, %87, %87, %87 in 1 : vector<2x32xf32>, vector<2x32xf32>, vector<2x32xf32>, vector<2x32xf32>, vector<2x32xf32>, vector<2x32xf32>, vector<2x32xf32>, vector<2x32xf32>, vector<2x32xf32>, vector<2x32xf32>, vector<2x32xf32>, vector<2x32xf32>, vector<2x32xf32>, vector<2x32xf32>, vector<2x32xf32>, vector<2x32xf32> -> vector<2x512xf32>
    %89 = vector.shape_cast %88 : vector<2x512xf32> to vector<2x1x512xf32>
    %90 = vector.broadcast %89 : vector<2x1x512xf32> to vector<2x16x512xf32>
    %91 = arith.mulf %49, %90 : vector<2x16x512xf32>
    %92 = arith.addf %91, %0 : vector<2x16x512xf32>
    %c0_34 = arith.constant 0 : index
    %c0_35 = arith.constant 0 : index
    %c0_36 = arith.constant 0 : index
    %93 = vector.load %arg5[%c0_34, %c0_35, %c0_36] : memref<2x16x512xf32, #tpu.memory_space<vmem>>, vector<2x16x512xf32>
    tpu.vector_store %arg5[%c0_34, %c0_35, %c0_36], %92 {strides = array<i32>} : memref<2x16x512xf32, #tpu.memory_space<vmem>>, vector<2x16x512xf32>,
    return
  }
  func.func @transform_0(%arg0: i32) -> (i32, i32, i32) {
    %c0_i32 = arith.constant 0 : i32
    %c0_i32_0 = arith.constant 0 : i32
    %c0_i32_1 = arith.constant 0 : i32
    return %arg0, %c0_i32, %c0_i32_0 : i32, i32, i32
  }
  func.func @transform_1(%arg0: i32) -> (i32, i32, i32) {
    %c0_i32 = arith.constant 0 : i32
    %c0_i32_0 = arith.constant 0 : i32
    %c0_i32_1 = arith.constant 0 : i32
    %c0_i32_2 = arith.constant 0 : i32
    return %c0_i32, %c0_i32_0, %c0_i32_1 : i32, i32, i32
  }
  func.func @transform_2(%arg0: i32) -> (i32, i32, i32) {
    %c0_i32 = arith.constant 0 : i32
    %c0_i32_0 = arith.constant 0 : i32
    %c0_i32_1 = arith.constant 0 : i32
    %c0_i32_2 = arith.constant 0 : i32
    return %c0_i32, %c0_i32_0, %c0_i32_1 : i32, i32, i32
  }
  func.func @transform_3(%arg0: i32) -> (i32, i32) {
    %c0_i32 = arith.constant 0 : i32
    %c0_i32_0 = arith.constant 0 : i32
    %c0_i32_1 = arith.constant 0 : i32
    return %c0_i32, %c0_i32_0 : i32, i32
  }
  func.func @transform_4(%arg0: i32) -> (i32, i32, i32) {
    %c0_i32 = arith.constant 0 : i32
    %c0_i32_0 = arith.constant 0 : i32
    %c0_i32_1 = arith.constant 0 : i32
    return %arg0, %c0_i32, %c0_i32_0 : i32, i32, i32
  }
}

</mosaic_0001>

<llo_original>
// kernel: rcab_forward.1
$region0: #{rcab_forward.1}
  #allocation0 [shape = 'u32[]', space=smem, size = 0x4, offset = 0x4, fixed_abs, tag = 'smem constant byte address 0x4 - core index']
  #allocation1 [shape = 'u32[144,128]{1,0:T(1,128)}', space=vmem, size = 0x12000, scoped, tag = 'internal scratch']
  %s0 = inlined_call_operand.vmem [shape: f32[2,16,512], index: 0, kind: input, shape index: {}]
  %s1 = inlined_call_operand.hbm [shape: f32[3,512,512], index: 1, kind: input, shape index: {}]
  %s2 = inlined_call_operand.hbm [shape: f32[3,512,512], index: 2, kind: input, shape index: {}]
  %s3 = inlined_call_operand.hbm [shape: f32[8,512], index: 3, kind: input, shape index: {}]
  %s4 = inlined_call_operand.vmem [shape: f32[2,16,512], index: 4, kind: output, shape index: {}]
  %s5 = sld [smem:[#allocation0]]
  $region38: #{rcab_forward.1} parent=0
    _
  %s7 = ssub.s32 1, %s5
  %s8 = scalar_select 0, %s7, %s5
  $region1: #{rcab_forward.1} parent=0
    #allocation2 [shape = 'u8[3145728]{0}', space=vmem, size = 0x300000, scoped, tag = 'input window, operand 1, single buffered']
    #allocation3 [shape = 's32[1]{0}', space=sflag, size = 0x4, scoped, tag = 'scoped memory for rcab_forward.1']
    #allocation4 [shape = 'u8[3145728]{0}', space=vmem, size = 0x300000, scoped, tag = 'input window, operand 2, single buffered']
    #allocation5 [shape = 's32[1]{0}', space=sflag, size = 0x4, scoped, tag = 'scoped memory for rcab_forward.1']
    #allocation6 [shape = 'u8[16384]{0}', space=vmem, size = 0x4000, scoped, tag = 'input window, operand 3, single buffered']
    %9 = vsyncpa [#allocation3], 0
    %10 = vsyncpa [#allocation5], 0
    // Predicated region
    $region2: #{rcab_forward.1} parent=1 // pred_check
      _
    $region3: #{rcab_forward.1} parent=1 // pred_check_branch
      %12 = sbr.rel (0) target = $region5
    $region4: #{rcab_forward.1} parent=1 // pred_region
      _
    $region5: #{rcab_forward.1} parent=1 // pred_fallthru
      _
    // Predicated region
    $region6: #{rcab_forward.1} parent=1 // pred_check
      _
    $region7: #{rcab_forward.1} parent=1 // pred_check_branch
      %14 = sbr.rel (0) target = $region9
    $region8: #{rcab_forward.1} parent=1 // pred_region
      %s16 = ssub.s32 98304, 98304
      %17 = vsyncadd [#allocation3], %s16
      %s18 = sshll.u32 [#allocation2], 4
      %s19 = int_to_ptr.vmem [resolvable:$true] %s18
      %24 = dma.hbm_to_vmem [thread:$0]  %s1, 98304, %s19, [#allocation3], 512, 512, 32
    $region9: #{rcab_forward.1} parent=1 // pred_fallthru
      _
    // Predicated region
    $region10: #{rcab_forward.1} parent=1 // pred_check
      _
    $region11: #{rcab_forward.1} parent=1 // pred_check_branch
      %26 = sbr.rel (0) target = $region13
    $region12: #{rcab_forward.1} parent=1 // pred_region
      %s28 = ssub.s32 98304, 98304
      %29 = vsyncadd [#allocation5], %s28
      %s30 = sshll.u32 [#allocation4], 4
      %s31 = int_to_ptr.vmem [resolvable:$true] %s30
      %36 = dma.hbm_to_vmem [thread:$0]  %s2, 98304, %s31, [#allocation5], 512, 512, 32
    $region13: #{rcab_forward.1} parent=1 // pred_fallthru
      _
    // Predicated region
    $region14: #{rcab_forward.1} parent=1 // pred_check
      _
    $region15: #{rcab_forward.1} parent=1 // pred_check_branch
      %38 = sbr.rel (0) target = $region17
    $region16: #{rcab_forward.1} parent=1 // pred_region
      %s40 = ssub.s32 512, 512
      %41 = vsyncadd [#allocation5], %s40
      %s43 = sshll.u32 [#allocation6], 4
      %s44 = int_to_ptr.vmem [resolvable:$true] %s43
      %46 = dma.hbm_to_vmem [thread:$0]  %s3, 512, %s44, [#allocation5]
    $region17: #{rcab_forward.1} parent=1 // pred_fallthru
      _
    // Predicated region
    $region18: #{rcab_forward.1} parent=1 // pred_check
      _
    $region19: #{rcab_forward.1} parent=1 // pred_check_branch
      %48 = sbr.rel (0) target = $region21
    $region20: #{rcab_forward.1} parent=1 // pred_region
      %49 = dma.done [#allocation3], 98304
    $region21: #{rcab_forward.1} parent=1 // pred_fallthru
      _
    // Predicated region
    $region22: #{rcab_forward.1} parent=1 // pred_check
      _
    $region23: #{rcab_forward.1} parent=1 // pred_check_branch
      %51 = sbr.rel (0) target = $region25
    $region24: #{rcab_forward.1} parent=1 // pred_region
      %52 = dma.done [#allocation5], 98304
    $region25: #{rcab_forward.1} parent=1 // pred_fallthru
      _
    // Predicated region
    $region26: #{rcab_forward.1} parent=1 // pred_check
      _
    $region27: #{rcab_forward.1} parent=1 // pred_check_branch
      %54 = sbr.rel (0) target = $region29
    $region28: #{rcab_forward.1} parent=1 // pred_region
      %55 = dma.done [#allocation5], 512
    $region29: #{rcab_forward.1} parent=1 // pred_fallthru
      _
    %v56 = vld [vmem:[%s0] sm:$0xff]
    %v57 = vld [vmem:[%s0 + $0x8] sm:$0xff]
    %v58 = vld [vmem:[%s0 + $0x10] sm:$0xff]
    %v59 = vld [vmem:[%s0 + $0x18] sm:$0xff]
    %v60 = vld [vmem:[%s0 + $0x20] sm:$0xff]
    %v61 = vld [vmem:[%s0 + $0x28] sm:$0xff]
    %v62 = vld [vmem:[%s0 + $0x30] sm:$0xff]
    %v63 = vld [vmem:[%s0 + $0x38] sm:$0xff]
    %v64 = vld [vmem:[%s0 + $0x40] sm:$0xff]
    %v65 = vld [vmem:[%s0 + $0x48] sm:$0xff]
    %v66 = vld [vmem:[%s0 + $0x50] sm:$0xff]
    %v67 = vld [vmem:[%s0 + $0x58] sm:$0xff]
    %v68 = vld [vmem:[%s0 + $0x60] sm:$0xff]
    %v69 = vld [vmem:[%s0 + $0x68] sm:$0xff]
    %v70 = vld [vmem:[%s0 + $0x70] sm:$0xff]
    %v71 = vld [vmem:[%s0 + $0x78] sm:$0xff]
    %v72 = vld [vmem:[#allocation6] sm:$0xff]
    %v73 = vld [vmem:[#allocation6 + $0x8] sm:$0xff]
    %v74 = vld [vmem:[#allocation6 + $0x10] sm:$0xff]
    %v75 = vld [vmem:[#allocation6 + $0x18] sm:$0xff]
    %v76 = vld [vmem:[#allocation2] sm:$0xff]
    %v77 = vld [vmem:[#allocation2 + $0x8] sm:$0xff]
    %v78 = vld [vmem:[#allocation2 + $0x10] sm:$0xff]
    %v79 = vld [vmem:[#allocation2 + $0x18] sm:$0xff]
    %v80 = vld [vmem:[#allocation2 + $0x20] sm:$0xff]
    %v81 = vld [vmem:[#allocation2 + $0x28] sm:$0xff]
    %v82 = vld [vmem:[#allocation2 + $0x30] sm:$0xff]
    %v83 = vld [vmem:[#allocation2 + $0x38] sm:$0xff]
    %v84 = vld [vmem:[#allocation2 + $0x40] sm:$0xff]
    %v85 = vld [vmem:[#allocation2 + $0x48] sm:$0xff]
    %v86 = vld [vmem:[#allocation2 + $0x50] sm:$0xff]
    %v87 = vld [vmem:[#allocation2 + $0x58] sm:$0xff]
    %v88 = vld [vmem:[#allocation2 + $0x60] sm:$0xff]
    %v89 = vld [vmem:[#allocation2 + $0x68] sm:$0xff]
    %v90 = vld [vmem:[#allocation2 + $0x70] sm:$0xff]
    %v91 = vld [vmem:[#allocation2 + $0x78] sm:$0xff]
    %v92 = vld [vmem:[#allocation2 + $0x80] sm:$0xff]
    %v93 = vld [vmem:[#allocation2 + $0x88] sm:$0xff]
    %v94 = vld [vmem:[#allocation2 + $0x90] sm:$0xff]
    %v95 = vld [vmem:[#allocation2 + $0x98] sm:$0xff]
    %v96 = vld [vmem:[#allocation2 + $0xa0] sm:$0xff]
    %v97 = vld [vmem:[#allocation2 + $0xa8] sm:$0xff]
    %v98 = vld [vmem:[#allocation2 + $0xb0] sm:$0xff]
    %v99 = vld [vmem:[#allocation2 + $0xb8] sm:$0xff]
    %v100 = vld [vmem:[#allocation2 + $0xc0] sm:$0xff]
    %v101 = vld [vmem:[#allocation2 + $0xc8] sm:$0xff]
    %v102 = vld [vmem:[#allocation2 + $0xd0] sm:$0xff]
    %v103 = vld [vmem:[#allocation2 + $0xd8] sm:$0xff]
    %v104 = vld [vmem:[#allocation2 + $0xe0] sm:$0xff]
    %v105 = vld [vmem:[#allocation2 + $0xe8] sm:$0xff]
    %v106 = vld [vmem:[#allocation2 + $0xf0] sm:$0xff]
    %v107 = vld [vmem:[#allocation2 + $0xf8] sm:$0xff]
    %v108 = vld [vmem:[#allocation2 + $0x100] sm:$0xff]
    %v109 = vld [vmem:[#allocation2 + $0x108] sm:$0xff]
    %v110 = vld [vmem:[#allocation2 + $0x110] sm:$0xff]
    %v111 = vld [vmem:[#allocation2 + $0x118] sm:$0xff]
    %v112 = vld [vmem:[#allocation2 + $0x120] sm:$0xff]
    %v113 = vld [vmem:[#allocation2 + $0x128] sm:$0xff]
    %v114 = vld [vmem:[#allocation2 + $0x130] sm:$0xff]
    %v115 = vld [vmem:[#allocation2 + $0x138] sm:$0xff]
    %v116 = vld [vmem:[#allocation2 + $0x140] sm:$0xff]
    %v117 = vld [vmem:[#allocation2 + $0x148] sm:$0xff]
    %v118 = vld [vmem:[#allocation2 + $0x150] sm:$0xff]
    %v119 = vld [vmem:[#allocation2 + $0x158] sm:$0xff]
    %v120 = vld [vmem:[#allocation2 + $0x160] sm:$0xff]
    %v121 = vld [vmem:[#allocation2 + $0x168] sm:$0xff]
    %v122 = vld [vmem:[#allocation2 + $0x170] sm:$0xff]
    %v123 = vld [vmem:[#allocation2 + $0x178] sm:$0xff]
    %v124 = vld [vmem:[#allocation2 + $0x180] sm:$0xff]
    %v125 = vld [vmem:[#allocation2 + $0x188] sm:$0xff]
    %v126 = vld [vmem:[#allocation2 + $0x190] sm:$0xff]
    %v127 = vld [vmem:[#allocation2 + $0x198] sm:$0xff]
    %v128 = vld [vmem:[#allocation2 + $0x1a0] sm:$0xff]
    %v129 = vld [vmem:[#allocation2 + $0x1a8] sm:$0xff]
    %v130 = vld [vmem:[#allocation2 + $0x1b0] sm:$0xff]
    %v131 = vld [vmem:[#allocation2 + $0x1b8] sm:$0xff]
    %v132 = vld [vmem:[#allocation2 + $0x1c0] sm:$0xff]
    %v133 = vld [vmem:[#allocation2 + $0x1c8] sm:$0xff]
    %v134 = vld [vmem:[#allocation2 + $0x1d0] sm:$0xff]
    %v135 = vld [vmem:[#allocation2 + $0x1d8] sm:$0xff]
    %v136 = vld [vmem:[#allocation2 + $0x1e0] sm:$0xff]
    %v137 = vld [vmem:[#allocation2 + $0x1e8] sm:$0xff]
    %v138 = vld [vmem:[#allocation2 + $0x1f0] sm:$0xff]
    %v139 = vld [vmem:[#allocation2 + $0x1f8] sm:$0xff]
    %v140 = vld [vmem:[#allocation2 + $0x200] sm:$0xff]
    %v141 = vld [vmem:[#allocation2 + $0x208] sm:$0xff]
    %v142 = vld [vmem:[#allocation2 + $0x210] sm:$0xff]
    %v143 = vld [vmem:[#allocation2 + $0x218] sm:$0xff]
    %v144 = vld [vmem:[#allocation2 + $0x220] sm:$0xff]
    %v145 = vld [vmem:[#allocation2 + $0x228] sm:$0xff]
    %v146 = vld [vmem:[#allocation2 + $0x230] sm:$0xff]
    %v147 = vld [vmem:[#allocation2 + $0x238] sm:$0xff]
    %v148 = vld [vmem:[#allocation2 + $0x240] sm:$0xff]
    %v149 = vld [vmem:[#allocation2 + $0x248] sm:$0xff]
    %v150 = vld [vmem:[#allocation2 + $0x250] sm:$0xff]
    %v151 = vld [vmem:[#allocation2 + $0x258] sm:$0xff]
    %v152 = vld [vmem:[#allocation2 + $0x260] sm:$0xff]
    %v153 = vld [vmem:[#allocation2 + $0x268] sm:$0xff]
    %v154 = vld [vmem:[#allocation2 + $0x270] sm:$0xff]
    %v155 = vld [vmem:[#allocation2 + $0x278] sm:$0xff]
    %v156 = vld [vmem:[#allocation2 + $0x280] sm:$0xff]
    %v157 = vld [vmem:[#allocation2 + $0x288] sm:$0xff]
    %v158 = vld [vmem:[#allocation2 + $0x290] sm:$0xff]
    %v159 = vld [vmem:[#allocation2 + $0x298] sm:$0xff]
    %v160 = vld [vmem:[#allocation2 + $0x2a0] sm:$0xff]
    %v161 = vld [vmem:[#allocation2 + $0x2a8] sm:$0xff]
    %v162 = vld [vmem:[#allocation2 + $0x2b0] sm:$0xff]
    %v163 = vld [vmem:[#allocation2 + $0x2b8] sm:$0xff]
    %v164 = vld [vmem:[#allocation2 + $0x2c0] sm:$0xff]
    %v165 = vld [vmem:[#allocation2 + $0x2c8] sm:$0xff]
    %v166 = vld [vmem:[#allocation2 + $0x2d0] sm:$0xff]
    %v167 = vld [vmem:[#allocation2 + $0x2d8] sm:$0xff]
    %v168 = vld [vmem:[#allocation2 + $0x2e0] sm:$0xff]
    %v169 = vld [vmem:[#allocation2 + $0x2e8] sm:$0xff]
    %v170 = vld [vmem:[#allocation2 + $0x2f0] sm:$0xff]
    %v171 = vld [vmem:[#allocation2 + $0x2f8] sm:$0xff]
    %v172 = vld [vmem:[#allocation2 + $0x300] sm:$0xff]
    %v173 = vld [vmem:[#allocation2 + $0x308] sm:$0xff]
    %v174 = vld [vmem:[#allocation2 + $0x310] sm:$0xff]
    %v175 = vld [vmem:[#allocation2 + $0x318] sm:$0xff]
    %v176 = vld [vmem:[#allocation2 + $0x320] sm:$0xff]
    %v177 = vld [vmem:[#allocation2 + $0x328] sm:$0xff]
    %v178 = vld [vmem:[#allocation2 + $0x330] sm:$0xff]
    %v179 = vld [vmem:[#allocation2 + $0x338] sm:$0xff]
    %v180 = vld [vmem:[#allocation2 + $0x340] sm:$0xff]
    %v181 = vld [vmem:[#allocation2 + $0x348] sm:$0xff]
    %v182 = vld [vmem:[#allocation2 + $0x350] sm:$0xff]
    %v183 = vld [vmem:[#allocation2 + $0x358] sm:$0xff]
    %v184 = vld [vmem:[#allocation2 + $0x360] sm:$0xff]
    %v185 = vld [vmem:[#allocation2 + $0x368] sm:$0xff]
    %v186 = vld [vmem:[#allocation2 + $0x370] sm:$0xff]
    %v187 = vld [vmem:[#allocation2 + $0x378] sm:$0xff]
    %v188 = vld [vmem:[#allocation2 + $0x380] sm:$0xff]
    %v189 = vld [vmem:[#allocation2 + $0x388] sm:$0xff]
    %v190 = vld [vmem:[#allocation2 + $0x390] sm:$0xff]
    %v191 = vld [vmem:[#allocation2 + $0x398] sm:$0xff]
    %v192 = vld [vmem:[#allocation2 + $0x3a0] sm:$0xff]
    %v193 = vld [vmem:[#allocation2 + $0x3a8] sm:$0xff]
    %v194 = vld [vmem:[#allocation2 + $0x3b0] sm:$0xff]
    %v195 = vld [vmem:[#allocation2 + $0x3b8] sm:$0xff]
    %v196 = vld [vmem:[#allocation2 + $0x3c0] sm:$0xff]
    %v197 = vld [vmem:[#allocation2 + $0x3c8] sm:$0xff]
    %v198 = vld [vmem:[#allocation2 + $0x3d0] sm:$0xff]
    %v199 = vld [vmem:[#allocation2 + $0x3d8] sm:$0xff]
    %v200 = vld [vmem:[#allocation2 + $0x3e0] sm:$0xff]
    %v201 = vld [vmem:[#allocation2 + $0x3e8] sm:$0xff]
    %v202 = vld [vmem:[#allocation2 + $0x3f0] sm:$0xff]
    %v203 = vld [vmem:[#allocation2 + $0x3f8] sm:$0xff]
    %v204 = vld [vmem:[#allocation2 + $0x400] sm:$0xff]
    %v205 = vld [vmem:[#allocation2 + $0x408] sm:$0xff]
    %v206 = vld [vmem:[#allocation2 + $0x410] sm:$0xff]
    %v207 = vld [vmem:[#allocation2 + $0x418] sm:$0xff]
    %v208 = vld [vmem:[#allocation2 + $0x420] sm:$0xff]
    %v209 = vld [vmem:[#allocation2 + $0x428] sm:$0xff]
    %v210 = vld [vmem:[#allocation2 + $0x430] sm:$0xff]
    %v211 = vld [vmem:[#allocation2 + $0x438] sm:$0xff]
    %v212 = vld [vmem:[#allocation2 + $0x440] sm:$0xff]
    %v213 = vld [vmem:[#allocation2 + $0x448] sm:$0xff]
    %v214 = vld [vmem:[#allocation2 + $0x450] sm:$0xff]
    %v215 = vld [vmem:[#allocation2 + $0x458] sm:$0xff]
    %v216 = vld [vmem:[#allocation2 + $0x460] sm:$0xff]
    %v217 = vld [vmem:[#allocation2 + $0x468] sm:$0xff]
    %v218 = vld [vmem:[#allocation2 + $0x470] sm:$0xff]
    %v219 = vld [vmem:[#allocation2 + $0x478] sm:$0xff]
    %v220 = vld [vmem:[#allocation2 + $0x480] sm:$0xff]
    %v221 = vld [vmem:[#allocation2 + $0x488] sm:$0xff]
    %v222 = vld [vmem:[#allocation2 + $0x490] sm:$0xff]
    %v223 = vld [vmem:[#allocation2 + $0x498] sm:$0xff]
    %v224 = vld [vmem:[#allocation2 + $0x4a0] sm:$0xff]
    %v225 = vld [vmem:[#allocation2 + $0x4a8] sm:$0xff]
    %v226 = vld [vmem:[#allocation2 + $0x4b0] sm:$0xff]
    %v227 = vld [vmem:[#allocation2 + $0x4b8] sm:$0xff]
    %v228 = vld [vmem:[#allocation2 + $0x4c0] sm:$0xff]
    %v229 = vld [vmem:[#allocation2 + $0x4c8] sm:$0xff]
    %v230 = vld [vmem:[#allocation2 + $0x4d0] sm:$0xff]
    %v231 = vld [vmem:[#allocation2 + $0x4d8] sm:$0xff]
    %v232 = vld [vmem:[#allocation2 + $0x4e0] sm:$0xff]
    %v233 = vld [vmem:[#allocation2 + $0x4e8] sm:$0xff]
    %v234 = vld [vmem:[#allocation2 + $0x4f0] sm:$0xff]
    %v235 = vld [vmem:[#allocation2 + $0x4f8] sm:$0xff]
    %v236 = vld [vmem:[#allocation2 + $0x500] sm:$0xff]
    %v237 = vld [vmem:[#allocation2 + $0x508] sm:$0xff]
    %v238 = vld [vmem:[#allocation2 + $0x510] sm:$0xff]
    %v239 = vld [vmem:[#allocation2 + $0x518] sm:$0xff]
    %v240 = vld [vmem:[#allocation2 + $0x520] sm:$0xff]
    %v241 = vld [vmem:[#allocation2 + $0x528] sm:$0xff]
    %v242 = vld [vmem:[#allocation2 + $0x530] sm:$0xff]
    %v243 = vld [vmem:[#allocation2 + $0x538] sm:$0xff]
    %v244 = vld [vmem:[#allocation2 + $0x540] sm:$0xff]
    %v245 = vld [vmem:[#allocation2 + $0x548] sm:$0xff]
    %v246 = vld [vmem:[#allocation2 + $0x550] sm:$0xff]
    %v247 = vld [vmem:[#allocation2 + $0x558] sm:$0xff]
    %v248 = vld [vmem:[#allocation2 + $0x560] sm:$0xff]
    %v249 = vld [vmem:[#allocation2 + $0x568] sm:$0xff]
    %v250 = vld [vmem:[#allocation2 + $0x570] sm:$0xff]
    %v251 = vld [vmem:[#allocation2 + $0x578] sm:$0xff]
    %v252 = vld [vmem:[#allocation2 + $0x580] sm:$0xff]
    %v253 = vld [vmem:[#allocation2 + $0x588] sm:$0xff]
    %v254 = vld [vmem:[#allocation2 + $0x590] sm:$0xff]
    %v255 = vld [vmem:[#allocation2 + $0x598] sm:$0xff]
    %v256 = vld [vmem:[#allocation2 + $0x5a0] sm:$0xff]
    %v257 = vld [vmem:[#allocation2 + $0x5a8] sm:$0xff]
    %v258 = vld [vmem:[#allocation2 + $0x5b0] sm:$0xff]
    %v259 = vld [vmem:[#allocation2 + $0x5b8] sm:$0xff]
    %v260 = vld [vmem:[#allocation2 + $0x5c0] sm:$0xff]
    %v261 = vld [vmem:[#allocation2 + $0x5c8] sm:$0xff]
    %v262 = vld [vmem:[#allocation2 + $0x5d0] sm:$0xff]
    %v263 = vld [vmem:[#allocation2 + $0x5d8] sm:$0xff]
    %v264 = vld [vmem:[#allocation2 + $0x5e0] sm:$0xff]
    %v265 = vld [vmem:[#allocation2 + $0x5e8] sm:$0xff]
    %v266 = vld [vmem:[#allocation2 + $0x5f0] sm:$0xff]
    %v267 = vld [vmem:[#allocation2 + $0x5f8] sm:$0xff]
    %v268 = vld [vmem:[#allocation2 + $0x600] sm:$0xff]
    %v269 = vld [vmem:[#allocation2 + $0x608] sm:$0xff]
    %v270 = vld [vmem:[#allocation2 + $0x610] sm:$0xff]
    %v271 = vld [vmem:[#allocation2 + $0x618] sm:$0xff]
    %v272 = vld [vmem:[#allocation2 + $0x620] sm:$0xff]
    %v273 = vld [vmem:[#allocation2 + $0x628] sm:$0xff]
    %v274 = vld [vmem:[#allocation2 + $0x630] sm:$0xff]
    %v275 = vld [vmem:[#allocation2 + $0x638] sm:$0xff]
    %v276 = vld [vmem:[#allocation2 + $0x640] sm:$0xff]
    %v277 = vld [vmem:[#allocation2 + $0x648] sm:$0xff]
    %v278 = vld [vmem:[#allocation2 + $0x650] sm:$0xff]
    %v279 = vld [vmem:[#allocation2 + $0x658] sm:$0xff]
    %v280 = vld [vmem:[#allocation2 + $0x660] sm:$0xff]
    %v281 = vld [vmem:[#allocation2 + $0x668] sm:$0xff]
    %v282 = vld [vmem:[#allocation2 + $0x670] sm:$0xff]
    %v283 = vld [vmem:[#allocation2 + $0x678] sm:$0xff]
    %v284 = vld [vmem:[#allocation2 + $0x680] sm:$0xff]
    %v285 = vld [vmem:[#allocation2 + $0x688] sm:$0xff]
    %v286 = vld [vmem:[#allocation2 + $0x690] sm:$0xff]
    %v287 = vld [vmem:[#allocation2 + $0x698] sm:$0xff]
    %v288 = vld [vmem:[#allocation2 + $0x6a0] sm:$0xff]
    %v289 = vld [vmem:[#allocation2 + $0x6a8] sm:$0xff]
    %v290 = vld [vmem:[#allocation2 + $0x6b0] sm:$0xff]
    %v291 = vld [vmem:[#allocation2 + $0x6b8] sm:$0xff]
    %v292 = vld [vmem:[#allocation2 + $0x6c0] sm:$0xff]
    %v293 = vld [vmem:[#allocation2 + $0x6c8] sm:$0xff]
    %v294 = vld [vmem:[#allocation2 + $0x6d0] sm:$0xff]
    %v295 = vld [vmem:[#allocation2 + $0x6d8] sm:$0xff]
    %v296 = vld [vmem:[#allocation2 + $0x6e0] sm:$0xff]
    %v297 = vld [vmem:[#allocation2 + $0x6e8] sm:$0xff]
    %v298 = vld [vmem:[#allocation2 + $0x6f0] sm:$0xff]
    %v299 = vld [vmem:[#allocation2 + $0x6f8] sm:$0xff]
    %v300 = vld [vmem:[#allocation2 + $0x700] sm:$0xff]
    %v301 = vld [vmem:[#allocation2 + $0x708] sm:$0xff]
    %v302 = vld [vmem:[#allocation2 + $0x710] sm:$0xff]
    %v303 = vld [vmem:[#allocation2 + $0x718] sm:$0xff]
    %v304 = vld [vmem:[#allocation2 + $0x720] sm:$0xff]
    %v305 = vld [vmem:[#allocation2 + $0x728] sm:$0xff]
    %v306 = vld [vmem:[#allocation2 + $0x730] sm:$0xff]
    %v307 = vld [vmem:[#allocation2 + $0x738] sm:$0xff]
    %v308 = vld [vmem:[#allocation2 + $0x740] sm:$0xff]
    %v309 = vld [vmem:[#allocation2 + $0x748] sm:$0xff]
    %v310 = vld [vmem:[#allocation2 + $0x750] sm:$0xff]
    %v311 = vld [vmem:[#allocation2 + $0x758] sm:$0xff]
    %v312 = vld [vmem:[#allocation2 + $0x760] sm:$0xff]
    %v313 = vld [vmem:[#allocation2 + $0x768] sm:$0xff]
    %v314 = vld [vmem:[#allocation2 + $0x770] sm:$0xff]
    %v315 = vld [vmem:[#allocation2 + $0x778] sm:$0xff]
    %v316 = vld [vmem:[#allocation2 + $0x780] sm:$0xff]
    %v317 = vld [vmem:[#allocation2 + $0x788] sm:$0xff]
    %v318 = vld [vmem:[#allocation2 + $0x790] sm:$0xff]
    %v319 = vld [vmem:[#allocation2 + $0x798] sm:$0xff]
    %v320 = vld [vmem:[#allocation2 + $0x7a0] sm:$0xff]
    %v321 = vld [vmem:[#allocation2 + $0x7a8] sm:$0xff]
    %v322 = vld [vmem:[#allocation2 + $0x7b0] sm:$0xff]
    %v323 = vld [vmem:[#allocation2 + $0x7b8] sm:$0xff]
    %v324 = vld [vmem:[#allocation2 + $0x7c0] sm:$0xff]
    %v325 = vld [vmem:[#allocation2 + $0x7c8] sm:$0xff]
    %v326 = vld [vmem:[#allocation2 + $0x7d0] sm:$0xff]
    %v327 = vld [vmem:[#allocation2 + $0x7d8] sm:$0xff]
    %v328 = vld [vmem:[#allocation2 + $0x7e0] sm:$0xff]
    %v329 = vld [vmem:[#allocation2 + $0x7e8] sm:$0xff]
    %v330 = vld [vmem:[#allocation2 + $0x7f0] sm:$0xff]
    %v331 = vld [vmem:[#allocation2 + $0x7f8] sm:$0xff]
    %332 = vmatprep.subr.mxu0 %v137
    %333 = vmatpush1.msra.mxu0 %v136
    %334 = vmatprep.subr.mxu0 %v133
    %335 = vmatpush1.msra.mxu0 %v132
    %336 = vmatprep.subr.mxu0 %v129
    %337 = vmatpush1.msra.mxu0 %v128
    %338 = vmatprep.subr.mxu0 %v125
    %339 = vmatpush1.msra.mxu0 %v124
    %340 = vmatprep.subr.mxu0 %v121
    %341 = vmatpush1.msra.mxu0 %v120
    %342 = vmatprep.subr.mxu0 %v117
    %343 = vmatpush1.msra.mxu0 %v116
    %344 = vmatprep.subr.mxu0 %v113
    %345 = vmatpush1.msra.mxu0 %v112
    %346 = vmatprep.subr.mxu0 %v109
    %347 = vmatpush1.msra.mxu0 %v108
    %348 = vmatprep.subr.mxu0 %v105
    %349 = vmatpush1.msra.mxu0 %v104
    %350 = vmatprep.subr.mxu0 %v101
    %351 = vmatpush1.msra.mxu0 %v100
    %352 = vmatprep.subr.mxu0 %v97
    %353 = vmatpush1.msra.mxu0 %v96
    %354 = vmatprep.subr.mxu0 %v93
    %355 = vmatpush1.msra.mxu0 %v92
    %356 = vmatprep.subr.mxu0 %v89
    %357 = vmatpush1.msra.mxu0 %v88
    %358 = vmatprep.subr.mxu0 %v85
    %359 = vmatpush1.msra.mxu0 %v84
    %360 = vmatprep.subr.mxu0 %v81
    %361 = vmatpush1.msra.mxu0 %v80
    %362 = vmatprep.subr.mxu0 %v77
    %363 = vmatpush1.msra.mxu0 %v76
    %364 = vmatprep.subr.mxu0 %v201
    %365 = vmatpush2.msra.mxu0 %v200
    %366 = vmatprep.subr.mxu0 %v197
    %367 = vmatpush2.msra.mxu0 %v196
    %368 = vmatprep.subr.mxu0 %v193
    %369 = vmatpush2.msra.mxu0 %v192
    %370 = vmatprep.subr.mxu0 %v189
    %371 = vmatpush2.msra.mxu0 %v188
    %372 = vmatprep.subr.mxu0 %v185
    %373 = vmatpush2.msra.mxu0 %v184
    %374 = vmatprep.subr.mxu0 %v181
    %375 = vmatpush2.msra.mxu0 %v180
    %376 = vmatprep.subr.mxu0 %v177
    %377 = vmatpush2.msra.mxu0 %v176
    %378 = vmatprep.subr.mxu0 %v173
    %379 = vmatpush2.msra.mxu0 %v172
    %380 = vmatprep.subr.mxu0 %v169
    %381 = vmatpush2.msra.mxu0 %v168
    %382 = vmatprep.subr.mxu0 %v165
    %383 = vmatpush2.msra.mxu0 %v164
    %384 = vmatprep.subr.mxu0 %v161
    %385 = vmatpush2.msra.mxu0 %v160
    %386 = vmatprep.subr.mxu0 %v157
    %387 = vmatpush2.msra.mxu0 %v156
    %388 = vmatprep.subr.mxu0 %v153
    %389 = vmatpush2.msra.mxu0 %v152
    %390 = vmatprep.subr.mxu0 %v149
    %391 = vmatpush2.msra.mxu0 %v148
    %392 = vmatprep.subr.mxu0 %v145
    %393 = vmatpush2.msra.mxu0 %v144
    %394 = vmatprep.subr.mxu0 %v141
    %395 = vmatpush2.msra.mxu0 %v140
    %396 = vmatprep.mubr.f32.mxu0 %v57
    %397 = vmatmul.mubr.f32.gmra.mxu0 %v56
    %v398 = vpop.f32.mrf.mxu0
    %v399 = vadd.f32 0.0, %v398
    %v400 = vpop.f32.mrf.mxu0
    %v401 = vadd.f32 0.0, %v400
    %402 = vmatprep.mubr.f32.mxu0 %v61
    %403 = vmatmul.mubr.f32.gmra.mxu0 %v60
    %v404 = vpop.f32.mrf.mxu0
    %v405 = vadd.f32 0.0, %v404
    %v406 = vpop.f32.mrf.mxu0
    %v407 = vadd.f32 0.0, %v406
    %408 = vmatprep.mubr.f32.mxu0 %v65
    %409 = vmatmul.mubr.f32.gmra.mxu0 %v64
    %v410 = vpop.f32.mrf.mxu0
    %v411 = vadd.f32 0.0, %v410
    %v412 = vpop.f32.mrf.mxu0
    %v413 = vadd.f32 0.0, %v412
    %414 = vmatprep.mubr.f32.mxu0 %v69
    %415 = vmatmul.mubr.f32.gmra.mxu0 %v68
    %v416 = vpop.f32.mrf.mxu0
    %v417 = vadd.f32 0.0, %v416
    %v418 = vpop.f32.mrf.mxu0
    %v419 = vadd.f32 0.0, %v418
    %420 = vdwg.mxu0
    %421 = vmatprep.subr.mxu0 %v265
    %422 = vmatpush1.msra.mxu0 %v264
    %423 = vmatprep.subr.mxu0 %v261
    %424 = vmatpush1.msra.mxu0 %v260
    %425 = vmatprep.subr.mxu0 %v257
    %426 = vmatpush1.msra.mxu0 %v256
    %427 = vmatprep.subr.mxu0 %v253
    %428 = vmatpush1.msra.mxu0 %v252
    %429 = vmatprep.subr.mxu0 %v249
    %430 = vmatpush1.msra.mxu0 %v248
    %431 = vmatprep.subr.mxu0 %v245
    %432 = vmatpush1.msra.mxu0 %v244
    %433 = vmatprep.subr.mxu0 %v241
    %434 = vmatpush1.msra.mxu0 %v240
    %435 = vmatprep.subr.mxu0 %v237
    %436 = vmatpush1.msra.mxu0 %v236
    %437 = vmatprep.subr.mxu0 %v233
    %438 = vmatpush1.msra.mxu0 %v232
    %439 = vmatprep.subr.mxu0 %v229
    %440 = vmatpush1.msra.mxu0 %v228
    %441 = vmatprep.subr.mxu0 %v225
    %442 = vmatpush1.msra.mxu0 %v224
    %443 = vmatprep.subr.mxu0 %v221
    %444 = vmatpush1.msra.mxu0 %v220
    %445 = vmatprep.subr.mxu0 %v217
    %446 = vmatpush1.msra.mxu0 %v216
    %447 = vmatprep.subr.mxu0 %v213
    %448 = vmatpush1.msra.mxu0 %v212
    %449 = vmatprep.subr.mxu0 %v209
    %450 = vmatpush1.msra.mxu0 %v208
    %451 = vmatprep.subr.mxu0 %v205
    %452 = vmatpush1.msra.mxu0 %v204
    %453 = vmatprep.subr.mxu0 %v329
    %454 = vmatpush2.msra.mxu0 %v328
    %455 = vmatprep.subr.mxu0 %v325
    %456 = vmatpush2.msra.mxu0 %v324
    %457 = vmatprep.subr.mxu0 %v321
    %458 = vmatpush2.msra.mxu0 %v320
    %459 = vmatprep.subr.mxu0 %v317
    %460 = vmatpush2.msra.mxu0 %v316
    %461 = vmatprep.subr.mxu0 %v313
    %462 = vmatpush2.msra.mxu0 %v312
    %463 = vmatprep.subr.mxu0 %v309
    %464 = vmatpush2.msra.mxu0 %v308
    %465 = vmatprep.subr.mxu0 %v305
    %466 = vmatpush2.msra.mxu0 %v304
    %467 = vmatprep.subr.mxu0 %v301
    %468 = vmatpush2.msra.mxu0 %v300
    %469 = vmatprep.subr.mxu0 %v297
    %470 = vmatpush2.msra.mxu0 %v296
    %471 = vmatprep.subr.mxu0 %v293
    %472 = vmatpush2.msra.mxu0 %v292
    %473 = vmatprep.subr.mxu0 %v289
    %474 = vmatpush2.msra.mxu0 %v288
    %475 = vmatprep.subr.mxu0 %v285
    %476 = vmatpush2.msra.mxu0 %v284
    %477 = vmatprep.subr.mxu0 %v281
    %478 = vmatpush2.msra.mxu0 %v280
    %479 = vmatprep.subr.mxu0 %v277
    %480 = vmatpush2.msra.mxu0 %v276
    %481 = vmatprep.subr.mxu0 %v273
    %482 = vmatpush2.msra.mxu0 %v272
    %483 = vmatprep.subr.mxu0 %v269
    %484 = vmatpush2.msra.mxu0 %v268
    %485 = vmatprep.mubr.f32.mxu0 %v59
    %486 = vmatmul.mubr.f32.gmra.mxu0 %v58
    %v487 = vpop.f32.mrf.mxu0
    %v488 = vadd.f32 %v399, %v487
    %v489 = vpop.f32.mrf.mxu0
    %v490 = vadd.f32 %v401, %v489
    %491 = vmatprep.mubr.f32.mxu0 %v63
    %492 = vmatmul.mubr.f32.gmra.mxu0 %v62
    %v493 = vpop.f32.mrf.mxu0
    %v494 = vadd.f32 %v405, %v493
    %v495 = vpop.f32.mrf.mxu0
    %v496 = vadd.f32 %v407, %v495
    %497 = vmatprep.mubr.f32.mxu0 %v67
    %498 = vmatmul.mubr.f32.gmra.mxu0 %v66
    %v499 = vpop.f32.mrf.mxu0
    %v500 = vadd.f32 %v411, %v499
    %v501 = vpop.f32.mrf.mxu0
    %v502 = vadd.f32 %v413, %v501
    %503 = vmatprep.mubr.f32.mxu0 %v71
    %504 = vmatmul.mubr.f32.gmra.mxu0 %v70
    %v505 = vpop.f32.mrf.mxu0
    %v506 = vadd.f32 %v417, %v505
    %v507 = vpop.f32.mrf.mxu0
    %v508 = vadd.f32 %v419, %v507
    %509 = vdwg.mxu0
    %510 = vmatprep.subr.mxu0 %v139
    %511 = vmatpush1.msra.mxu0 %v138
    %512 = vmatprep.subr.mxu0 %v135
    %513 = vmatpush1.msra.mxu0 %v134
    %514 = vmatprep.subr.mxu0 %v131
    %515 = vmatpush1.msra.mxu0 %v130
    %516 = vmatprep.subr.mxu0 %v127
    %517 = vmatpush1.msra.mxu0 %v126
    %518 = vmatprep.subr.mxu0 %v123
    %519 = vmatpush1.msra.mxu0 %v122
    %520 = vmatprep.subr.mxu0 %v119
    %521 = vmatpush1.msra.mxu0 %v118
    %522 = vmatprep.subr.mxu0 %v115
    %523 = vmatpush1.msra.mxu0 %v114
    %524 = vmatprep.subr.mxu0 %v111
    %525 = vmatpush1.msra.mxu0 %v110
    %526 = vmatprep.subr.mxu0 %v107
    %527 = vmatpush1.msra.mxu0 %v106
    %528 = vmatprep.subr.mxu0 %v103
    %529 = vmatpush1.msra.mxu0 %v102
    %530 = vmatprep.subr.mxu0 %v99
    %531 = vmatpush1.msra.mxu0 %v98
    %532 = vmatprep.subr.mxu0 %v95
    %533 = vmatpush1.msra.mxu0 %v94
    %534 = vmatprep.subr.mxu0 %v91
    %535 = vmatpush1.msra.mxu0 %v90
    %536 = vmatprep.subr.mxu0 %v87
    %537 = vmatpush1.msra.mxu0 %v86
    %538 = vmatprep.subr.mxu0 %v83
    %539 = vmatpush1.msra.mxu0 %v82
    %540 = vmatprep.subr.mxu0 %v79
    %541 = vmatpush1.msra.mxu0 %v78
    %542 = vmatprep.subr.mxu0 %v203
    %543 = vmatpush2.msra.mxu0 %v202
    %544 = vmatprep.subr.mxu0 %v199
    %545 = vmatpush2.msra.mxu0 %v198
    %546 = vmatprep.subr.mxu0 %v195
    %547 = vmatpush2.msra.mxu0 %v194
    %548 = vmatprep.subr.mxu0 %v191
    %549 = vmatpush2.msra.mxu0 %v190
    %550 = vmatprep.subr.mxu0 %v187
    %551 = vmatpush2.msra.mxu0 %v186
    %552 = vmatprep.subr.mxu0 %v183
    %553 = vmatpush2.msra.mxu0 %v182
    %554 = vmatprep.subr.mxu0 %v179
    %555 = vmatpush2.msra.mxu0 %v178
    %556 = vmatprep.subr.mxu0 %v175
    %557 = vmatpush2.msra.mxu0 %v174
    %558 = vmatprep.subr.mxu0 %v171
    %559 = vmatpush2.msra.mxu0 %v170
    %560 = vmatprep.subr.mxu0 %v167
    %561 = vmatpush2.msra.mxu0 %v166
    %562 = vmatprep.subr.mxu0 %v163
    %563 = vmatpush2.msra.mxu0 %v162
    %564 = vmatprep.subr.mxu0 %v159
    %565 = vmatpush2.msra.mxu0 %v158
    %566 = vmatprep.subr.mxu0 %v155
    %567 = vmatpush2.msra.mxu0 %v154
    %568 = vmatprep.subr.mxu0 %v151
    %569 = vmatpush2.msra.mxu0 %v150
    %570 = vmatprep.subr.mxu0 %v147
    %571 = vmatpush2.msra.mxu0 %v146
    %572 = vmatprep.subr.mxu0 %v143
    %573 = vmatpush2.msra.mxu0 %v142
    %574 = vmatprep.mubr.f32.mxu0 %v57
    %575 = vmatmul.mubr.f32.gmra.mxu0 %v56
    %v576 = vpop.f32.mrf.mxu0
    %v577 = vadd.f32 0.0, %v576
    %v578 = vpop.f32.mrf.mxu0
    %v579 = vadd.f32 0.0, %v578
    %580 = vmatprep.mubr.f32.mxu0 %v61
    %581 = vmatmul.mubr.f32.gmra.mxu0 %v60
    %v582 = vpop.f32.mrf.mxu0
    %v583 = vadd.f32 0.0, %v582
    %v584 = vpop.f32.mrf.mxu0
    %v585 = vadd.f32 0.0, %v584
    %586 = vmatprep.mubr.f32.mxu0 %v65
    %587 = vmatmul.mubr.f32.gmra.mxu0 %v64
    %v588 = vpop.f32.mrf.mxu0
    %v589 = vadd.f32 0.0, %v588
    %v590 = vpop.f32.mrf.mxu0
    %v591 = vadd.f32 0.0, %v590
    %592 = vmatprep.mubr.f32.mxu0 %v69
    %593 = vmatmul.mubr.f32.gmra.mxu0 %v68
    %v594 = vpop.f32.mrf.mxu0
    %v595 = vadd.f32 0.0, %v594
    %v596 = vpop.f32.mrf.mxu0
    %v597 = vadd.f32 0.0, %v596
    %598 = vdwg.mxu0
    %599 = vmatprep.subr.mxu0 %v267
    %600 = vmatpush1.msra.mxu0 %v266
    %601 = vmatprep.subr.mxu0 %v263
    %602 = vmatpush1.msra.mxu0 %v262
    %603 = vmatprep.subr.mxu0 %v259
    %604 = vmatpush1.msra.mxu0 %v258
    %605 = vmatprep.subr.mxu0 %v255
    %606 = vmatpush1.msra.mxu0 %v254
    %607 = vmatprep.subr.mxu0 %v251
    %608 = vmatpush1.msra.mxu0 %v250
    %609 = vmatprep.subr.mxu0 %v247
    %610 = vmatpush1.msra.mxu0 %v246
    %611 = vmatprep.subr.mxu0 %v243
    %612 = vmatpush1.msra.mxu0 %v242
    %613 = vmatprep.subr.mxu0 %v239
    %614 = vmatpush1.msra.mxu0 %v238
    %615 = vmatprep.subr.mxu0 %v235
    %616 = vmatpush1.msra.mxu0 %v234
    %617 = vmatprep.subr.mxu0 %v231
    %618 = vmatpush1.msra.mxu0 %v230
    %619 = vmatprep.subr.mxu0 %v227
    %620 = vmatpush1.msra.mxu0 %v226
    %621 = vmatprep.subr.mxu0 %v223
    %622 = vmatpush1.msra.mxu0 %v222
    %623 = vmatprep.subr.mxu0 %v219
    %624 = vmatpush1.msra.mxu0 %v218
    %625 = vmatprep.subr.mxu0 %v215
    %626 = vmatpush1.msra.mxu0 %v214
    %627 = vmatprep.subr.mxu0 %v211
    %628 = vmatpush1.msra.mxu0 %v210
    %629 = vmatprep.subr.mxu0 %v207
    %630 = vmatpush1.msra.mxu0 %v206
    %631 = vmatprep.subr.mxu0 %v331
    %632 = vmatpush2.msra.mxu0 %v330
    %633 = vmatprep.subr.mxu0 %v327
    %634 = vmatpush2.msra.mxu0 %v326
    %635 = vmatprep.subr.mxu0 %v323
    %636 = vmatpush2.msra.mxu0 %v322
    %637 = vmatprep.subr.mxu0 %v319
    %638 = vmatpush2.msra.mxu0 %v318
    %639 = vmatprep.subr.mxu0 %v315
    %640 = vmatpush2.msra.mxu0 %v314
    %641 = vmatprep.subr.mxu0 %v311
    %642 = vmatpush2.msra.mxu0 %v310
    %643 = vmatprep.subr.mxu0 %v307
    %644 = vmatpush2.msra.mxu0 %v306
    %645 = vmatprep.subr.mxu0 %v303
    %646 = vmatpush2.msra.mxu0 %v302
    %647 = vmatprep.subr.mxu0 %v299
    %648 = vmatpush2.msra.mxu0 %v298
    %649 = vmatprep.subr.mxu0 %v295
    %650 = vmatpush2.msra.mxu0 %v294
    %651 = vmatprep.subr.mxu0 %v291
    %652 = vmatpush2.msra.mxu0 %v290
    %653 = vmatprep.subr.mxu0 %v287
    %654 = vmatpush2.msra.mxu0 %v286
    %655 = vmatprep.subr.mxu0 %v283
    %656 = vmatpush2.msra.mxu0 %v282
    %657 = vmatprep.subr.mxu0 %v279
    %658 = vmatpush2.msra.mxu0 %v278
    %659 = vmatprep.subr.mxu0 %v275
    %660 = vmatpush2.msra.mxu0 %v274
    %661 = vmatprep.subr.mxu0 %v271
    %662 = vmatpush2.msra.mxu0 %v270
    %663 = vmatprep.mubr.f32.mxu0 %v59
    %664 = vmatmul.mubr.f32.gmra.mxu0 %v58
    %v665 = vpop.f32.mrf.mxu0
    %v666 = vadd.f32 %v577, %v665
    %v667 = vpop.f32.mrf.mxu0
    %v668 = vadd.f32 %v579, %v667
    %669 = vmatprep.mubr.f32.mxu0 %v63
    %670 = vmatmul.mubr.f32.gmra.mxu0 %v62
    %v671 = vpop.f32.mrf.mxu0
    %v672 = vadd.f32 %v583, %v671
    %v673 = vpop.f32.mrf.mxu0
    %v674 = vadd.f32 %v585, %v673
    %675 = vmatprep.mubr.f32.mxu0 %v67
    %676 = vmatmul.mubr.f32.gmra.mxu0 %v66
    %v677 = vpop.f32.mrf.mxu0
    %v678 = vadd.f32 %v589, %v677
    %v679 = vpop.f32.mrf.mxu0
    %v680 = vadd.f32 %v591, %v679
    %681 = vmatprep.mubr.f32.mxu0 %v71
    %682 = vmatmul.mubr.f32.gmra.mxu0 %v70
    %v683 = vpop.f32.mrf.mxu0
    %v684 = vadd.f32 %v595, %v683
    %v685 = vpop.f32.mrf.mxu0
    %v686 = vadd.f32 %v597, %v685
    %687 = vdwg.mxu0
    %s688 = scalar_lea.vmem [#allocation2], 2048
    %v689 = vld [vmem:[%s688] sm:$0xff]
    %v690 = vld [vmem:[%s688 + $0x8] sm:$0xff]
    %v691 = vld [vmem:[%s688 + $0x10] sm:$0xff]
    %v692 = vld [vmem:[%s688 + $0x18] sm:$0xff]
    %v693 = vld [vmem:[%s688 + $0x20] sm:$0xff]
    %v694 = vld [vmem:[%s688 + $0x28] sm:$0xff]
    %v695 = vld [vmem:[%s688 + $0x30] sm:$0xff]
    %v696 = vld [vmem:[%s688 + $0x38] sm:$0xff]
    %v697 = vld [vmem:[%s688 + $0x40] sm:$0xff]
    %v698 = vld [vmem:[%s688 + $0x48] sm:$0xff]
    %v699 = vld [vmem:[%s688 + $0x50] sm:$0xff]
    %v700 = vld [vmem:[%s688 + $0x58] sm:$0xff]
    %v701 = vld [vmem:[%s688 + $0x60] sm:$0xff]
    %v702 = vld [vmem:[%s688 + $0x68] sm:$0xff]
    %v703 = vld [vmem:[%s688 + $0x70] sm:$0xff]
    %v704 = vld [vmem:[%s688 + $0x78] sm:$0xff]
    %v705 = vld [vmem:[%s688 + $0x80] sm:$0xff]
    %v706 = vld [vmem:[%s688 + $0x88] sm:$0xff]
    %v707 = vld [vmem:[%s688 + $0x90] sm:$0xff]
    %v708 = vld [vmem:[%s688 + $0x98] sm:$0xff]
    %v709 = vld [vmem:[%s688 + $0xa0] sm:$0xff]
    %v710 = vld [vmem:[%s688 + $0xa8] sm:$0xff]
    %v711 = vld [vmem:[%s688 + $0xb0] sm:$0xff]
    %v712 = vld [vmem:[%s688 + $0xb8] sm:$0xff]
    %v713 = vld [vmem:[%s688 + $0xc0] sm:$0xff]
    %v714 = vld [vmem:[%s688 + $0xc8] sm:$0xff]
    %v715 = vld [vmem:[%s688 + $0xd0] sm:$0xff]
    %v716 = vld [vmem:[%s688 + $0xd8] sm:$0xff]
    %v717 = vld [vmem:[%s688 + $0xe0] sm:$0xff]
    %v718 = vld [vmem:[%s688 + $0xe8] sm:$0xff]
    %v719 = vld [vmem:[%s688 + $0xf0] sm:$0xff]
    %v720 = vld [vmem:[%s688 + $0xf8] sm:$0xff]
    %v721 = vld [vmem:[%s688 + $0x100] sm:$0xff]
    %v722 = vld [vmem:[%s688 + $0x108] sm:$0xff]
    %v723 = vld [vmem:[%s688 + $0x110] sm:$0xff]
    %v724 = vld [vmem:[%s688 + $0x118] sm:$0xff]
    %v725 = vld [vmem:[%s688 + $0x120] sm:$0xff]
    %v726 = vld [vmem:[%s688 + $0x128] sm:$0xff]
    %v727 = vld [vmem:[%s688 + $0x130] sm:$0xff]
    %v728 = vld [vmem:[%s688 + $0x138] sm:$0xff]
    %v729 = vld [vmem:[%s688 + $0x140] sm:$0xff]
    %v730 = vld [vmem:[%s688 + $0x148] sm:$0xff]
    %v731 = vld [vmem:[%s688 + $0x150] sm:$0xff]
    %v732 = vld [vmem:[%s688 + $0x158] sm:$0xff]
    %v733 = vld [vmem:[%s688 + $0x160] sm:$0xff]
    %v734 = vld [vmem:[%s688 + $0x168] sm:$0xff]
    %v735 = vld [vmem:[%s688 + $0x170] sm:$0xff]
    %v736 = vld [vmem:[%s688 + $0x178] sm:$0xff]
    %v737 = vld [vmem:[%s688 + $0x180] sm:$0xff]
    %v738 = vld [vmem:[%s688 + $0x188] sm:$0xff]
    %v739 = vld [vmem:[%s688 + $0x190] sm:$0xff]
    %v740 = vld [vmem:[%s688 + $0x198] sm:$0xff]
    %v741 = vld [vmem:[%s688 + $0x1a0] sm:$0xff]
    %v742 = vld [vmem:[%s688 + $0x1a8] sm:$0xff]
    %v743 = vld [vmem:[%s688 + $0x1b0] sm:$0xff]
    %v744 = vld [vmem:[%s688 + $0x1b8] sm:$0xff]
    %v745 = vld [vmem:[%s688 + $0x1c0] sm:$0xff]
    %v746 = vld [vmem:[%s688 + $0x1c8] sm:$0xff]
    %v747 = vld [vmem:[%s688 + $0x1d0] sm:$0xff]
    %v748 = vld [vmem:[%s688 + $0x1d8] sm:$0xff]
    %v749 = vld [vmem:[%s688 + $0x1e0] sm:$0xff]
    %v750 = vld [vmem:[%s688 + $0x1e8] sm:$0xff]
    %v751 = vld [vmem:[%s688 + $0x1f0] sm:$0xff]
    %v752 = vld [vmem:[%s688 + $0x1f8] sm:$0xff]
    %v753 = vld [vmem:[%s688 + $0x200] sm:$0xff]
    %v754 = vld [vmem:[%s688 + $0x208] sm:$0xff]
    %v755 = vld [vmem:[%s688 + $0x210] sm:$0xff]
    %v756 = vld [vmem:[%s688 + $0x218] sm:$0xff]
    %v757 = vld [vmem:[%s688 + $0x220] sm:$0xff]
    %v758 = vld [vmem:[%s688 + $0x228] sm:$0xff]
    %v759 = vld [vmem:[%s688 + $0x230] sm:$0xff]
    %v760 = vld [vmem:[%s688 + $0x238] sm:$0xff]
    %v761 = vld [vmem:[%s688 + $0x240] sm:$0xff]
    %v762 = vld [vmem:[%s688 + $0x248] sm:$0xff]
    %v763 = vld [vmem:[%s688 + $0x250] sm:$0xff]
    %v764 = vld [vmem:[%s688 + $0x258] sm:$0xff]
    %v765 = vld [vmem:[%s688 + $0x260] sm:$0xff]
    %v766 = vld [vmem:[%s688 + $0x268] sm:$0xff]
    %v767 = vld [vmem:[%s688 + $0x270] sm:$0xff]
    %v768 = vld [vmem:[%s688 + $0x278] sm:$0xff]
    %v769 = vld [vmem:[%s688 + $0x280] sm:$0xff]
    %v770 = vld [vmem:[%s688 + $0x288] sm:$0xff]
    %v771 = vld [vmem:[%s688 + $0x290] sm:$0xff]
    %v772 = vld [vmem:[%s688 + $0x298] sm:$0xff]
    %v773 = vld [vmem:[%s688 + $0x2a0] sm:$0xff]
    %v774 = vld [vmem:[%s688 + $0x2a8] sm:$0xff]
    %v775 = vld [vmem:[%s688 + $0x2b0] sm:$0xff]
    %v776 = vld [vmem:[%s688 + $0x2b8] sm:$0xff]
    %v777 = vld [vmem:[%s688 + $0x2c0] sm:$0xff]
    %v778 = vld [vmem:[%s688 + $0x2c8] sm:$0xff]
    %v779 = vld [vmem:[%s688 + $0x2d0] sm:$0xff]
    %v780 = vld [vmem:[%s688 + $0x2d8] sm:$0xff]
    %v781 = vld [vmem:[%s688 + $0x2e0] sm:$0xff]
    %v782 = vld [vmem:[%s688 + $0x2e8] sm:$0xff]
    %v783 = vld [vmem:[%s688 + $0x2f0] sm:$0xff]
    %v784 = vld [vmem:[%s688 + $0x2f8] sm:$0xff]
    %v785 = vld [vmem:[%s688 + $0x300] sm:$0xff]
    %v786 = vld [vmem:[%s688 + $0x308] sm:$0xff]
    %v787 = vld [vmem:[%s688 + $0x310] sm:$0xff]
    %v788 = vld [vmem:[%s688 + $0x318] sm:$0xff]
    %v789 = vld [vmem:[%s688 + $0x320] sm:$0xff]
    %v790 = vld [vmem:[%s688 + $0x328] sm:$0xff]
    %v791 = vld [vmem:[%s688 + $0x330] sm:$0xff]
    %v792 = vld [vmem:[%s688 + $0x338] sm:$0xff]
    %v793 = vld [vmem:[%s688 + $0x340] sm:$0xff]
    %v794 = vld [vmem:[%s688 + $0x348] sm:$0xff]
    %v795 = vld [vmem:[%s688 + $0x350] sm:$0xff]
    %v796 = vld [vmem:[%s688 + $0x358] sm:$0xff]
    %v797 = vld [vmem:[%s688 + $0x360] sm:$0xff]
    %v798 = vld [vmem:[%s688 + $0x368] sm:$0xff]
    %v799 = vld [vmem:[%s688 + $0x370] sm:$0xff]
    %v800 = vld [vmem:[%s688 + $0x378] sm:$0xff]
    %v801 = vld [vmem:[%s688 + $0x380] sm:$0xff]
    %v802 = vld [vmem:[%s688 + $0x388] sm:$0xff]
    %v803 = vld [vmem:[%s688 + $0x390] sm:$0xff]
    %v804 = vld [vmem:[%s688 + $0x398] sm:$0xff]
    %v805 = vld [vmem:[%s688 + $0x3a0] sm:$0xff]
    %v806 = vld [vmem:[%s688 + $0x3a8] sm:$0xff]
    %v807 = vld [vmem:[%s688 + $0x3b0] sm:$0xff]
    %v808 = vld [vmem:[%s688 + $0x3b8] sm:$0xff]
    %v809 = vld [vmem:[%s688 + $0x3c0] sm:$0xff]
    %v810 = vld [vmem:[%s688 + $0x3c8] sm:$0xff]
    %v811 = vld [vmem:[%s688 + $0x3d0] sm:$0xff]
    %v812 = vld [vmem:[%s688 + $0x3d8] sm:$0xff]
    %v813 = vld [vmem:[%s688 + $0x3e0] sm:$0xff]
    %v814 = vld [vmem:[%s688 + $0x3e8] sm:$0xff]
    %v815 = vld [vmem:[%s688 + $0x3f0] sm:$0xff]
    %v816 = vld [vmem:[%s688 + $0x3f8] sm:$0xff]
    %v817 = vld [vmem:[%s688 + $0x400] sm:$0xff]
    %v818 = vld [vmem:[%s688 + $0x408] sm:$0xff]
    %v819 = vld [vmem:[%s688 + $0x410] sm:$0xff]
    %v820 = vld [vmem:[%s688 + $0x418] sm:$0xff]
    %v821 = vld [vmem:[%s688 + $0x420] sm:$0xff]
    %v822 = vld [vmem:[%s688 + $0x428] sm:$0xff]
    %v823 = vld [vmem:[%s688 + $0x430] sm:$0xff]
    %v824 = vld [vmem:[%s688 + $0x438] sm:$0xff]
    %v825 = vld [vmem:[%s688 + $0x440] sm:$0xff]
    %v826 = vld [vmem:[%s688 + $0x448] sm:$0xff]
    %v827 = vld [vmem:[%s688 + $0x450] sm:$0xff]
    %v828 = vld [vmem:[%s688 + $0x458] sm:$0xff]
    %v829 = vld [vmem:[%s688 + $0x460] sm:$0xff]
    %v830 = vld [vmem:[%s688 + $0x468] sm:$0xff]
    %v831 = vld [vmem:[%s688 + $0x470] sm:$0xff]
    %v832 = vld [vmem:[%s688 + $0x478] sm:$0xff]
    %v833 = vld [vmem:[%s688 + $0x480] sm:$0xff]
    %v834 = vld [vmem:[%s688 + $0x488] sm:$0xff]
    %v835 = vld [vmem:[%s688 + $0x490] sm:$0xff]
    %v836 = vld [vmem:[%s688 + $0x498] sm:$0xff]
    %v837 = vld [vmem:[%s688 + $0x4a0] sm:$0xff]
    %v838 = vld [vmem:[%s688 + $0x4a8] sm:$0xff]
    %v839 = vld [vmem:[%s688 + $0x4b0] sm:$0xff]
    %v840 = vld [vmem:[%s688 + $0x4b8] sm:$0xff]
    %v841 = vld [vmem:[%s688 + $0x4c0] sm:$0xff]
    %v842 = vld [vmem:[%s688 + $0x4c8] sm:$0xff]
    %v843 = vld [vmem:[%s688 + $0x4d0] sm:$0xff]
    %v844 = vld [vmem:[%s688 + $0x4d8] sm:$0xff]
    %v845 = vld [vmem:[%s688 + $0x4e0] sm:$0xff]
    %v846 = vld [vmem:[%s688 + $0x4e8] sm:$0xff]
    %v847 = vld [vmem:[%s688 + $0x4f0] sm:$0xff]
    %v848 = vld [vmem:[%s688 + $0x4f8] sm:$0xff]
    %v849 = vld [vmem:[%s688 + $0x500] sm:$0xff]
    %v850 = vld [vmem:[%s688 + $0x508] sm:$0xff]
    %v851 = vld [vmem:[%s688 + $0x510] sm:$0xff]
    %v852 = vld [vmem:[%s688 + $0x518] sm:$0xff]
    %v853 = vld [vmem:[%s688 + $0x520] sm:$0xff]
    %v854 = vld [vmem:[%s688 + $0x528] sm:$0xff]
    %v855 = vld [vmem:[%s688 + $0x530] sm:$0xff]
    %v856 = vld [vmem:[%s688 + $0x538] sm:$0xff]
    %v857 = vld [vmem:[%s688 + $0x540] sm:$0xff]
    %v858 = vld [vmem:[%s688 + $0x548] sm:$0xff]
    %v859 = vld [vmem:[%s688 + $0x550] sm:$0xff]
    %v860 = vld [vmem:[%s688 + $0x558] sm:$0xff]
    %v861 = vld [vmem:[%s688 + $0x560] sm:$0xff]
    %v862 = vld [vmem:[%s688 + $0x568] sm:$0xff]
    %v863 = vld [vmem:[%s688 + $0x570] sm:$0xff]
    %v864 = vld [vmem:[%s688 + $0x578] sm:$0xff]
    %v865 = vld [vmem:[%s688 + $0x580] sm:$0xff]
    %v866 = vld [vmem:[%s688 + $0x588] sm:$0xff]
    %v867 = vld [vmem:[%s688 + $0x590] sm:$0xff]
    %v868 = vld [vmem:[%s688 + $0x598] sm:$0xff]
    %v869 = vld [vmem:[%s688 + $0x5a0] sm:$0xff]
    %v870 = vld [vmem:[%s688 + $0x5a8] sm:$0xff]
    %v871 = vld [vmem:[%s688 + $0x5b0] sm:$0xff]
    %v872 = vld [vmem:[%s688 + $0x5b8] sm:$0xff]
    %v873 = vld [vmem:[%s688 + $0x5c0] sm:$0xff]
    %v874 = vld [vmem:[%s688 + $0x5c8] sm:$0xff]
    %v875 = vld [vmem:[%s688 + $0x5d0] sm:$0xff]
    %v876 = vld [vmem:[%s688 + $0x5d8] sm:$0xff]
    %v877 = vld [vmem:[%s688 + $0x5e0] sm:$0xff]
    %v878 = vld [vmem:[%s688 + $0x5e8] sm:$0xff]
    %v879 = vld [vmem:[%s688 + $0x5f0] sm:$0xff]
    %v880 = vld [vmem:[%s688 + $0x5f8] sm:$0xff]
    %v881 = vld [vmem:[%s688 + $0x600] sm:$0xff]
    %v882 = vld [vmem:[%s688 + $0x608] sm:$0xff]
    %v883 = vld [vmem:[%s688 + $0x610] sm:$0xff]
    %v884 = vld [vmem:[%s688 + $0x618] sm:$0xff]
    %v885 = vld [vmem:[%s688 + $0x620] sm:$0xff]
    %v886 = vld [vmem:[%s688 + $0x628] sm:$0xff]
    %v887 = vld [vmem:[%s688 + $0x630] sm:$0xff]
    %v888 = vld [vmem:[%s688 + $0x638] sm:$0xff]
    %v889 = vld [vmem:[%s688 + $0x640] sm:$0xff]
    %v890 = vld [vmem:[%s688 + $0x648] sm:$0xff]
    %v891 = vld [vmem:[%s688 + $0x650] sm:$0xff]
    %v892 = vld [vmem:[%s688 + $0x658] sm:$0xff]
    %v893 = vld [vmem:[%s688 + $0x660] sm:$0xff]
    %v894 = vld [vmem:[%s688 + $0x668] sm:$0xff]
    %v895 = vld [vmem:[%s688 + $0x670] sm:$0xff]
    %v896 = vld [vmem:[%s688 + $0x678] sm:$0xff]
    %v897 = vld [vmem:[%s688 + $0x680] sm:$0xff]
    %v898 = vld [vmem:[%s688 + $0x688] sm:$0xff]
    %v899 = vld [vmem:[%s688 + $0x690] sm:$0xff]
    %v900 = vld [vmem:[%s688 + $0x698] sm:$0xff]
    %v901 = vld [vmem:[%s688 + $0x6a0] sm:$0xff]
    %v902 = vld [vmem:[%s688 + $0x6a8] sm:$0xff]
    %v903 = vld [vmem:[%s688 + $0x6b0] sm:$0xff]
    %v904 = vld [vmem:[%s688 + $0x6b8] sm:$0xff]
    %v905 = vld [vmem:[%s688 + $0x6c0] sm:$0xff]
    %v906 = vld [vmem:[%s688 + $0x6c8] sm:$0xff]
    %v907 = vld [vmem:[%s688 + $0x6d0] sm:$0xff]
    %v908 = vld [vmem:[%s688 + $0x6d8] sm:$0xff]
    %v909 = vld [vmem:[%s688 + $0x6e0] sm:$0xff]
    %v910 = vld [vmem:[%s688 + $0x6e8] sm:$0xff]
    %v911 = vld [vmem:[%s688 + $0x6f0] sm:$0xff]
    %v912 = vld [vmem:[%s688 + $0x6f8] sm:$0xff]
    %v913 = vld [vmem:[%s688 + $0x700] sm:$0xff]
    %v914 = vld [vmem:[%s688 + $0x708] sm:$0xff]
    %v915 = vld [vmem:[%s688 + $0x710] sm:$0xff]
    %v916 = vld [vmem:[%s688 + $0x718] sm:$0xff]
    %v917 = vld [vmem:[%s688 + $0x720] sm:$0xff]
    %v918 = vld [vmem:[%s688 + $0x728] sm:$0xff]
    %v919 = vld [vmem:[%s688 + $0x730] sm:$0xff]
    %v920 = vld [vmem:[%s688 + $0x738] sm:$0xff]
    %v921 = vld [vmem:[%s688 + $0x740] sm:$0xff]
    %v922 = vld [vmem:[%s688 + $0x748] sm:$0xff]
    %v923 = vld [vmem:[%s688 + $0x750] sm:$0xff]
    %v924 = vld [vmem:[%s688 + $0x758] sm:$0xff]
    %v925 = vld [vmem:[%s688 + $0x760] sm:$0xff]
    %v926 = vld [vmem:[%s688 + $0x768] sm:$0xff]
    %v927 = vld [vmem:[%s688 + $0x770] sm:$0xff]
    %v928 = vld [vmem:[%s688 + $0x778] sm:$0xff]
    %v929 = vld [vmem:[%s688 + $0x780] sm:$0xff]
    %v930 = vld [vmem:[%s688 + $0x788] sm:$0xff]
    %v931 = vld [vmem:[%s688 + $0x790] sm:$0xff]
    %v932 = vld [vmem:[%s688 + $0x798] sm:$0xff]
    %v933 = vld [vmem:[%s688 + $0x7a0] sm:$0xff]
    %v934 = vld [vmem:[%s688 + $0x7a8] sm:$0xff]
    %v935 = vld [vmem:[%s688 + $0x7b0] sm:$0xff]
    %v936 = vld [vmem:[%s688 + $0x7b8] sm:$0xff]
    %v937 = vld [vmem:[%s688 + $0x7c0] sm:$0xff]
    %v938 = vld [vmem:[%s688 + $0x7c8] sm:$0xff]
    %v939 = vld [vmem:[%s688 + $0x7d0] sm:$0xff]
    %v940 = vld [vmem:[%s688 + $0x7d8] sm:$0xff]
    %v941 = vld [vmem:[%s688 + $0x7e0] sm:$0xff]
    %v942 = vld [vmem:[%s688 + $0x7e8] sm:$0xff]
    %v943 = vld [vmem:[%s688 + $0x7f0] sm:$0xff]
    %v944 = vld [vmem:[%s688 + $0x7f8] sm:$0xff]
    %945 = vmatprep.subr.mxu0 %v750
    %946 = vmatpush1.msra.mxu0 %v749
    %947 = vmatprep.subr.mxu0 %v746
    %948 = vmatpush1.msra.mxu0 %v745
    %949 = vmatprep.subr.mxu0 %v742
    %950 = vmatpush1.msra.mxu0 %v741
    %951 = vmatprep.subr.mxu0 %v738
    %952 = vmatpush1.msra.mxu0 %v737
    %953 = vmatprep.subr.mxu0 %v734
    %954 = vmatpush1.msra.mxu0 %v733
    %955 = vmatprep.subr.mxu0 %v730
    %956 = vmatpush1.msra.mxu0 %v729
    %957 = vmatprep.subr.mxu0 %v726
    %958 = vmatpush1.msra.mxu0 %v725
    %959 = vmatprep.subr.mxu0 %v722
    %960 = vmatpush1.msra.mxu0 %v721
    %961 = vmatprep.subr.mxu0 %v718
    %962 = vmatpush1.msra.mxu0 %v717
    %963 = vmatprep.subr.mxu0 %v714
    %964 = vmatpush1.msra.mxu0 %v713
    %965 = vmatprep.subr.mxu0 %v710
    %966 = vmatpush1.msra.mxu0 %v709
    %967 = vmatprep.subr.mxu0 %v706
    %968 = vmatpush1.msra.mxu0 %v705
    %969 = vmatprep.subr.mxu0 %v702
    %970 = vmatpush1.msra.mxu0 %v701
    %971 = vmatprep.subr.mxu0 %v698
    %972 = vmatpush1.msra.mxu0 %v697
    %973 = vmatprep.subr.mxu0 %v694
    %974 = vmatpush1.msra.mxu0 %v693
    %975 = vmatprep.subr.mxu0 %v690
    %976 = vmatpush1.msra.mxu0 %v689
    %977 = vmatprep.subr.mxu0 %v814
    %978 = vmatpush2.msra.mxu0 %v813
    %979 = vmatprep.subr.mxu0 %v810
    %980 = vmatpush2.msra.mxu0 %v809
    %981 = vmatprep.subr.mxu0 %v806
    %982 = vmatpush2.msra.mxu0 %v805
    %983 = vmatprep.subr.mxu0 %v802
    %984 = vmatpush2.msra.mxu0 %v801
    %985 = vmatprep.subr.mxu0 %v798
    %986 = vmatpush2.msra.mxu0 %v797
    %987 = vmatprep.subr.mxu0 %v794
    %988 = vmatpush2.msra.mxu0 %v793
    %989 = vmatprep.subr.mxu0 %v790
    %990 = vmatpush2.msra.mxu0 %v789
    %991 = vmatprep.subr.mxu0 %v786
    %992 = vmatpush2.msra.mxu0 %v785
    %993 = vmatprep.subr.mxu0 %v782
    %994 = vmatpush2.msra.mxu0 %v781
    %995 = vmatprep.subr.mxu0 %v778
    %996 = vmatpush2.msra.mxu0 %v777
    %997 = vmatprep.subr.mxu0 %v774
    %998 = vmatpush2.msra.mxu0 %v773
    %999 = vmatprep.subr.mxu0 %v770
    %1000 = vmatpush2.msra.mxu0 %v769
    %1001 = vmatprep.subr.mxu0 %v766
    %1002 = vmatpush2.msra.mxu0 %v765
    %1003 = vmatprep.subr.mxu0 %v762
    %1004 = vmatpush2.msra.mxu0 %v761
    %1005 = vmatprep.subr.mxu0 %v758
    %1006 = vmatpush2.msra.mxu0 %v757
    %1007 = vmatprep.subr.mxu0 %v754
    %1008 = vmatpush2.msra.mxu0 %v753
    %1009 = vmatprep.mubr.f32.mxu0 %v57
    %1010 = vmatmul.mubr.f32.gmra.mxu0 %v56
    %v1011 = vpop.f32.mrf.mxu0
    %v1012 = vadd.f32 0.0, %v1011
    %v1013 = vpop.f32.mrf.mxu0
    %v1014 = vadd.f32 0.0, %v1013
    %1015 = vmatprep.mubr.f32.mxu0 %v61
    %1016 = vmatmul.mubr.f32.gmra.mxu0 %v60
    %v1017 = vpop.f32.mrf.mxu0
    %v1018 = vadd.f32 0.0, %v1017
    %v1019 = vpop.f32.mrf.mxu0
    %v1020 = vadd.f32 0.0, %v1019
    %1021 = vmatprep.mubr.f32.mxu0 %v65
    %1022 = vmatmul.mubr.f32.gmra.mxu0 %v64
    %v1023 = vpop.f32.mrf.mxu0
    %v1024 = vadd.f32 0.0, %v1023
    %v1025 = vpop.f32.mrf.mxu0
    %v1026 = vadd.f32 0.0, %v1025
    %1027 = vmatprep.mubr.f32.mxu0 %v69
    %1028 = vmatmul.mubr.f32.gmra.mxu0 %v68
    %v1029 = vpop.f32.mrf.mxu0
    %v1030 = vadd.f32 0.0, %v1029
    %v1031 = vpop.f32.mrf.mxu0
    %v1032 = vadd.f32 0.0, %v1031
    %1033 = vdwg.mxu0
    %1034 = vmatprep.subr.mxu0 %v878
    %1035 = vmatpush1.msra.mxu0 %v877
    %1036 = vmatprep.subr.mxu0 %v874
    %1037 = vmatpush1.msra.mxu0 %v873
    %1038 = vmatprep.subr.mxu0 %v870
    %1039 = vmatpush1.msra.mxu0 %v869
    %1040 = vmatprep.subr.mxu0 %v866
    %1041 = vmatpush1.msra.mxu0 %v865
    %1042 = vmatprep.subr.mxu0 %v862
    %1043 = vmatpush1.msra.mxu0 %v861
    %1044 = vmatprep.subr.mxu0 %v858
    %1045 = vmatpush1.msra.mxu0 %v857
    %1046 = vmatprep.subr.mxu0 %v854
    %1047 = vmatpush1.msra.mxu0 %v853
    %1048 = vmatprep.subr.mxu0 %v850
    %1049 = vmatpush1.msra.mxu0 %v849
    %1050 = vmatprep.subr.mxu0 %v846
    %1051 = vmatpush1.msra.mxu0 %v845
    %1052 = vmatprep.subr.mxu0 %v842
    %1053 = vmatpush1.msra.mxu0 %v841
    %1054 = vmatprep.subr.mxu0 %v838
    %1055 = vmatpush1.msra.mxu0 %v837
    %1056 = vmatprep.subr.mxu0 %v834
    %1057 = vmatpush1.msra.mxu0 %v833
    %1058 = vmatprep.subr.mxu0 %v830
    %1059 = vmatpush1.msra.mxu0 %v829
    %1060 = vmatprep.subr.mxu0 %v826
    %1061 = vmatpush1.msra.mxu0 %v825
    %1062 = vmatprep.subr.mxu0 %v822
    %1063 = vmatpush1.msra.mxu0 %v821
    %1064 = vmatprep.subr.mxu0 %v818
    %1065 = vmatpush1.msra.mxu0 %v817
    %1066 = vmatprep.subr.mxu0 %v942
    %1067 = vmatpush2.msra.mxu0 %v941
    %1068 = vmatprep.subr.mxu0 %v938
    %1069 = vmatpush2.msra.mxu0 %v937
    %1070 = vmatprep.subr.mxu0 %v934
    %1071 = vmatpush2.msra.mxu0 %v933
    %1072 = vmatprep.subr.mxu0 %v930
    %1073 = vmatpush2.msra.mxu0 %v929
    %1074 = vmatprep.subr.mxu0 %v926
    %1075 = vmatpush2.msra.mxu0 %v925
    %1076 = vmatprep.subr.mxu0 %v922
    %1077 = vmatpush2.msra.mxu0 %v921
    %1078 = vmatprep.subr.mxu0 %v918
    %1079 = vmatpush2.msra.mxu0 %v917
    %1080 = vmatprep.subr.mxu0 %v914
    %1081 = vmatpush2.msra.mxu0 %v913
    %1082 = vmatprep.subr.mxu0 %v910
    %1083 = vmatpush2.msra.mxu0 %v909
    %1084 = vmatprep.subr.mxu0 %v906
    %1085 = vmatpush2.msra.mxu0 %v905
    %1086 = vmatprep.subr.mxu0 %v902
    %1087 = vmatpush2.msra.mxu0 %v901
    %1088 = vmatprep.subr.mxu0 %v898
    %1089 = vmatpush2.msra.mxu0 %v897
    %1090 = vmatprep.subr.mxu0 %v894
    %1091 = vmatpush2.msra.mxu0 %v893
    %1092 = vmatprep.subr.mxu0 %v890
    %1093 = vmatpush2.msra.mxu0 %v889
    %1094 = vmatprep.subr.mxu0 %v886
    %1095 = vmatpush2.msra.mxu0 %v885
    %1096 = vmatprep.subr.mxu0 %v882
    %1097 = vmatpush2.msra.mxu0 %v881
    %1098 = vmatprep.mubr.f32.mxu0 %v59
    %1099 = vmatmul.mubr.f32.gmra.mxu0 %v58
    %v1100 = vpop.f32.mrf.mxu0
    %v1101 = vadd.f32 %v1012, %v1100
    %v1102 = vpop.f32.mrf.mxu0
    %v1103 = vadd.f32 %v1014, %v1102
    %1104 = vmatprep.mubr.f32.mxu0 %v63
    %1105 = vmatmul.mubr.f32.gmra.mxu0 %v62
    %v1106 = vpop.f32.mrf.mxu0
    %v1107 = vadd.f32 %v1018, %v1106
    %v1108 = vpop.f32.mrf.mxu0
    %v1109 = vadd.f32 %v1020, %v1108
    %1110 = vmatprep.mubr.f32.mxu0 %v67
    %1111 = vmatmul.mubr.f32.gmra.mxu0 %v66
    %v1112 = vpop.f32.mrf.mxu0
    %v1113 = vadd.f32 %v1024, %v1112
    %v1114 = vpop.f32.mrf.mxu0
    %v1115 = vadd.f32 %v1026, %v1114
    %1116 = vmatprep.mubr.f32.mxu0 %v71
    %1117 = vmatmul.mubr.f32.gmra.mxu0 %v70
    %v1118 = vpop.f32.mrf.mxu0
    %v1119 = vadd.f32 %v1030, %v1118
    %v1120 = vpop.f32.mrf.mxu0
    %v1121 = vadd.f32 %v1032, %v1120
    %1122 = vdwg.mxu0
    %1123 = vmatprep.subr.mxu0 %v752
    %1124 = vmatpush1.msra.mxu0 %v751
    %1125 = vmatprep.subr.mxu0 %v748
    %1126 = vmatpush1.msra.mxu0 %v747
    %1127 = vmatprep.subr.mxu0 %v744
    %1128 = vmatpush1.msra.mxu0 %v743
    %1129 = vmatprep.subr.mxu0 %v740
    %1130 = vmatpush1.msra.mxu0 %v739
    %1131 = vmatprep.subr.mxu0 %v736
    %1132 = vmatpush1.msra.mxu0 %v735
    %1133 = vmatprep.subr.mxu0 %v732
    %1134 = vmatpush1.msra.mxu0 %v731
    %1135 = vmatprep.subr.mxu0 %v728
    %1136 = vmatpush1.msra.mxu0 %v727
    %1137 = vmatprep.subr.mxu0 %v724
    %1138 = vmatpush1.msra.mxu0 %v723
    %1139 = vmatprep.subr.mxu0 %v720
    %1140 = vmatpush1.msra.mxu0 %v719
    %1141 = vmatprep.subr.mxu0 %v716
    %1142 = vmatpush1.msra.mxu0 %v715
    %1143 = vmatprep.subr.mxu0 %v712
    %1144 = vmatpush1.msra.mxu0 %v711
    %1145 = vmatprep.subr.mxu0 %v708
    %1146 = vmatpush1.msra.mxu0 %v707
    %1147 = vmatprep.subr.mxu0 %v704
    %1148 = vmatpush1.msra.mxu0 %v703
    %1149 = vmatprep.subr.mxu0 %v700
    %1150 = vmatpush1.msra.mxu0 %v699
    %1151 = vmatprep.subr.mxu0 %v696
    %1152 = vmatpush1.msra.mxu0 %v695
    %1153 = vmatprep.subr.mxu0 %v692
    %1154 = vmatpush1.msra.mxu0 %v691
    %1155 = vmatprep.subr.mxu0 %v816
    %1156 = vmatpush2.msra.mxu0 %v815
    %1157 = vmatprep.subr.mxu0 %v812
    %1158 = vmatpush2.msra.mxu0 %v811
    %1159 = vmatprep.subr.mxu0 %v808
    %1160 = vmatpush2.msra.mxu0 %v807
    %1161 = vmatprep.subr.mxu0 %v804
    %1162 = vmatpush2.msra.mxu0 %v803
    %1163 = vmatprep.subr.mxu0 %v800
    %1164 = vmatpush2.msra.mxu0 %v799
    %1165 = vmatprep.subr.mxu0 %v796
    %1166 = vmatpush2.msra.mxu0 %v795
    %1167 = vmatprep.subr.mxu0 %v792
    %1168 = vmatpush2.msra.mxu0 %v791
    %1169 = vmatprep.subr.mxu0 %v788
    %1170 = vmatpush2.msra.mxu0 %v787
    %1171 = vmatprep.subr.mxu0 %v784
    %1172 = vmatpush2.msra.mxu0 %v783
    %1173 = vmatprep.subr.mxu0 %v780
    %1174 = vmatpush2.msra.mxu0 %v779
    %1175 = vmatprep.subr.mxu0 %v776
    %1176 = vmatpush2.msra.mxu0 %v775
    %1177 = vmatprep.subr.mxu0 %v772
    %1178 = vmatpush2.msra.mxu0 %v771
    %1179 = vmatprep.subr.mxu0 %v768
    %1180 = vmatpush2.msra.mxu0 %v767
    %1181 = vmatprep.subr.mxu0 %v764
    %1182 = vmatpush2.msra.mxu0 %v763
    %1183 = vmatprep.subr.mxu0 %v760
    %1184 = vmatpush2.msra.mxu0 %v759
    %1185 = vmatprep.subr.mxu0 %v756
    %1186 = vmatpush2.msra.mxu0 %v755
    %1187 = vmatprep.mubr.f32.mxu0 %v57
    %1188 = vmatmul.mubr.f32.gmra.mxu0 %v56
    %v1189 = vpop.f32.mrf.mxu0
    %v1190 = vadd.f32 0.0, %v1189
    %v1191 = vpop.f32.mrf.mxu0
    %v1192 = vadd.f32 0.0, %v1191
    %1193 = vmatprep.mubr.f32.mxu0 %v61
    %1194 = vmatmul.mubr.f32.gmra.mxu0 %v60
    %v1195 = vpop.f32.mrf.mxu0
    %v1196 = vadd.f32 0.0, %v1195
    %v1197 = vpop.f32.mrf.mxu0
    %v1198 = vadd.f32 0.0, %v1197
    %1199 = vmatprep.mubr.f32.mxu0 %v65
    %1200 = vmatmul.mubr.f32.gmra.mxu0 %v64
    %v1201 = vpop.f32.mrf.mxu0
    %v1202 = vadd.f32 0.0, %v1201
    %v1203 = vpop.f32.mrf.mxu0
    %v1204 = vadd.f32 0.0, %v1203
    %1205 = vmatprep.mubr.f32.mxu0 %v69
    %1206 = vmatmul.mubr.f32.gmra.mxu0 %v68
    %v1207 = vpop.f32.mrf.mxu0
    %v1208 = vadd.f32 0.0, %v1207
    %v1209 = vpop.f32.mrf.mxu0
    %v1210 = vadd.f32 0.0, %v1209
    %1211 = vdwg.mxu0
    %1212 = vmatprep.subr.mxu0 %v880
    %1213 = vmatpush1.msra.mxu0 %v879
    %1214 = vmatprep.subr.mxu0 %v876
    %1215 = vmatpush1.msra.mxu0 %v875
    %1216 = vmatprep.subr.mxu0 %v872
    %1217 = vmatpush1.msra.mxu0 %v871
    %1218 = vmatprep.subr.mxu0 %v868
    %1219 = vmatpush1.msra.mxu0 %v867
    %1220 = vmatprep.subr.mxu0 %v864
    %1221 = vmatpush1.msra.mxu0 %v863
    %1222 = vmatprep.subr.mxu0 %v860
    %1223 = vmatpush1.msra.mxu0 %v859
    %1224 = vmatprep.subr.mxu0 %v856
    %1225 = vmatpush1.msra.mxu0 %v855
    %1226 = vmatprep.subr.mxu0 %v852
    %1227 = vmatpush1.msra.mxu0 %v851
    %1228 = vmatprep.subr.mxu0 %v848
    %1229 = vmatpush1.msra.mxu0 %v847
    %1230 = vmatprep.subr.mxu0 %v844
    %1231 = vmatpush1.msra.mxu0 %v843
    %1232 = vmatprep.subr.mxu0 %v840
    %1233 = vmatpush1.msra.mxu0 %v839
    %1234 = vmatprep.subr.mxu0 %v836
    %1235 = vmatpush1.msra.mxu0 %v835
    %1236 = vmatprep.subr.mxu0 %v832
    %1237 = vmatpush1.msra.mxu0 %v831
    %1238 = vmatprep.subr.mxu0 %v828
    %1239 = vmatpush1.msra.mxu0 %v827
    %1240 = vmatprep.subr.mxu0 %v824
    %1241 = vmatpush1.msra.mxu0 %v823
    %1242 = vmatprep.subr.mxu0 %v820
    %1243 = vmatpush1.msra.mxu0 %v819
    %1244 = vmatprep.subr.mxu0 %v944
    %1245 = vmatpush2.msra.mxu0 %v943
    %1246 = vmatprep.subr.mxu0 %v940
    %1247 = vmatpush2.msra.mxu0 %v939
    %1248 = vmatprep.subr.mxu0 %v936
    %1249 = vmatpush2.msra.mxu0 %v935
    %1250 = vmatprep.subr.mxu0 %v932
    %1251 = vmatpush2.msra.mxu0 %v931
    %1252 = vmatprep.subr.mxu0 %v928
    %1253 = vmatpush2.msra.mxu0 %v927
    %1254 = vmatprep.subr.mxu0 %v924
    %1255 = vmatpush2.msra.mxu0 %v923
    %1256 = vmatprep.subr.mxu0 %v920
    %1257 = vmatpush2.msra.mxu0 %v919
    %1258 = vmatprep.subr.mxu0 %v916
    %1259 = vmatpush2.msra.mxu0 %v915
    %1260 = vmatprep.subr.mxu0 %v912
    %1261 = vmatpush2.msra.mxu0 %v911
    %1262 = vmatprep.subr.mxu0 %v908
    %1263 = vmatpush2.msra.mxu0 %v907
    %1264 = vmatprep.subr.mxu0 %v904
    %1265 = vmatpush2.msra.mxu0 %v903
    %1266 = vmatprep.subr.mxu0 %v900
    %1267 = vmatpush2.msra.mxu0 %v899
    %1268 = vmatprep.subr.mxu0 %v896
    %1269 = vmatpush2.msra.mxu0 %v895
    %1270 = vmatprep.subr.mxu0 %v892
    %1271 = vmatpush2.msra.mxu0 %v891
    %1272 = vmatprep.subr.mxu0 %v888
    %1273 = vmatpush2.msra.mxu0 %v887
    %1274 = vmatprep.subr.mxu0 %v884
    %1275 = vmatpush2.msra.mxu0 %v883
    %1276 = vmatprep.mubr.f32.mxu0 %v59
    %1277 = vmatmul.mubr.f32.gmra.mxu0 %v58
    %v1278 = vpop.f32.mrf.mxu0
    %v1279 = vadd.f32 %v1190, %v1278
    %v1280 = vpop.f32.mrf.mxu0
    %v1281 = vadd.f32 %v1192, %v1280
    %1282 = vmatprep.mubr.f32.mxu0 %v63
    %1283 = vmatmul.mubr.f32.gmra.mxu0 %v62
    %v1284 = vpop.f32.mrf.mxu0
    %v1285 = vadd.f32 %v1196, %v1284
    %v1286 = vpop.f32.mrf.mxu0
    %v1287 = vadd.f32 %v1198, %v1286
    %1288 = vmatprep.mubr.f32.mxu0 %v67
    %1289 = vmatmul.mubr.f32.gmra.mxu0 %v66
    %v1290 = vpop.f32.mrf.mxu0
    %v1291 = vadd.f32 %v1202, %v1290
    %v1292 = vpop.f32.mrf.mxu0
    %v1293 = vadd.f32 %v1204, %v1292
    %1294 = vmatprep.mubr.f32.mxu0 %v71
    %1295 = vmatmul.mubr.f32.gmra.mxu0 %v70
    %v1296 = vpop.f32.mrf.mxu0
    %v1297 = vadd.f32 %v1208, %v1296
    %v1298 = vpop.f32.mrf.mxu0
    %v1299 = vadd.f32 %v1210, %v1298
    %1300 = vdwg.mxu0
    %s1301 = scalar_lea.vmem [#allocation2], 4096
    %v1302 = vld [vmem:[%s1301] sm:$0xff]
    %v1303 = vld [vmem:[%s1301 + $0x8] sm:$0xff]
    %v1304 = vld [vmem:[%s1301 + $0x10] sm:$0xff]
    %v1305 = vld [vmem:[%s1301 + $0x18] sm:$0xff]
    %v1306 = vld [vmem:[%s1301 + $0x20] sm:$0xff]
    %v1307 = vld [vmem:[%s1301 + $0x28] sm:$0xff]
    %v1308 = vld [vmem:[%s1301 + $0x30] sm:$0xff]
    %v1309 = vld [vmem:[%s1301 + $0x38] sm:$0xff]
    %v1310 = vld [vmem:[%s1301 + $0x40] sm:$0xff]
    %v1311 = vld [vmem:[%s1301 + $0x48] sm:$0xff]
    %v1312 = vld [vmem:[%s1301 + $0x50] sm:$0xff]
    %v1313 = vld [vmem:[%s1301 + $0x58] sm:$0xff]
    %v1314 = vld [vmem:[%s1301 + $0x60] sm:$0xff]
    %v1315 = vld [vmem:[%s1301 + $0x68] sm:$0xff]
    %v1316 = vld [vmem:[%s1301 + $0x70] sm:$0xff]
    %v1317 = vld [vmem:[%s1301 + $0x78] sm:$0xff]
    %v1318 = vld [vmem:[%s1301 + $0x80] sm:$0xff]
    %v1319 = vld [vmem:[%s1301 + $0x88] sm:$0xff]
    %v1320 = vld [vmem:[%s1301 + $0x90] sm:$0xff]
    %v1321 = vld [vmem:[%s1301 + $0x98] sm:$0xff]
    %v1322 = vld [vmem:[%s1301 + $0xa0] sm:$0xff]
    %v1323 = vld [vmem:[%s1301 + $0xa8] sm:$0xff]
    %v1324 = vld [vmem:[%s1301 + $0xb0] sm:$0xff]
    %v1325 = vld [vmem:[%s1301 + $0xb8] sm:$0xff]
    %v1326 = vld [vmem:[%s1301 + $0xc0] sm:$0xff]
    %v1327 = vld [vmem:[%s1301 + $0xc8] sm:$0xff]
    %v1328 = vld [vmem:[%s1301 + $0xd0] sm:$0xff]
    %v1329 = vld [vmem:[%s1301 + $0xd8] sm:$0xff]
    %v1330 = vld [vmem:[%s1301 + $0xe0] sm:$0xff]
    %v1331 = vld [vmem:[%s1301 + $0xe8] sm:$0xff]
    %v1332 = vld [vmem:[%s1301 + $0xf0] sm:$0xff]
    %v1333 = vld [vmem:[%s1301 + $0xf8] sm:$0xff]
    %v1334 = vld [vmem:[%s1301 + $0x100] sm:$0xff]
    %v1335 = vld [vmem:[%s1301 + $0x108] sm:$0xff]
    %v1336 = vld [vmem:[%s1301 + $0x110] sm:$0xff]
    %v1337 = vld [vmem:[%s1301 + $0x118] sm:$0xff]
    %v1338 = vld [vmem:[%s1301 + $0x120] sm:$0xff]
    %v1339 = vld [vmem:[%s1301 + $0x128] sm:$0xff]
    %v1340 = vld [vmem:[%s1301 + $0x130] sm:$0xff]
    %v1341 = vld [vmem:[%s1301 + $0x138] sm:$0xff]
    %v1342 = vld [vmem:[%s1301 + $0x140] sm:$0xff]
    %v1343 = vld [vmem:[%s1301 + $0x148] sm:$0xff]
    %v1344 = vld [vmem:[%s1301 + $0x150] sm:$0xff]
    %v1345 = vld [vmem:[%s1301 + $0x158] sm:$0xff]
    %v1346 = vld [vmem:[%s1301 + $0x160] sm:$0xff]
    %v1347 = vld [vmem:[%s1301 + $0x168] sm:$0xff]
    %v1348 = vld [vmem:[%s1301 + $0x170] sm:$0xff]
    %v1349 = vld [vmem:[%s1301 + $0x178] sm:$0xff]
    %v1350 = vld [vmem:[%s1301 + $0x180] sm:$0xff]
    %v1351 = vld [vmem:[%s1301 + $0x188] sm:$0xff]
    %v1352 = vld [vmem:[%s1301 + $0x190] sm:$0xff]
    %v1353 = vld [vmem:[%s1301 + $0x198] sm:$0xff]
    %v1354 = vld [vmem:[%s1301 + $0x1a0] sm:$0xff]
    %v1355 = vld [vmem:[%s1301 + $0x1a8] sm:$0xff]
    %v1356 = vld [vmem:[%s1301 + $0x1b0] sm:$0xff]
    %v1357 = vld [vmem:[%s1301 + $0x1b8] sm:$0xff]
    %v1358 = vld [vmem:[%s1301 + $0x1c0] sm:$0xff]
    %v1359 = vld [vmem:[%s1301 + $0x1c8] sm:$0xff]
    %v1360 = vld [vmem:[%s1301 + $0x1d0] sm:$0xff]
    %v1361 = vld [vmem:[%s1301 + $0x1d8] sm:$0xff]
    %v1362 = vld [vmem:[%s1301 + $0x1e0] sm:$0xff]
    %v1363 = vld [vmem:[%s1301 + $0x1e8] sm:$0xff]
    %v1364 = vld [vmem:[%s1301 + $0x1f0] sm:$0xff]
    %v1365 = vld [vmem:[%s1301 + $0x1f8] sm:$0xff]
    %v1366 = vld [vmem:[%s1301 + $0x200] sm:$0xff]
    %v1367 = vld [vmem:[%s1301 + $0x208] sm:$0xff]
    %v1368 = vld [vmem:[%s1301 + $0x210] sm:$0xff]
    %v1369 = vld [vmem:[%s1301 + $0x218] sm:$0xff]
    %v1370 = vld [vmem:[%s1301 + $0x220] sm:$0xff]
    %v1371 = vld [vmem:[%s1301 + $0x228] sm:$0xff]
    %v1372 = vld [vmem:[%s1301 + $0x230] sm:$0xff]
    %v1373 = vld [vmem:[%s1301 + $0x238] sm:$0xff]
    %v1374 = vld [vmem:[%s1301 + $0x240] sm:$0xff]
    %v1375 = vld [vmem:[%s1301 + $0x248] sm:$0xff]
    %v1376 = vld [vmem:[%s1301 + $0x250] sm:$0xff]
    %v1377 = vld [vmem:[%s1301 + $0x258] sm:$0xff]
    %v1378 = vld [vmem:[%s1301 + $0x260] sm:$0xff]
    %v1379 = vld [vmem:[%s1301 + $0x268] sm:$0xff]
    %v1380 = vld [vmem:[%s1301 + $0x270] sm:$0xff]
    %v1381 = vld [vmem:[%s1301 + $0x278] sm:$0xff]
    %v1382 = vld [vmem:[%s1301 + $0x280] sm:$0xff]
    %v1383 = vld [vmem:[%s1301 + $0x288] sm:$0xff]
    %v1384 = vld [vmem:[%s1301 + $0x290] sm:$0xff]
    %v1385 = vld [vmem:[%s1301 + $0x298] sm:$0xff]
    %v1386 = vld [vmem:[%s1301 + $0x2a0] sm:$0xff]
    %v1387 = vld [vmem:[%s1301 + $0x2a8] sm:$0xff]
    %v1388 = vld [vmem:[%s1301 + $0x2b0] sm:$0xff]
    %v1389 = vld [vmem:[%s1301 + $0x2b8] sm:$0xff]
    %v1390 = vld [vmem:[%s1301 + $0x2c0] sm:$0xff]
    %v1391 = vld [vmem:[%s1301 + $0x2c8] sm:$0xff]
    %v1392 = vld [vmem:[%s1301 + $0x2d0] sm:$0xff]
    %v1393 = vld [vmem:[%s1301 + $0x2d8] sm:$0xff]
    %v1394 = vld [vmem:[%s1301 + $0x2e0] sm:$0xff]
    %v1395 = vld [vmem:[%s1301 + $0x2e8] sm:$0xff]
    %v1396 = vld [vmem:[%s1301 + $0x2f0] sm:$0xff]
    %v1397 = vld [vmem:[%s1301 + $0x2f8] sm:$0xff]
    %v1398 = vld [vmem:[%s1301 + $0x300] sm:$0xff]
    %v1399 = vld [vmem:[%s1301 + $0x308] sm:$0xff]
    %v1400 = vld [vmem:[%s1301 + $0x310] sm:$0xff]
    %v1401 = vld [vmem:[%s1301 + $0x318] sm:$0xff]
    %v1402 = vld [vmem:[%s1301 + $0x320] sm:$0xff]
    %v1403 = vld [vmem:[%s1301 + $0x328] sm:$0xff]
    %v1404 = vld [vmem:[%s1301 + $0x330] sm:$0xff]
    %v1405 = vld [vmem:[%s1301 + $0x338] sm:$0xff]
    %v1406 = vld [vmem:[%s1301 + $0x340] sm:$0xff]
    %v1407 = vld [vmem:[%s1301 + $0x348] sm:$0xff]
    %v1408 = vld [vmem:[%s1301 + $0x350] sm:$0xff]
    %v1409 = vld [vmem:[%s1301 + $0x358] sm:$0xff]
    %v1410 = vld [vmem:[%s1301 + $0x360] sm:$0xff]
    %v1411 = vld [vmem:[%s1301 + $0x368] sm:$0xff]
    %v1412 = vld [vmem:[%s1301 + $0x370] sm:$0xff]
    %v1413 = vld [vmem:[%s1301 + $0x378] sm:$0xff]
    %v1414 = vld [vmem:[%s1301 + $0x380] sm:$0xff]
    %v1415 = vld [vmem:[%s1301 + $0x388] sm:$0xff]
    %v1416 = vld [vmem:[%s1301 + $0x390] sm:$0xff]
    %v1417 = vld [vmem:[%s1301 + $0x398] sm:$0xff]
    %v1418 = vld [vmem:[%s1301 + $0x3a0] sm:$0xff]
    %v1419 = vld [vmem:[%s1301 + $0x3a8] sm:$0xff]
    %v1420 = vld [vmem:[%s1301 + $0x3b0] sm:$0xff]
    %v1421 = vld [vmem:[%s1301 + $0x3b8] sm:$0xff]
    %v1422 = vld [vmem:[%s1301 + $0x3c0] sm:$0xff]
    %v1423 = vld [vmem:[%s1301 + $0x3c8] sm:$0xff]
    %v1424 = vld [vmem:[%s1301 + $0x3d0] sm:$0xff]
    %v1425 = vld [vmem:[%s1301 + $0x3d8] sm:$0xff]
    %v1426 = vld [vmem:[%s1301 + $0x3e0] sm:$0xff]
    %v1427 = vld [vmem:[%s1301 + $0x3e8] sm:$0xff]
    %v1428 = vld [vmem:[%s1301 + $0x3f0] sm:$0xff]
    %v1429 = vld [vmem:[%s1301 + $0x3f8] sm:$0xff]
    %v1430 = vld [vmem:[%s1301 + $0x400] sm:$0xff]
    %v1431 = vld [vmem:[%s1301 + $0x408] sm:$0xff]
    %v1432 = vld [vmem:[%s1301 + $0x410] sm:$0xff]
    %v1433 = vld [vmem:[%s1301 + $0x418] sm:$0xff]
    %v1434 = vld [vmem:[%s1301 + $0x420] sm:$0xff]
    %v1435 = vld [vmem:[%s1301 + $0x428] sm:$0xff]
    %v1436 = vld [vmem:[%s1301 + $0x430] sm:$0xff]
    %v1437 = vld [vmem:[%s1301 + $0x438] sm:$0xff]
    %v1438 = vld [vmem:[%s1301 + $0x440] sm:$0xff]
    %v1439 = vld [vmem:[%s1301 + $0x448] sm:$0xff]
    %v1440 = vld [vmem:[%s1301 + $0x450] sm:$0xff]
    %v1441 = vld [vmem:[%s1301 + $0x458] sm:$0xff]
    %v1442 = vld [vmem:[%s1301 + $0x460] sm:$0xff]
    %v1443 = vld [vmem:[%s1301 + $0x468] sm:$0xff]
    %v1444 = vld [vmem:[%s1301 + $0x470] sm:$0xff]
    %v1445 = vld [vmem:[%s1301 + $0x478] sm:$0xff]
    %v1446 = vld [vmem:[%s1301 + $0x480] sm:$0xff]
    %v1447 = vld [vmem:[%s1301 + $0x488] sm:$0xff]
    %v1448 = vld [vmem:[%s1301 + $0x490] sm:$0xff]
    %v1449 = vld [vmem:[%s1301 + $0x498] sm:$0xff]
    %v1450 = vld [vmem:[%s1301 + $0x4a0] sm:$0xff]
    %v1451 = vld [vmem:[%s1301 + $0x4a8] sm:$0xff]
    %v1452 = vld [vmem:[%s1301 + $0x4b0] sm:$0xff]
    %v1453 = vld [vmem:[%s1301 + $0x4b8] sm:$0xff]
    %v1454 = vld [vmem:[%s1301 + $0x4c0] sm:$0xff]
    %v1455 = vld [vmem:[%s1301 + $0x4c8] sm:$0xff]
    %v1456 = vld [vmem:[%s1301 + $0x4d0] sm:$0xff]
    %v1457 = vld [vmem:[%s1301 + $0x4d8] sm:$0xff]
    %v1458 = vld [vmem:[%s1301 + $0x4e0] sm:$0xff]
    %v1459 = vld [vmem:[%s1301 + $0x4e8] sm:$0xff]
    %v1460 = vld [vmem:[%s1301 + $0x4f0] sm:$0xff]
    %v1461 = vld [vmem:[%s1301 + $0x4f8] sm:$0xff]
    %v1462 = vld [vmem:[%s1301 + $0x500] sm:$0xff]
    %v1463 = vld [vmem:[%s1301 + $0x508] sm:$0xff]
    %v1464 = vld [vmem:[%s1301 + $0x510] sm:$0xff]
    %v1465 = vld [vmem:[%s1301 + $0x518] sm:$0xff]
    %v1466 = vld [vmem:[%s1301 + $0x520] sm:$0xff]
    %v1467 = vld [vmem:[%s1301 + $0x528] sm:$0xff]
    %v1468 = vld [vmem:[%s1301 + $0x530] sm:$0xff]
    %v1469 = vld [vmem:[%s1301 + $0x538] sm:$0xff]
    %v1470 = vld [vmem:[%s1301 + $0x540] sm:$0xff]
    %v1471 = vld [vmem:[%s1301 + $0x548] sm:$0xff]
    %v1472 = vld [vmem:[%s1301 + $0x550] sm:$0xff]
    %v1473 = vld [vmem:[%s1301 + $0x558] sm:$0xff]
    %v1474 = vld [vmem:[%s1301 + $0x560] sm:$0xff]
    %v1475 = vld [vmem:[%s1301 + $0x568] sm:$0xff]
    %v1476 = vld [vmem:[%s1301 + $0x570] sm:$0xff]
    %v1477 = vld [vmem:[%s1301 + $0x578] sm:$0xff]
    %v1478 = vld [vmem:[%s1301 + $0x580] sm:$0xff]
    %v1479 = vld [vmem:[%s1301 + $0x588] sm:$0xff]
    %v1480 = vld [vmem:[%s1301 + $0x590] sm:$0xff]
    %v1481 = vld [vmem:[%s1301 + $0x598] sm:$0xff]
    %v1482 = vld [vmem:[%s1301 + $0x5a0] sm:$0xff]
    %v1483 = vld [vmem:[%s1301 + $0x5a8] sm:$0xff]
    %v1484 = vld [vmem:[%s1301 + $0x5b0] sm:$0xff]
    %v1485 = vld [vmem:[%s1301 + $0x5b8] sm:$0xff]
    %v1486 = vld [vmem:[%s1301 + $0x5c0] sm:$0xff]
    %v1487 = vld [vmem:[%s1301 + $0x5c8] sm:$0xff]
    %v1488 = vld [vmem:[%s1301 + $0x5d0] sm:$0xff]
    %v1489 = vld [vmem:[%s1301 + $0x5d8] sm:$0xff]
    %v1490 = vld [vmem:[%s1301 + $0x5e0] sm:$0xff]
    %v1491 = vld [vmem:[%s1301 + $0x5e8] sm:$0xff]
    %v1492 = vld [vmem:[%s1301 + $0x5f0] sm:$0xff]
    %v1493 = vld [vmem:[%s1301 + $0x5f8] sm:$0xff]
    %v1494 = vld [vmem:[%s1301 + $0x600] sm:$0xff]
    %v1495 = vld [vmem:[%s1301 + $0x608] sm:$0xff]
    %v1496 = vld [vmem:[%s1301 + $0x610] sm:$0xff]
    %v1497 = vld [vmem:[%s1301 + $0x618] sm:$0xff]
    %v1498 = vld [vmem:[%s1301 + $0x620] sm:$0xff]
    %v1499 = vld [vmem:[%s1301 + $0x628] sm:$0xff]
    %v1500 = vld [vmem:[%s1301 + $0x630] sm:$0xff]
    %v1501 = vld [vmem:[%s1301 + $0x638] sm:$0xff]
    %v1502 = vld [vmem:[%s1301 + $0x640] sm:$0xff]
    %v1503 = vld [vmem:[%s1301 + $0x648] sm:$0xff]
    %v1504 = vld [vmem:[%s1301 + $0x650] sm:$0xff]
    %v1505 = vld [vmem:[%s1301 + $0x658] sm:$0xff]
    %v1506 = vld [vmem:[%s1301 + $0x660] sm:$0xff]
    %v1507 = vld [vmem:[%s1301 + $0x668] sm:$0xff]
    %v1508 = vld [vmem:[%s1301 + $0x670] sm:$0xff]
    %v1509 = vld [vmem:[%s1301 + $0x678] sm:$0xff]
    %v1510 = vld [vmem:[%s1301 + $0x680] sm:$0xff]
    %v1511 = vld [vmem:[%s1301 + $0x688] sm:$0xff]
    %v1512 = vld [vmem:[%s1301 + $0x690] sm:$0xff]
    %v1513 = vld [vmem:[%s1301 + $0x698] sm:$0xff]
    %v1514 = vld [vmem:[%s1301 + $0x6a0] sm:$0xff]
    %v1515 = vld [vmem:[%s1301 + $0x6a8] sm:$0xff]
    %v1516 = vld [vmem:[%s1301 + $0x6b0] sm:$0xff]
    %v1517 = vld [vmem:[%s1301 + $0x6b8] sm:$0xff]
    %v1518 = vld [vmem:[%s1301 + $0x6c0] sm:$0xff]
    %v1519 = vld [vmem:[%s1301 + $0x6c8] sm:$0xff]
    %v1520 = vld [vmem:[%s1301 + $0x6d0] sm:$0xff]
    %v1521 = vld [vmem:[%s1301 + $0x6d8] sm:$0xff]
    %v1522 = vld [vmem:[%s1301 + $0x6e0] sm:$0xff]
    %v1523 = vld [vmem:[%s1301 + $0x6e8] sm:$0xff]
    %v1524 = vld [vmem:[%s1301 + $0x6f0] sm:$0xff]
    %v1525 = vld [vmem:[%s1301 + $0x6f8] sm:$0xff]
    %v1526 = vld [vmem:[%s1301 + $0x700] sm:$0xff]
    %v1527 = vld [vmem:[%s1301 + $0x708] sm:$0xff]
    %v1528 = vld [vmem:[%s1301 + $0x710] sm:$0xff]
    %v1529 = vld [vmem:[%s1301 + $0x718] sm:$0xff]
    %v1530 = vld [vmem:[%s1301 + $0x720] sm:$0xff]
    %v1531 = vld [vmem:[%s1301 + $0x728] sm:$0xff]
    %v1532 = vld [vmem:[%s1301 + $0x730] sm:$0xff]
    %v1533 = vld [vmem:[%s1301 + $0x738] sm:$0xff]
    %v1534 = vld [vmem:[%s1301 + $0x740] sm:$0xff]
    %v1535 = vld [vmem:[%s1301 + $0x748] sm:$0xff]
    %v1536 = vld [vmem:[%s1301 + $0x750] sm:$0xff]
    %v1537 = vld [vmem:[%s1301 + $0x758] sm:$0xff]
    %v1538 = vld [vmem:[%s1301 + $0x760] sm:$0xff]
    %v1539 = vld [vmem:[%s1301 + $0x768] sm:$0xff]
    %v1540 = vld [vmem:[%s1301 + $0x770] sm:$0xff]
    %v1541 = vld [vmem:[%s1301 + $0x778] sm:$0xff]
    %v1542 = vld [vmem:[%s1301 + $0x780] sm:$0xff]
    %v1543 = vld [vmem:[%s1301 + $0x788] sm:$0xff]
    %v1544 = vld [vmem:[%s1301 + $0x790] sm:$0xff]
    %v1545 = vld [vmem:[%s1301 + $0x798] sm:$0xff]
    %v1546 = vld [vmem:[%s1301 + $0x7a0] sm:$0xff]
    %v1547 = vld [vmem:[%s1301 + $0x7a8] sm:$0xff]
    %v1548 = vld [vmem:[%s1301 + $0x7b0] sm:$0xff]
    %v1549 = vld [vmem:[%s1301 + $0x7b8] sm:$0xff]
    %v1550 = vld [vmem:[%s1301 + $0x7c0] sm:$0xff]
    %v1551 = vld [vmem:[%s1301 + $0x7c8] sm:$0xff]
    %v1552 = vld [vmem:[%s1301 + $0x7d0] sm:$0xff]
    %v1553 = vld [vmem:[%s1301 + $0x7d8] sm:$0xff]
    %v1554 = vld [vmem:[%s1301 + $0x7e0] sm:$0xff]
    %v1555 = vld [vmem:[%s1301 + $0x7e8] sm:$0xff]
    %v1556 = vld [vmem:[%s1301 + $0x7f0] sm:$0xff]
    %v1557 = vld [vmem:[%s1301 + $0x7f8] sm:$0xff]
    %1558 = vmatprep.subr.mxu0 %v1363
    %1559 = vmatpush1.msra.mxu0 %v1362
    %1560 = vmatprep.subr.mxu0 %v1359
    %1561 = vmatpush1.msra.mxu0 %v1358
    %1562 = vmatprep.subr.mxu0 %v1355
    %1563 = vmatpush1.msra.mxu0 %v1354
    %1564 = vmatprep.subr.mxu0 %v1351
    %1565 = vmatpush1.msra.mxu0 %v1350
    %1566 = vmatprep.subr.mxu0 %v1347
    %1567 = vmatpush1.msra.mxu0 %v1346
    %1568 = vmatprep.subr.mxu0 %v1343
    %1569 = vmatpush1.msra.mxu0 %v1342
    %1570 = vmatprep.subr.mxu0 %v1339
    %1571 = vmatpush1.msra.mxu0 %v1338
    %1572 = vmatprep.subr.mxu0 %v1335
    %1573 = vmatpush1.msra.mxu0 %v1334
    %1574 = vmatprep.subr.mxu0 %v1331
    %1575 = vmatpush1.msra.mxu0 %v1330
    %1576 = vmatprep.subr.mxu0 %v1327
    %1577 = vmatpush1.msra.mxu0 %v1326
    %1578 = vmatprep.subr.mxu0 %v1323
    %1579 = vmatpush1.msra.mxu0 %v1322
    %1580 = vmatprep.subr.mxu0 %v1319
    %1581 = vmatpush1.msra.mxu0 %v1318
    %1582 = vmatprep.subr.mxu0 %v1315
    %1583 = vmatpush1.msra.mxu0 %v1314
    %1584 = vmatprep.subr.mxu0 %v1311
    %1585 = vmatpush1.msra.mxu0 %v1310
    %1586 = vmatprep.subr.mxu0 %v1307
    %1587 = vmatpush1.msra.mxu0 %v1306
    %1588 = vmatprep.subr.mxu0 %v1303
    %1589 = vmatpush1.msra.mxu0 %v1302
    %1590 = vmatprep.subr.mxu0 %v1427
    %1591 = vmatpush2.msra.mxu0 %v1426
    %1592 = vmatprep.subr.mxu0 %v1423
    %1593 = vmatpush2.msra.mxu0 %v1422
    %1594 = vmatprep.subr.mxu0 %v1419
    %1595 = vmatpush2.msra.mxu0 %v1418
    %1596 = vmatprep.subr.mxu0 %v1415
    %1597 = vmatpush2.msra.mxu0 %v1414
    %1598 = vmatprep.subr.mxu0 %v1411
    %1599 = vmatpush2.msra.mxu0 %v1410
    %1600 = vmatprep.subr.mxu0 %v1407
    %1601 = vmatpush2.msra.mxu0 %v1406
    %1602 = vmatprep.subr.mxu0 %v1403
    %1603 = vmatpush2.msra.mxu0 %v1402
    %1604 = vmatprep.subr.mxu0 %v1399
    %1605 = vmatpush2.msra.mxu0 %v1398
    %1606 = vmatprep.subr.mxu0 %v1395
    %1607 = vmatpush2.msra.mxu0 %v1394
    %1608 = vmatprep.subr.mxu0 %v1391
    %1609 = vmatpush2.msra.mxu0 %v1390
    %1610 = vmatprep.subr.mxu0 %v1387
    %1611 = vmatpush2.msra.mxu0 %v1386
    %1612 = vmatprep.subr.mxu0 %v1383
    %1613 = vmatpush2.msra.mxu0 %v1382
    %1614 = vmatprep.subr.mxu0 %v1379
    %1615 = vmatpush2.msra.mxu0 %v1378
    %1616 = vmatprep.subr.mxu0 %v1375
    %1617 = vmatpush2.msra.mxu0 %v1374
    %1618 = vmatprep.subr.mxu0 %v1371
    %1619 = vmatpush2.msra.mxu0 %v1370
    %1620 = vmatprep.subr.mxu0 %v1367
    %1621 = vmatpush2.msra.mxu0 %v1366
    %1622 = vmatprep.mubr.f32.mxu0 %v57
    %1623 = vmatmul.mubr.f32.gmra.mxu0 %v56
    %v1624 = vpop.f32.mrf.mxu0
    %v1625 = vadd.f32 0.0, %v1624
    %v1626 = vpop.f32.mrf.mxu0
    %v1627 = vadd.f32 0.0, %v1626
    %1628 = vmatprep.mubr.f32.mxu0 %v61
    %1629 = vmatmul.mubr.f32.gmra.mxu0 %v60
    %v1630 = vpop.f32.mrf.mxu0
    %v1631 = vadd.f32 0.0, %v1630
    %v1632 = vpop.f32.mrf.mxu0
    %v1633 = vadd.f32 0.0, %v1632
    %1634 = vmatprep.mubr.f32.mxu0 %v65
    %1635 = vmatmul.mubr.f32.gmra.mxu0 %v64
    %v1636 = vpop.f32.mrf.mxu0
    %v1637 = vadd.f32 0.0, %v1636
    %v1638 = vpop.f32.mrf.mxu0
    %v1639 = vadd.f32 0.0, %v1638
    %1640 = vmatprep.mubr.f32.mxu0 %v69
    %1641 = vmatmul.mubr.f32.gmra.mxu0 %v68
    %v1642 = vpop.f32.mrf.mxu0
    %v1643 = vadd.f32 0.0, %v1642
    %v1644 = vpop.f32.mrf.mxu0
    %v1645 = vadd.f32 0.0, %v1644
    %1646 = vdwg.mxu0
    %1647 = vmatprep.subr.mxu0 %v1491
    %1648 = vmatpush1.msra.mxu0 %v1490
    %1649 = vmatprep.subr.mxu0 %v1487
    %1650 = vmatpush1.msra.mxu0 %v1486
    %1651 = vmatprep.subr.mxu0 %v1483
    %1652 = vmatpush1.msra.mxu0 %v1482
    %1653 = vmatprep.subr.mxu0 %v1479
    %1654 = vmatpush1.msra.mxu0 %v1478
    %1655 = vmatprep.subr.mxu0 %v1475
    %1656 = vmatpush1.msra.mxu0 %v1474
    %1657 = vmatprep.subr.mxu0 %v1471
    %1658 = vmatpush1.msra.mxu0 %v1470
    %1659 = vmatprep.subr.mxu0 %v1467
    %1660 = vmatpush1.msra.mxu0 %v1466
    %1661 = vmatprep.subr.mxu0 %v1463
    %1662 = vmatpush1.msra.mxu0 %v1462
    %1663 = vmatprep.subr.mxu0 %v1459
    %1664 = vmatpush1.msra.mxu0 %v1458
    %1665 = vmatprep.subr.mxu0 %v1455
    %1666 = vmatpush1.msra.mxu0 %v1454
    %1667 = vmatprep.subr.mxu0 %v1451
    %1668 = vmatpush1.msra.mxu0 %v1450
    %1669 = vmatprep.subr.mxu0 %v1447
    %1670 = vmatpush1.msra.mxu0 %v1446
    %1671 = vmatprep.subr.mxu0 %v1443
    %1672 = vmatpush1.msra.mxu0 %v1442
    %1673 = vmatprep.subr.mxu0 %v1439
    %1674 = vmatpush1.msra.mxu0 %v1438
    %1675 = vmatprep.subr.mxu0 %v1435
    %1676 = vmatpush1.msra.mxu0 %v1434
    %1677 = vmatprep.subr.mxu0 %v1431
    %1678 = vmatpush1.msra.mxu0 %v1430
    %1679 = vmatprep.subr.mxu0 %v1555
    %1680 = vmatpush2.msra.mxu0 %v1554
    %1681 = vmatprep.subr.mxu0 %v1551
    %1682 = vmatpush2.msra.mxu0 %v1550
    %1683 = vmatprep.subr.mxu0 %v1547
    %1684 = vmatpush2.msra.mxu0 %v1546
    %1685 = vmatprep.subr.mxu0 %v1543
    %1686 = vmatpush2.msra.mxu0 %v1542
    %1687 = vmatprep.subr.mxu0 %v1539
    %1688 = vmatpush2.msra.mxu0 %v1538
    %1689 = vmatprep.subr.mxu0 %v1535
    %1690 = vmatpush2.msra.mxu0 %v1534
    %1691 = vmatprep.subr.mxu0 %v1531
    %1692 = vmatpush2.msra.mxu0 %v1530
    %1693 = vmatprep.subr.mxu0 %v1527
    %1694 = vmatpush2.msra.mxu0 %v1526
    %1695 = vmatprep.subr.mxu0 %v1523
    %1696 = vmatpush2.msra.mxu0 %v1522
    %1697 = vmatprep.subr.mxu0 %v1519
    %1698 = vmatpush2.msra.mxu0 %v1518
    %1699 = vmatprep.subr.mxu0 %v1515
    %1700 = vmatpush2.msra.mxu0 %v1514
    %1701 = vmatprep.subr.mxu0 %v1511
    %1702 = vmatpush2.msra.mxu0 %v1510
    %1703 = vmatprep.subr.mxu0 %v1507
    %1704 = vmatpush2.msra.mxu0 %v1506
    %1705 = vmatprep.subr.mxu0 %v1503
    %1706 = vmatpush2.msra.mxu0 %v1502
    %1707 = vmatprep.subr.mxu0 %v1499
    %1708 = vmatpush2.msra.mxu0 %v1498
    %1709 = vmatprep.subr.mxu0 %v1495
    %1710 = vmatpush2.msra.mxu0 %v1494
    %1711 = vmatprep.mubr.f32.mxu0 %v59
    %1712 = vmatmul.mubr.f32.gmra.mxu0 %v58
    %v1713 = vpop.f32.mrf.mxu0
    %v1714 = vadd.f32 %v1625, %v1713
    %v1715 = vpop.f32.mrf.mxu0
    %v1716 = vadd.f32 %v1627, %v1715
    %1717 = vmatprep.mubr.f32.mxu0 %v63
    %1718 = vmatmul.mubr.f32.gmra.mxu0 %v62
    %v1719 = vpop.f32.mrf.mxu0
    %v1720 = vadd.f32 %v1631, %v1719
    %v1721 = vpop.f32.mrf.mxu0
    %v1722 = vadd.f32 %v1633, %v1721
    %1723 = vmatprep.mubr.f32.mxu0 %v67
    %1724 = vmatmul.mubr.f32.gmra.mxu0 %v66
    %v1725 = vpop.f32.mrf.mxu0
    %v1726 = vadd.f32 %v1637, %v1725
    %v1727 = vpop.f32.mrf.mxu0
    %v1728 = vadd.f32 %v1639, %v1727
    %1729 = vmatprep.mubr.f32.mxu0 %v71
    %1730 = vmatmul.mubr.f32.gmra.mxu0 %v70
    %v1731 = vpop.f32.mrf.mxu0
    %v1732 = vadd.f32 %v1643, %v1731
    %v1733 = vpop.f32.mrf.mxu0
    %v1734 = vadd.f32 %v1645, %v1733
    %1735 = vdwg.mxu0
    %1736 = vmatprep.subr.mxu0 %v1365
    %1737 = vmatpush1.msra.mxu0 %v1364
    %1738 = vmatprep.subr.mxu0 %v1361
    %1739 = vmatpush1.msra.mxu0 %v1360
    %1740 = vmatprep.subr.mxu0 %v1357
    %1741 = vmatpush1.msra.mxu0 %v1356
    %1742 = vmatprep.subr.mxu0 %v1353
    %1743 = vmatpush1.msra.mxu0 %v1352
    %1744 = vmatprep.subr.mxu0 %v1349
    %1745 = vmatpush1.msra.mxu0 %v1348
    %1746 = vmatprep.subr.mxu0 %v1345
    %1747 = vmatpush1.msra.mxu0 %v1344
    %1748 = vmatprep.subr.mxu0 %v1341
    %1749 = vmatpush1.msra.mxu0 %v1340
    %1750 = vmatprep.subr.mxu0 %v1337
    %1751 = vmatpush1.msra.mxu0 %v1336
    %1752 = vmatprep.subr.mxu0 %v1333
    %1753 = vmatpush1.msra.mxu0 %v1332
    %1754 = vmatprep.subr.mxu0 %v1329
    %1755 = vmatpush1.msra.mxu0 %v1328
    %1756 = vmatprep.subr.mxu0 %v1325
    %1757 = vmatpush1.msra.mxu0 %v1324
    %1758 = vmatprep.subr.mxu0 %v1321
    %1759 = vmatpush1.msra.mxu0 %v1320
    %1760 = vmatprep.subr.mxu0 %v1317
    %1761 = vmatpush1.msra.mxu0 %v1316
    %1762 = vmatprep.subr.mxu0 %v1313
    %1763 = vmatpush1.msra.mxu0 %v1312
    %1764 = vmatprep.subr.mxu0 %v1309
    %1765 = vmatpush1.msra.mxu0 %v1308
    %1766 = vmatprep.subr.mxu0 %v1305
    %1767 = vmatpush1.msra.mxu0 %v1304
    %1768 = vmatprep.subr.mxu0 %v1429
    %1769 = vmatpush2.msra.mxu0 %v1428
    %1770 = vmatprep.subr.mxu0 %v1425
    %1771 = vmatpush2.msra.mxu0 %v1424
    %1772 = vmatprep.subr.mxu0 %v1421
    %1773 = vmatpush2.msra.mxu0 %v1420
    %1774 = vmatprep.subr.mxu0 %v1417
    %1775 = vmatpush2.msra.mxu0 %v1416
    %1776 = vmatprep.subr.mxu0 %v1413
    %1777 = vmatpush2.msra.mxu0 %v1412
    %1778 = vmatprep.subr.mxu0 %v1409
    %1779 = vmatpush2.msra.mxu0 %v1408
    %1780 = vmatprep.subr.mxu0 %v1405
    %1781 = vmatpush2.msra.mxu0 %v1404
    %1782 = vmatprep.subr.mxu0 %v1401
    %1783 = vmatpush2.msra.mxu0 %v1400
    %1784 = vmatprep.subr.mxu0 %v1397
    %1785 = vmatpush2.msra.mxu0 %v1396
    %1786 = vmatprep.subr.mxu0 %v1393
    %1787 = vmatpush2.msra.mxu0 %v1392
    %1788 = vmatprep.subr.mxu0 %v1389
    %1789 = vmatpush2.msra.mxu0 %v1388
    %1790 = vmatprep.subr.mxu0 %v1385
    %1791 = vmatpush2.msra.mxu0 %v1384
    %1792 = vmatprep.subr.mxu0 %v1381
    %1793 = vmatpush2.msra.mxu0 %v1380
    %1794 = vmatprep.subr.mxu0 %v1377
    %1795 = vmatpush2.msra.mxu0 %v1376
    %1796 = vmatprep.subr.mxu0 %v1373
    %1797 = vmatpush2.msra.mxu0 %v1372
    %1798 = vmatprep.subr.mxu0 %v1369
    %1799 = vmatpush2.msra.mxu0 %v1368
    %1800 = vmatprep.mubr.f32.mxu0 %v57
    %1801 = vmatmul.mubr.f32.gmra.mxu0 %v56
    %v1802 = vpop.f32.mrf.mxu0
    %v1803 = vadd.f32 0.0, %v1802
    %v1804 = vpop.f32.mrf.mxu0
    %v1805 = vadd.f32 0.0, %v1804
    %1806 = vmatprep.mubr.f32.mxu0 %v61
    %1807 = vmatmul.mubr.f32.gmra.mxu0 %v60
    %v1808 = vpop.f32.mrf.mxu0
    %v1809 = vadd.f32 0.0, %v1808
    %v1810 = vpop.f32.mrf.mxu0
    %v1811 = vadd.f32 0.0, %v1810
    %1812 = vmatprep.mubr.f32.mxu0 %v65
    %1813 = vmatmul.mubr.f32.gmra.mxu0 %v64
    %v1814 = vpop.f32.mrf.mxu0
    %v1815 = vadd.f32 0.0, %v1814
    %v1816 = vpop.f32.mrf.mxu0
    %v1817 = vadd.f32 0.0, %v1816
    %1818 = vmatprep.mubr.f32.mxu0 %v69
    %1819 = vmatmul.mubr.f32.gmra.mxu0 %v68
    %v1820 = vpop.f32.mrf.mxu0
    %v1821 = vadd.f32 0.0, %v1820
    %v1822 = vpop.f32.mrf.mxu0
    %v1823 = vadd.f32 0.0, %v1822
    %1824 = vdwg.mxu0
    %1825 = vmatprep.subr.mxu0 %v1493
    %1826 = vmatpush1.msra.mxu0 %v1492
    %1827 = vmatprep.subr.mxu0 %v1489
    %1828 = vmatpush1.msra.mxu0 %v1488
    %1829 = vmatprep.subr.mxu0 %v1485
    %1830 = vmatpush1.msra.mxu0 %v1484
    %1831 = vmatprep.subr.mxu0 %v1481
    %1832 = vmatpush1.msra.mxu0 %v1480
    %1833 = vmatprep.subr.mxu0 %v1477
    %1834 = vmatpush1.msra.mxu0 %v1476
    %1835 = vmatprep.subr.mxu0 %v1473
    %1836 = vmatpush1.msra.mxu0 %v1472
    %1837 = vmatprep.subr.mxu0 %v1469
    %1838 = vmatpush1.msra.mxu0 %v1468
    %1839 = vmatprep.subr.mxu0 %v1465
    %1840 = vmatpush1.msra.mxu0 %v1464
    %1841 = vmatprep.subr.mxu0 %v1461
    %1842 = vmatpush1.msra.mxu0 %v1460
    %1843 = vmatprep.subr.mxu0 %v1457
    %1844 = vmatpush1.msra.mxu0 %v1456
    %1845 = vmatprep.subr.mxu0 %v1453
    %1846 = vmatpush1.msra.mxu0 %v1452
    %1847 = vmatprep.subr.mxu0 %v1449
    %1848 = vmatpush1.msra.mxu0 %v1448
    %1849 = vmatprep.subr.mxu0 %v1445
    %1850 = vmatpush1.msra.mxu0 %v1444
    %1851 = vmatprep.subr.mxu0 %v1441
    %1852 = vmatpush1.msra.mxu0 %v1440
    %1853 = vmatprep.subr.mxu0 %v1437
    %1854 = vmatpush1.msra.mxu0 %v1436
    %1855 = vmatprep.subr.mxu0 %v1433
    %1856 = vmatpush1.msra.mxu0 %v1432
    %1857 = vmatprep.subr.mxu0 %v1557
    %1858 = vmatpush2.msra.mxu0 %v1556
    %1859 = vmatprep.subr.mxu0 %v1553
    %1860 = vmatpush2.msra.mxu0 %v1552
    %1861 = vmatprep.subr.mxu0 %v1549
    %1862 = vmatpush2.msra.mxu0 %v1548
    %1863 = vmatprep.subr.mxu0 %v1545
    %1864 = vmatpush2.msra.mxu0 %v1544
    %1865 = vmatprep.subr.mxu0 %v1541
    %1866 = vmatpush2.msra.mxu0 %v1540
    %1867 = vmatprep.subr.mxu0 %v1537
    %1868 = vmatpush2.msra.mxu0 %v1536
    %1869 = vmatprep.subr.mxu0 %v1533
    %1870 = vmatpush2.msra.mxu0 %v1532
    %1871 = vmatprep.subr.mxu0 %v1529
    %1872 = vmatpush2.msra.mxu0 %v1528
    %1873 = vmatprep.subr.mxu0 %v1525
    %1874 = vmatpush2.msra.mxu0 %v1524
    %1875 = vmatprep.subr.mxu0 %v1521
    %1876 = vmatpush2.msra.mxu0 %v1520
    %1877 = vmatprep.subr.mxu0 %v1517
    %1878 = vmatpush2.msra.mxu0 %v1516
    %1879 = vmatprep.subr.mxu0 %v1513
    %1880 = vmatpush2.msra.mxu0 %v1512
    %1881 = vmatprep.subr.mxu0 %v1509
    %1882 = vmatpush2.msra.mxu0 %v1508
    %1883 = vmatprep.subr.mxu0 %v1505
    %1884 = vmatpush2.msra.mxu0 %v1504
    %1885 = vmatprep.subr.mxu0 %v1501
    %1886 = vmatpush2.msra.mxu0 %v1500
    %1887 = vmatprep.subr.mxu0 %v1497
    %1888 = vmatpush2.msra.mxu0 %v1496
    %1889 = vmatprep.mubr.f32.mxu0 %v59
    %1890 = vmatmul.mubr.f32.gmra.mxu0 %v58
    %v1891 = vpop.f32.mrf.mxu0
    %v1892 = vadd.f32 %v1803, %v1891
    %v1893 = vpop.f32.mrf.mxu0
    %v1894 = vadd.f32 %v1805, %v1893
    %1895 = vmatprep.mubr.f32.mxu0 %v63
    %1896 = vmatmul.mubr.f32.gmra.mxu0 %v62
    %v1897 = vpop.f32.mrf.mxu0
    %v1898 = vadd.f32 %v1809, %v1897
    %v1899 = vpop.f32.mrf.mxu0
    %v1900 = vadd.f32 %v1811, %v1899
    %1901 = vmatprep.mubr.f32.mxu0 %v67
    %1902 = vmatmul.mubr.f32.gmra.mxu0 %v66
    %v1903 = vpop.f32.mrf.mxu0
    %v1904 = vadd.f32 %v1815, %v1903
    %v1905 = vpop.f32.mrf.mxu0
    %v1906 = vadd.f32 %v1817, %v1905
    %1907 = vmatprep.mubr.f32.mxu0 %v71
    %1908 = vmatmul.mubr.f32.gmra.mxu0 %v70
    %v1909 = vpop.f32.mrf.mxu0
    %v1910 = vadd.f32 %v1821, %v1909
    %v1911 = vpop.f32.mrf.mxu0
    %v1912 = vadd.f32 %v1823, %v1911
    %1913 = vdwg.mxu0
    %vm1930 = vcmask 1040384
    %v1931 = vrot.slane %v488, 7
    %v1932 = vrot.slane %v490, 7
    %v1933 = vrot.slane %v666, 7
    %v1934 = vrot.slane %v668, 7
    %v1935 = vrot.slane %v494, 7
    %v1936 = vsel %vm1930, %v1931, %v1935
    %v1937 = vrot.slane %v496, 7
    %v1938 = vsel %vm1930, %v1932, %v1937
    %v1939 = vrot.slane %v672, 7
    %v1940 = vsel %vm1930, %v1933, %v1939
    %v1941 = vrot.slane %v674, 7
    %v1942 = vsel %vm1930, %v1934, %v1941
    %v1943 = vrot.slane %v500, 7
    %v1944 = vrot.slane %v502, 7
    %v1945 = vrot.slane %v678, 7
    %v1946 = vrot.slane %v680, 7
    %v1947 = vrot.slane %v506, 7
    %v1948 = vsel %vm1930, %v1943, %v1947
    %v1949 = vrot.slane %v508, 7
    %v1950 = vsel %vm1930, %v1944, %v1949
    %v1951 = vrot.slane %v684, 7
    %v1952 = vsel %vm1930, %v1945, %v1951
    %v1953 = vrot.slane %v686, 7
    %v1954 = vsel %vm1930, %v1946, %v1953
    %v1971 = vsel %vm1930, 0.0, %v1931
    %v1972 = vsel %vm1930, 0.0, %v1932
    %v1973 = vsel %vm1930, 0.0, %v1933
    %v1974 = vsel %vm1930, 0.0, %v1934
    %v1975 = vsel %vm1930, 0.0, %v1943
    %v1976 = vsel %vm1930, 0.0, %v1944
    %v1977 = vsel %vm1930, 0.0, %v1945
    %v1978 = vsel %vm1930, 0.0, %v1946
    %vm1995 = vcmask 1046528
    %v1996 = vrot.slane %v1714, 1
    %v1997 = vrot.slane %v1720, 1
    %v1998 = vsel %vm1995, %v1996, %v1997
    %v1999 = vrot.slane %v1716, 1
    %v2000 = vrot.slane %v1722, 1
    %v2001 = vsel %vm1995, %v1999, %v2000
    %v2002 = vrot.slane %v1892, 1
    %v2003 = vrot.slane %v1898, 1
    %v2004 = vsel %vm1995, %v2002, %v2003
    %v2005 = vrot.slane %v1894, 1
    %v2006 = vrot.slane %v1900, 1
    %v2007 = vsel %vm1995, %v2005, %v2006
    %v2008 = vrot.slane %v1726, 1
    %v2009 = vrot.slane %v1732, 1
    %v2010 = vsel %vm1995, %v2008, %v2009
    %v2011 = vrot.slane %v1728, 1
    %v2012 = vrot.slane %v1734, 1
    %v2013 = vsel %vm1995, %v2011, %v2012
    %v2014 = vrot.slane %v1904, 1
    %v2015 = vrot.slane %v1910, 1
    %v2016 = vsel %vm1995, %v2014, %v2015
    %v2017 = vrot.slane %v1906, 1
    %v2018 = vrot.slane %v1912, 1
    %v2019 = vsel %vm1995, %v2017, %v2018
    %v2036 = vsel %vm1995, %v1997, 0.0
    %v2037 = vsel %vm1995, %v2000, 0.0
    %v2038 = vsel %vm1995, %v2003, 0.0
    %v2039 = vsel %vm1995, %v2006, 0.0
    %v2040 = vsel %vm1995, %v2009, 0.0
    %v2041 = vsel %vm1995, %v2012, 0.0
    %v2042 = vsel %vm1995, %v2015, 0.0
    %v2043 = vsel %vm1995, %v2018, 0.0
    %v2044 = vadd.f32 %v1971, %v1998
    %v2045 = vadd.f32 %v1972, %v2001
    %v2046 = vadd.f32 %v1973, %v2004
    %v2047 = vadd.f32 %v1974, %v2007
    %v2048 = vadd.f32 %v1936, %v2036
    %v2049 = vadd.f32 %v1938, %v2037
    %v2050 = vadd.f32 %v1940, %v2038
    %v2051 = vadd.f32 %v1942, %v2039
    %v2052 = vadd.f32 %v1975, %v2010
    %v2053 = vadd.f32 %v1976, %v2013
    %v2054 = vadd.f32 %v1977, %v2016
    %v2055 = vadd.f32 %v1978, %v2019
    %v2056 = vadd.f32 %v1948, %v2040
    %v2057 = vadd.f32 %v1950, %v2041
    %v2058 = vadd.f32 %v1952, %v2042
    %v2059 = vadd.f32 %v1954, %v2043
    %v2060 = vadd.f32 %v2044, %v1101
    %v2061 = vadd.f32 %v2045, %v1103
    %v2062 = vadd.f32 %v2046, %v1279
    %v2063 = vadd.f32 %v2047, %v1281
    %v2064 = vadd.f32 %v2048, %v1107
    %v2065 = vadd.f32 %v2049, %v1109
    %v2066 = vadd.f32 %v2050, %v1285
    %v2067 = vadd.f32 %v2051, %v1287
    %v2068 = vadd.f32 %v2052, %v1113
    %v2069 = vadd.f32 %v2053, %v1115
    %v2070 = vadd.f32 %v2054, %v1291
    %v2071 = vadd.f32 %v2055, %v1293
    %v2072 = vadd.f32 %v2056, %v1119
    %v2073 = vadd.f32 %v2057, %v1121
    %v2074 = vadd.f32 %v2058, %v1297
    %v2075 = vadd.f32 %v2059, %v1299
    %v2076 = vlaneseq
    %v2077 = vshrl.u32 %v2076, 7
    %v2078 = vsub.s32 0, %v2077
    %v2079 = vrot.slane %v72, %v2078
    %v2080 = vlaneseq
    %v2081 = vshrl.u32 %v2080, 7
    %v2082 = vsub.s32 0, %v2081
    %v2083 = vrot.slane %v73, %v2082
    %v2084 = vlaneseq
    %v2085 = vshrl.u32 %v2084, 7
    %v2086 = vsub.s32 0, %v2085
    %v2087 = vrot.slane %v74, %v2086
    %v2088 = vlaneseq
    %v2089 = vshrl.u32 %v2088, 7
    %v2090 = vsub.s32 0, %v2089
    %v2091 = vrot.slane %v75, %v2090
    %v2092 = vadd.f32 %v2060, %v2079
    %v2093 = vadd.f32 %v2061, %v2083
    %v2094 = vadd.f32 %v2062, %v2087
    %v2095 = vadd.f32 %v2063, %v2091
    %v2096 = vadd.f32 %v2064, %v2079
    %v2097 = vadd.f32 %v2065, %v2083
    %v2098 = vadd.f32 %v2066, %v2087
    %v2099 = vadd.f32 %v2067, %v2091
    %v2100 = vadd.f32 %v2068, %v2079
    %v2101 = vadd.f32 %v2069, %v2083
    %v2102 = vadd.f32 %v2070, %v2087
    %v2103 = vadd.f32 %v2071, %v2091
    %v2104 = vadd.f32 %v2072, %v2079
    %v2105 = vadd.f32 %v2073, %v2083
    %v2106 = vadd.f32 %v2074, %v2087
    %v2107 = vadd.f32 %v2075, %v2091
    %v2108 = vmax.f32 %v2092, 0.0
    %v2109 = vmax.f32 %v2093, 0.0
    %v2110 = vmax.f32 %v2094, 0.0
    %v2111 = vmax.f32 %v2095, 0.0
    %v2112 = vmax.f32 %v2096, 0.0
    %v2113 = vmax.f32 %v2097, 0.0
    %v2114 = vmax.f32 %v2098, 0.0
    %v2115 = vmax.f32 %v2099, 0.0
    %v2116 = vmax.f32 %v2100, 0.0
    %v2117 = vmax.f32 %v2101, 0.0
    %v2118 = vmax.f32 %v2102, 0.0
    %v2119 = vmax.f32 %v2103, 0.0
    %v2120 = vmax.f32 %v2104, 0.0
    %v2121 = vmax.f32 %v2105, 0.0
    %v2122 = vmax.f32 %v2106, 0.0
    %v2123 = vmax.f32 %v2107, 0.0
    %v2124 = vld [vmem:[#allocation4] sm:$0xff]
    %v2125 = vld [vmem:[#allocation4 + $0x8] sm:$0xff]
    %v2126 = vld [vmem:[#allocation4 + $0x10] sm:$0xff]
    %v2127 = vld [vmem:[#allocation4 + $0x18] sm:$0xff]
    %v2128 = vld [vmem:[#allocation4 + $0x20] sm:$0xff]
    %v2129 = vld [vmem:[#allocation4 + $0x28] sm:$0xff]
    %v2130 = vld [vmem:[#allocation4 + $0x30] sm:$0xff]
    %v2131 = vld [vmem:[#allocation4 + $0x38] sm:$0xff]
    %v2132 = vld [vmem:[#allocation4 + $0x40] sm:$0xff]
    %v2133 = vld [vmem:[#allocation4 + $0x48] sm:$0xff]
    %v2134 = vld [vmem:[#allocation4 + $0x50] sm:$0xff]
    %v2135 = vld [vmem:[#allocation4 + $0x58] sm:$0xff]
    %v2136 = vld [vmem:[#allocation4 + $0x60] sm:$0xff]
    %v2137 = vld [vmem:[#allocation4 + $0x68] sm:$0xff]
    %v2138 = vld [vmem:[#allocation4 + $0x70] sm:$0xff]
    %v2139 = vld [vmem:[#allocation4 + $0x78] sm:$0xff]
    %v2140 = vld [vmem:[#allocation4 + $0x80] sm:$0xff]
    %v2141 = vld [vmem:[#allocation4 + $0x88] sm:$0xff]
    %v2142 = vld [vmem:[#allocation4 + $0x90] sm:$0xff]
    %v2143 = vld [vmem:[#allocation4 + $0x98] sm:$0xff]
    %v2144 = vld [vmem:[#allocation4 + $0xa0] sm:$0xff]
    %v2145 = vld [vmem:[#allocation4 + $0xa8] sm:$0xff]
    %v2146 = vld [vmem:[#allocation4 + $0xb0] sm:$0xff]
    %v2147 = vld [vmem:[#allocation4 + $0xb8] sm:$0xff]
    %v2148 = vld [vmem:[#allocation4 + $0xc0] sm:$0xff]
    %v2149 = vld [vmem:[#allocation4 + $0xc8] sm:$0xff]
    %v2150 = vld [vmem:[#allocation4 + $0xd0] sm:$0xff]
    %v2151 = vld [vmem:[#allocation4 + $0xd8] sm:$0xff]
    %v2152 = vld [vmem:[#allocation4 + $0xe0] sm:$0xff]
    %v2153 = vld [vmem:[#allocation4 + $0xe8] sm:$0xff]
    %v2154 = vld [vmem:[#allocation4 + $0xf0] sm:$0xff]
    %v2155 = vld [vmem:[#allocation4 + $0xf8] sm:$0xff]
    %v2156 = vld [vmem:[#allocation4 + $0x100] sm:$0xff]
    %v2157 = vld [vmem:[#allocation4 + $0x108] sm:$0xff]
    %v2158 = vld [vmem:[#allocation4 + $0x110] sm:$0xff]
    %v2159 = vld [vmem:[#allocation4 + $0x118] sm:$0xff]
    %v2160 = vld [vmem:[#allocation4 + $0x120] sm:$0xff]
    %v2161 = vld [vmem:[#allocation4 + $0x128] sm:$0xff]
    %v2162 = vld [vmem:[#allocation4 + $0x130] sm:$0xff]
    %v2163 = vld [vmem:[#allocation4 + $0x138] sm:$0xff]
    %v2164 = vld [vmem:[#allocation4 + $0x140] sm:$0xff]
    %v2165 = vld [vmem:[#allocation4 + $0x148] sm:$0xff]
    %v2166 = vld [vmem:[#allocation4 + $0x150] sm:$0xff]
    %v2167 = vld [vmem:[#allocation4 + $0x158] sm:$0xff]
    %v2168 = vld [vmem:[#allocation4 + $0x160] sm:$0xff]
    %v2169 = vld [vmem:[#allocation4 + $0x168] sm:$0xff]
    %v2170 = vld [vmem:[#allocation4 + $0x170] sm:$0xff]
    %v2171 = vld [vmem:[#allocation4 + $0x178] sm:$0xff]
    %v2172 = vld [vmem:[#allocation4 + $0x180] sm:$0xff]
    %v2173 = vld [vmem:[#allocation4 + $0x188] sm:$0xff]
    %v2174 = vld [vmem:[#allocation4 + $0x190] sm:$0xff]
    %v2175 = vld [vmem:[#allocation4 + $0x198] sm:$0xff]
    %v2176 = vld [vmem:[#allocation4 + $0x1a0] sm:$0xff]
    %v2177 = vld [vmem:[#allocation4 + $0x1a8] sm:$0xff]
    %v2178 = vld [vmem:[#allocation4 + $0x1b0] sm:$0xff]
    %v2179 = vld [vmem:[#allocation4 + $0x1b8] sm:$0xff]
    %v2180 = vld [vmem:[#allocation4 + $0x1c0] sm:$0xff]
    %v2181 = vld [vmem:[#allocation4 + $0x1c8] sm:$0xff]
    %v2182 = vld [vmem:[#allocation4 + $0x1d0] sm:$0xff]
    %v2183 = vld [vmem:[#allocation4 + $0x1d8] sm:$0xff]
    %v2184 = vld [vmem:[#allocation4 + $0x1e0] sm:$0xff]
    %v2185 = vld [vmem:[#allocation4 + $0x1e8] sm:$0xff]
    %v2186 = vld [vmem:[#allocation4 + $0x1f0] sm:$0xff]
    %v2187 = vld [vmem:[#allocation4 + $0x1f8] sm:$0xff]
    %v2188 = vld [vmem:[#allocation4 + $0x200] sm:$0xff]
    %v2189 = vld [vmem:[#allocation4 + $0x208] sm:$0xff]
    %v2190 = vld [vmem:[#allocation4 + $0x210] sm:$0xff]
    %v2191 = vld [vmem:[#allocation4 + $0x218] sm:$0xff]
    %v2192 = vld [vmem:[#allocation4 + $0x220] sm:$0xff]
    %v2193 = vld [vmem:[#allocation4 + $0x228] sm:$0xff]
    %v2194 = vld [vmem:[#allocation4 + $0x230] sm:$0xff]
    %v2195 = vld [vmem:[#allocation4 + $0x238] sm:$0xff]
    %v2196 = vld [vmem:[#allocation4 + $0x240] sm:$0xff]
    %v2197 = vld [vmem:[#allocation4 + $0x248] sm:$0xff]
    %v2198 = vld [vmem:[#allocation4 + $0x250] sm:$0xff]
    %v2199 = vld [vmem:[#allocation4 + $0x258] sm:$0xff]
    %v2200 = vld [vmem:[#allocation4 + $0x260] sm:$0xff]
    %v2201 = vld [vmem:[#allocation4 + $0x268] sm:$0xff]
    %v2202 = vld [vmem:[#allocation4 + $0x270] sm:$0xff]
    %v2203 = vld [vmem:[#allocation4 + $0x278] sm:$0xff]
    %v2204 = vld [vmem:[#allocation4 + $0x280] sm:$0xff]
    %v2205 = vld [vmem:[#allocation4 + $0x288] sm:$0xff]
    %v2206 = vld [vmem:[#allocation4 + $0x290] sm:$0xff]
    %v2207 = vld [vmem:[#allocation4 + $0x298] sm:$0xff]
    %v2208 = vld [vmem:[#allocation4 + $0x2a0] sm:$0xff]
    %v2209 = vld [vmem:[#allocation4 + $0x2a8] sm:$0xff]
    %v2210 = vld [vmem:[#allocation4 + $0x2b0] sm:$0xff]
    %v2211 = vld [vmem:[#allocation4 + $0x2b8] sm:$0xff]
    %v2212 = vld [vmem:[#allocation4 + $0x2c0] sm:$0xff]
    %v2213 = vld [vmem:[#allocation4 + $0x2c8] sm:$0xff]
    %v2214 = vld [vmem:[#allocation4 + $0x2d0] sm:$0xff]
    %v2215 = vld [vmem:[#allocation4 + $0x2d8] sm:$0xff]
    %v2216 = vld [vmem:[#allocation4 + $0x2e0] sm:$0xff]
    %v2217 = vld [vmem:[#allocation4 + $0x2e8] sm:$0xff]
    %v2218 = vld [vmem:[#allocation4 + $0x2f0] sm:$0xff]
    %v2219 = vld [vmem:[#allocation4 + $0x2f8] sm:$0xff]
    %v2220 = vld [vmem:[#allocation4 + $0x300] sm:$0xff]
    %v2221 = vld [vmem:[#allocation4 + $0x308] sm:$0xff]
    %v2222 = vld [vmem:[#allocation4 + $0x310] sm:$0xff]
    %v2223 = vld [vmem:[#allocation4 + $0x318] sm:$0xff]
    %v2224 = vld [vmem:[#allocation4 + $0x320] sm:$0xff]
    %v2225 = vld [vmem:[#allocation4 + $0x328] sm:$0xff]
    %v2226 = vld [vmem:[#allocation4 + $0x330] sm:$0xff]
    %v2227 = vld [vmem:[#allocation4 + $0x338] sm:$0xff]
    %v2228 = vld [vmem:[#allocation4 + $0x340] sm:$0xff]
    %v2229 = vld [vmem:[#allocation4 + $0x348] sm:$0xff]
    %v2230 = vld [vmem:[#allocation4 + $0x350] sm:$0xff]
    %v2231 = vld [vmem:[#allocation4 + $0x358] sm:$0xff]
    %v2232 = vld [vmem:[#allocation4 + $0x360] sm:$0xff]
    %v2233 = vld [vmem:[#allocation4 + $0x368] sm:$0xff]
    %v2234 = vld [vmem:[#allocation4 + $0x370] sm:$0xff]
    %v2235 = vld [vmem:[#allocation4 + $0x378] sm:$0xff]
    %v2236 = vld [vmem:[#allocation4 + $0x380] sm:$0xff]
    %v2237 = vld [vmem:[#allocation4 + $0x388] sm:$0xff]
    %v2238 = vld [vmem:[#allocation4 + $0x390] sm:$0xff]
    %v2239 = vld [vmem:[#allocation4 + $0x398] sm:$0xff]
    %v2240 = vld [vmem:[#allocation4 + $0x3a0] sm:$0xff]
    %v2241 = vld [vmem:[#allocation4 + $0x3a8] sm:$0xff]
    %v2242 = vld [vmem:[#allocation4 + $0x3b0] sm:$0xff]
    %v2243 = vld [vmem:[#allocation4 + $0x3b8] sm:$0xff]
    %v2244 = vld [vmem:[#allocation4 + $0x3c0] sm:$0xff]
    %v2245 = vld [vmem:[#allocation4 + $0x3c8] sm:$0xff]
    %v2246 = vld [vmem:[#allocation4 + $0x3d0] sm:$0xff]
    %v2247 = vld [vmem:[#allocation4 + $0x3d8] sm:$0xff]
    %v2248 = vld [vmem:[#allocation4 + $0x3e0] sm:$0xff]
    %v2249 = vld [vmem:[#allocation4 + $0x3e8] sm:$0xff]
    %v2250 = vld [vmem:[#allocation4 + $0x3f0] sm:$0xff]
    %v2251 = vld [vmem:[#allocation4 + $0x3f8] sm:$0xff]
    %v2252 = vld [vmem:[#allocation4 + $0x400] sm:$0xff]
    %v2253 = vld [vmem:[#allocation4 + $0x408] sm:$0xff]
    %v2254 = vld [vmem:[#allocation4 + $0x410] sm:$0xff]
    %v2255 = vld [vmem:[#allocation4 + $0x418] sm:$0xff]
    %v2256 = vld [vmem:[#allocation4 + $0x420] sm:$0xff]
    %v2257 = vld [vmem:[#allocation4 + $0x428] sm:$0xff]
    %v2258 = vld [vmem:[#allocation4 + $0x430] sm:$0xff]
    %v2259 = vld [vmem:[#allocation4 + $0x438] sm:$0xff]
    %v2260 = vld [vmem:[#allocation4 + $0x440] sm:$0xff]
    %v2261 = vld [vmem:[#allocation4 + $0x448] sm:$0xff]
    %v2262 = vld [vmem:[#allocation4 + $0x450] sm:$0xff]
    %v2263 = vld [vmem:[#allocation4 + $0x458] sm:$0xff]
    %v2264 = vld [vmem:[#allocation4 + $0x460] sm:$0xff]
    %v2265 = vld [vmem:[#allocation4 + $0x468] sm:$0xff]
    %v2266 = vld [vmem:[#allocation4 + $0x470] sm:$0xff]
    %v2267 = vld [vmem:[#allocation4 + $0x478] sm:$0xff]
    %v2268 = vld [vmem:[#allocation4 + $0x480] sm:$0xff]
    %v2269 = vld [vmem:[#allocation4 + $0x488] sm:$0xff]
    %v2270 = vld [vmem:[#allocation4 + $0x490] sm:$0xff]
    %v2271 = vld [vmem:[#allocation4 + $0x498] sm:$0xff]
    %v2272 = vld [vmem:[#allocation4 + $0x4a0] sm:$0xff]
    %v2273 = vld [vmem:[#allocation4 + $0x4a8] sm:$0xff]
    %v2274 = vld [vmem:[#allocation4 + $0x4b0] sm:$0xff]
    %v2275 = vld [vmem:[#allocation4 + $0x4b8] sm:$0xff]
    %v2276 = vld [vmem:[#allocation4 + $0x4c0] sm:$0xff]
    %v2277 = vld [vmem:[#allocation4 + $0x4c8] sm:$0xff]
    %v2278 = vld [vmem:[#allocation4 + $0x4d0] sm:$0xff]
    %v2279 = vld [vmem:[#allocation4 + $0x4d8] sm:$0xff]
    %v2280 = vld [vmem:[#allocation4 + $0x4e0] sm:$0xff]
    %v2281 = vld [vmem:[#allocation4 + $0x4e8] sm:$0xff]
    %v2282 = vld [vmem:[#allocation4 + $0x4f0] sm:$0xff]
    %v2283 = vld [vmem:[#allocation4 + $0x4f8] sm:$0xff]
    %v2284 = vld [vmem:[#allocation4 + $0x500] sm:$0xff]
    %v2285 = vld [vmem:[#allocation4 + $0x508] sm:$0xff]
    %v2286 = vld [vmem:[#allocation4 + $0x510] sm:$0xff]
    %v2287 = vld [vmem:[#allocation4 + $0x518] sm:$0xff]
    %v2288 = vld [vmem:[#allocation4 + $0x520] sm:$0xff]
    %v2289 = vld [vmem:[#allocation4 + $0x528] sm:$0xff]
    %v2290 = vld [vmem:[#allocation4 + $0x530] sm:$0xff]
    %v2291 = vld [vmem:[#allocation4 + $0x538] sm:$0xff]
    %v2292 = vld [vmem:[#allocation4 + $0x540] sm:$0xff]
    %v2293 = vld [vmem:[#allocation4 + $0x548] sm:$0xff]
    %v2294 = vld [vmem:[#allocation4 + $0x550] sm:$0xff]
    %v2295 = vld [vmem:[#allocation4 + $0x558] sm:$0xff]
    %v2296 = vld [vmem:[#allocation4 + $0x560] sm:$0xff]
    %v2297 = vld [vmem:[#allocation4 + $0x568] sm:$0xff]
    %v2298 = vld [vmem:[#allocation4 + $0x570] sm:$0xff]
    %v2299 = vld [vmem:[#allocation4 + $0x578] sm:$0xff]
    %v2300 = vld [vmem:[#allocation4 + $0x580] sm:$0xff]
    %v2301 = vld [vmem:[#allocation4 + $0x588] sm:$0xff]
    %v2302 = vld [vmem:[#allocation4 + $0x590] sm:$0xff]
    %v2303 = vld [vmem:[#allocation4 + $0x598] sm:$0xff]
    %v2304 = vld [vmem:[#allocation4 + $0x5a0] sm:$0xff]
    %v2305 = vld [vmem:[#allocation4 + $0x5a8] sm:$0xff]
    %v2306 = vld [vmem:[#allocation4 + $0x5b0] sm:$0xff]
    %v2307 = vld [vmem:[#allocation4 + $0x5b8] sm:$0xff]
    %v2308 = vld [vmem:[#allocation4 + $0x5c0] sm:$0xff]
    %v2309 = vld [vmem:[#allocation4 + $0x5c8] sm:$0xff]
    %v2310 = vld [vmem:[#allocation4 + $0x5d0] sm:$0xff]
    %v2311 = vld [vmem:[#allocation4 + $0x5d8] sm:$0xff]
    %v2312 = vld [vmem:[#allocation4 + $0x5e0] sm:$0xff]
    %v2313 = vld [vmem:[#allocation4 + $0x5e8] sm:$0xff]
    %v2314 = vld [vmem:[#allocation4 + $0x5f0] sm:$0xff]
    %v2315 = vld [vmem:[#allocation4 + $0x5f8] sm:$0xff]
    %v2316 = vld [vmem:[#allocation4 + $0x600] sm:$0xff]
    %v2317 = vld [vmem:[#allocation4 + $0x608] sm:$0xff]
    %v2318 = vld [vmem:[#allocation4 + $0x610] sm:$0xff]
    %v2319 = vld [vmem:[#allocation4 + $0x618] sm:$0xff]
    %v2320 = vld [vmem:[#allocation4 + $0x620] sm:$0xff]
    %v2321 = vld [vmem:[#allocation4 + $0x628] sm:$0xff]
    %v2322 = vld [vmem:[#allocation4 + $0x630] sm:$0xff]
    %v2323 = vld [vmem:[#allocation4 + $0x638] sm:$0xff]
    %v2324 = vld [vmem:[#allocation4 + $0x640] sm:$0xff]
    %v2325 = vld [vmem:[#allocation4 + $0x648] sm:$0xff]
    %v2326 = vld [vmem:[#allocation4 + $0x650] sm:$0xff]
    %v2327 = vld [vmem:[#allocation4 + $0x658] sm:$0xff]
    %v2328 = vld [vmem:[#allocation4 + $0x660] sm:$0xff]
    %v2329 = vld [vmem:[#allocation4 + $0x668] sm:$0xff]
    %v2330 = vld [vmem:[#allocation4 + $0x670] sm:$0xff]
    %v2331 = vld [vmem:[#allocation4 + $0x678] sm:$0xff]
    %v2332 = vld [vmem:[#allocation4 + $0x680] sm:$0xff]
    %v2333 = vld [vmem:[#allocation4 + $0x688] sm:$0xff]
    %v2334 = vld [vmem:[#allocation4 + $0x690] sm:$0xff]
    %v2335 = vld [vmem:[#allocation4 + $0x698] sm:$0xff]
    %v2336 = vld [vmem:[#allocation4 + $0x6a0] sm:$0xff]
    %v2337 = vld [vmem:[#allocation4 + $0x6a8] sm:$0xff]
    %v2338 = vld [vmem:[#allocation4 + $0x6b0] sm:$0xff]
    %v2339 = vld [vmem:[#allocation4 + $0x6b8] sm:$0xff]
    %v2340 = vld [vmem:[#allocation4 + $0x6c0] sm:$0xff]
    %v2341 = vld [vmem:[#allocation4 + $0x6c8] sm:$0xff]
    %v2342 = vld [vmem:[#allocation4 + $0x6d0] sm:$0xff]
    %v2343 = vld [vmem:[#allocation4 + $0x6d8] sm:$0xff]
    %v2344 = vld [vmem:[#allocation4 + $0x6e0] sm:$0xff]
    %v2345 = vld [vmem:[#allocation4 + $0x6e8] sm:$0xff]
    %v2346 = vld [vmem:[#allocation4 + $0x6f0] sm:$0xff]
    %v2347 = vld [vmem:[#allocation4 + $0x6f8] sm:$0xff]
    %v2348 = vld [vmem:[#allocation4 + $0x700] sm:$0xff]
    %v2349 = vld [vmem:[#allocation4 + $0x708] sm:$0xff]
    %v2350 = vld [vmem:[#allocation4 + $0x710] sm:$0xff]
    %v2351 = vld [vmem:[#allocation4 + $0x718] sm:$0xff]
    %v2352 = vld [vmem:[#allocation4 + $0x720] sm:$0xff]
    %v2353 = vld [vmem:[#allocation4 + $0x728] sm:$0xff]
    %v2354 = vld [vmem:[#allocation4 + $0x730] sm:$0xff]
    %v2355 = vld [vmem:[#allocation4 + $0x738] sm:$0xff]
    %v2356 = vld [vmem:[#allocation4 + $0x740] sm:$0xff]
    %v2357 = vld [vmem:[#allocation4 + $0x748] sm:$0xff]
    %v2358 = vld [vmem:[#allocation4 + $0x750] sm:$0xff]
    %v2359 = vld [vmem:[#allocation4 + $0x758] sm:$0xff]
    %v2360 = vld [vmem:[#allocation4 + $0x760] sm:$0xff]
    %v2361 = vld [vmem:[#allocation4 + $0x768] sm:$0xff]
    %v2362 = vld [vmem:[#allocation4 + $0x770] sm:$0xff]
    %v2363 = vld [vmem:[#allocation4 + $0x778] sm:$0xff]
    %v2364 = vld [vmem:[#allocation4 + $0x780] sm:$0xff]
    %v2365 = vld [vmem:[#allocation4 + $0x788] sm:$0xff]
    %v2366 = vld [vmem:[#allocation4 + $0x790] sm:$0xff]
    %v2367 = vld [vmem:[#allocation4 + $0x798] sm:$0xff]
    %v2368 = vld [vmem:[#allocation4 + $0x7a0] sm:$0xff]
    %v2369 = vld [vmem:[#allocation4 + $0x7a8] sm:$0xff]
    %v2370 = vld [vmem:[#allocation4 + $0x7b0] sm:$0xff]
    %v2371 = vld [vmem:[#allocation4 + $0x7b8] sm:$0xff]
    %v2372 = vld [vmem:[#allocation4 + $0x7c0] sm:$0xff]
    %v2373 = vld [vmem:[#allocation4 + $0x7c8] sm:$0xff]
    %v2374 = vld [vmem:[#allocation4 + $0x7d0] sm:$0xff]
    %v2375 = vld [vmem:[#allocation4 + $0x7d8] sm:$0xff]
    %v2376 = vld [vmem:[#allocation4 + $0x7e0] sm:$0xff]
    %v2377 = vld [vmem:[#allocation4 + $0x7e8] sm:$0xff]
    %v2378 = vld [vmem:[#allocation4 + $0x7f0] sm:$0xff]
    %v2379 = vld [vmem:[#allocation4 + $0x7f8] sm:$0xff]
    %2380 = vmatprep.subr.mxu0 %v2185
    %2381 = vmatpush1.msra.mxu0 %v2184
    %2382 = vmatprep.subr.mxu0 %v2181
    %2383 = vmatpush1.msra.mxu0 %v2180
    %2384 = vmatprep.subr.mxu0 %v2177
    %2385 = vmatpush1.msra.mxu0 %v2176
    %2386 = vmatprep.subr.mxu0 %v2173
    %2387 = vmatpush1.msra.mxu0 %v2172
    %2388 = vmatprep.subr.mxu0 %v2169
    %2389 = vmatpush1.msra.mxu0 %v2168
    %2390 = vmatprep.subr.mxu0 %v2165
    %2391 = vmatpush1.msra.mxu0 %v2164
    %2392 = vmatprep.subr.mxu0 %v2161
    %2393 = vmatpush1.msra.mxu0 %v2160
    %2394 = vmatprep.subr.mxu0 %v2157
    %2395 = vmatpush1.msra.mxu0 %v2156
    %2396 = vmatprep.subr.mxu0 %v2153
    %2397 = vmatpush1.msra.mxu0 %v2152
    %2398 = vmatprep.subr.mxu0 %v2149
    %2399 = vmatpush1.msra.mxu0 %v2148
    %2400 = vmatprep.subr.mxu0 %v2145
    %2401 = vmatpush1.msra.mxu0 %v2144
    %2402 = vmatprep.subr.mxu0 %v2141
    %2403 = vmatpush1.msra.mxu0 %v2140
    %2404 = vmatprep.subr.mxu0 %v2137
    %2405 = vmatpush1.msra.mxu0 %v2136
    %2406 = vmatprep.subr.mxu0 %v2133
    %2407 = vmatpush1.msra.mxu0 %v2132
    %2408 = vmatprep.subr.mxu0 %v2129
    %2409 = vmatpush1.msra.mxu0 %v2128
    %2410 = vmatprep.subr.mxu0 %v2125
    %2411 = vmatpush1.msra.mxu0 %v2124
    %2412 = vmatprep.subr.mxu0 %v2249
    %2413 = vmatpush2.msra.mxu0 %v2248
    %2414 = vmatprep.subr.mxu0 %v2245
    %2415 = vmatpush2.msra.mxu0 %v2244
    %2416 = vmatprep.subr.mxu0 %v2241
    %2417 = vmatpush2.msra.mxu0 %v2240
    %2418 = vmatprep.subr.mxu0 %v2237
    %2419 = vmatpush2.msra.mxu0 %v2236
    %2420 = vmatprep.subr.mxu0 %v2233
    %2421 = vmatpush2.msra.mxu0 %v2232
    %2422 = vmatprep.subr.mxu0 %v2229
    %2423 = vmatpush2.msra.mxu0 %v2228
    %2424 = vmatprep.subr.mxu0 %v2225
    %2425 = vmatpush2.msra.mxu0 %v2224
    %2426 = vmatprep.subr.mxu0 %v2221
    %2427 = vmatpush2.msra.mxu0 %v2220
    %2428 = vmatprep.subr.mxu0 %v2217
    %2429 = vmatpush2.msra.mxu0 %v2216
    %2430 = vmatprep.subr.mxu0 %v2213
    %2431 = vmatpush2.msra.mxu0 %v2212
    %2432 = vmatprep.subr.mxu0 %v2209
    %2433 = vmatpush2.msra.mxu0 %v2208
    %2434 = vmatprep.subr.mxu0 %v2205
    %2435 = vmatpush2.msra.mxu0 %v2204
    %2436 = vmatprep.subr.mxu0 %v2201
    %2437 = vmatpush2.msra.mxu0 %v2200
    %2438 = vmatprep.subr.mxu0 %v2197
    %2439 = vmatpush2.msra.mxu0 %v2196
    %2440 = vmatprep.subr.mxu0 %v2193
    %2441 = vmatpush2.msra.mxu0 %v2192
    %2442 = vmatprep.subr.mxu0 %v2189
    %2443 = vmatpush2.msra.mxu0 %v2188
    %2444 = vmatprep.mubr.f32.mxu0 %v2109
    %2445 = vmatmul.mubr.f32.gmra.mxu0 %v2108
    %v2446 = vpop.f32.mrf.mxu0
    %v2447 = vadd.f32 0.0, %v2446
    %v2448 = vpop.f32.mrf.mxu0
    %v2449 = vadd.f32 0.0, %v2448
    %2450 = vmatprep.mubr.f32.mxu0 %v2113
    %2451 = vmatmul.mubr.f32.gmra.mxu0 %v2112
    %v2452 = vpop.f32.mrf.mxu0
    %v2453 = vadd.f32 0.0, %v2452
    %v2454 = vpop.f32.mrf.mxu0
    %v2455 = vadd.f32 0.0, %v2454
    %2456 = vmatprep.mubr.f32.mxu0 %v2117
    %2457 = vmatmul.mubr.f32.gmra.mxu0 %v2116
    %v2458 = vpop.f32.mrf.mxu0
    %v2459 = vadd.f32 0.0, %v2458
    %v2460 = vpop.f32.mrf.mxu0
    %v2461 = vadd.f32 0.0, %v2460
    %2462 = vmatprep.mubr.f32.mxu0 %v2121
    %2463 = vmatmul.mubr.f32.gmra.mxu0 %v2120
    %v2464 = vpop.f32.mrf.mxu0
    %v2465 = vadd.f32 0.0, %v2464
    %v2466 = vpop.f32.mrf.mxu0
    %v2467 = vadd.f32 0.0, %v2466
    %2468 = vdwg.mxu0
    %2469 = vmatprep.subr.mxu0 %v2313
    %2470 = vmatpush1.msra.mxu0 %v2312
    %2471 = vmatprep.subr.mxu0 %v2309
    %2472 = vmatpush1.msra.mxu0 %v2308
    %2473 = vmatprep.subr.mxu0 %v2305
    %2474 = vmatpush1.msra.mxu0 %v2304
    %2475 = vmatprep.subr.mxu0 %v2301
    %2476 = vmatpush1.msra.mxu0 %v2300
    %2477 = vmatprep.subr.mxu0 %v2297
    %2478 = vmatpush1.msra.mxu0 %v2296
    %2479 = vmatprep.subr.mxu0 %v2293
    %2480 = vmatpush1.msra.mxu0 %v2292
    %2481 = vmatprep.subr.mxu0 %v2289
    %2482 = vmatpush1.msra.mxu0 %v2288
    %2483 = vmatprep.subr.mxu0 %v2285
    %2484 = vmatpush1.msra.mxu0 %v2284
    %2485 = vmatprep.subr.mxu0 %v2281
    %2486 = vmatpush1.msra.mxu0 %v2280
    %2487 = vmatprep.subr.mxu0 %v2277
    %2488 = vmatpush1.msra.mxu0 %v2276
    %2489 = vmatprep.subr.mxu0 %v2273
    %2490 = vmatpush1.msra.mxu0 %v2272
    %2491 = vmatprep.subr.mxu0 %v2269
    %2492 = vmatpush1.msra.mxu0 %v2268
    %2493 = vmatprep.subr.mxu0 %v2265
    %2494 = vmatpush1.msra.mxu0 %v2264
    %2495 = vmatprep.subr.mxu0 %v2261
    %2496 = vmatpush1.msra.mxu0 %v2260
    %2497 = vmatprep.subr.mxu0 %v2257
    %2498 = vmatpush1.msra.mxu0 %v2256
    %2499 = vmatprep.subr.mxu0 %v2253
    %2500 = vmatpush1.msra.mxu0 %v2252
    %2501 = vmatprep.subr.mxu0 %v2377
    %2502 = vmatpush2.msra.mxu0 %v2376
    %2503 = vmatprep.subr.mxu0 %v2373
    %2504 = vmatpush2.msra.mxu0 %v2372
    %2505 = vmatprep.subr.mxu0 %v2369
    %2506 = vmatpush2.msra.mxu0 %v2368
    %2507 = vmatprep.subr.mxu0 %v2365
    %2508 = vmatpush2.msra.mxu0 %v2364
    %2509 = vmatprep.subr.mxu0 %v2361
    %2510 = vmatpush2.msra.mxu0 %v2360
    %2511 = vmatprep.subr.mxu0 %v2357
    %2512 = vmatpush2.msra.mxu0 %v2356
    %2513 = vmatprep.subr.mxu0 %v2353
    %2514 = vmatpush2.msra.mxu0 %v2352
    %2515 = vmatprep.subr.mxu0 %v2349
    %2516 = vmatpush2.msra.mxu0 %v2348
    %2517 = vmatprep.subr.mxu0 %v2345
    %2518 = vmatpush2.msra.mxu0 %v2344
    %2519 = vmatprep.subr.mxu0 %v2341
    %2520 = vmatpush2.msra.mxu0 %v2340
    %2521 = vmatprep.subr.mxu0 %v2337
    %2522 = vmatpush2.msra.mxu0 %v2336
    %2523 = vmatprep.subr.mxu0 %v2333
    %2524 = vmatpush2.msra.mxu0 %v2332
    %2525 = vmatprep.subr.mxu0 %v2329
    %2526 = vmatpush2.msra.mxu0 %v2328
    %2527 = vmatprep.subr.mxu0 %v2325
    %2528 = vmatpush2.msra.mxu0 %v2324
    %2529 = vmatprep.subr.mxu0 %v2321
    %2530 = vmatpush2.msra.mxu0 %v2320
    %2531 = vmatprep.subr.mxu0 %v2317
    %2532 = vmatpush2.msra.mxu0 %v2316
    %2533 = vmatprep.mubr.f32.mxu0 %v2111
    %2534 = vmatmul.mubr.f32.gmra.mxu0 %v2110
    %v2535 = vpop.f32.mrf.mxu0
    %v2536 = vadd.f32 %v2447, %v2535
    %v2537 = vpop.f32.mrf.mxu0
    %v2538 = vadd.f32 %v2449, %v2537
    %2539 = vmatprep.mubr.f32.mxu0 %v2115
    %2540 = vmatmul.mubr.f32.gmra.mxu0 %v2114
    %v2541 = vpop.f32.mrf.mxu0
    %v2542 = vadd.f32 %v2453, %v2541
    %v2543 = vpop.f32.mrf.mxu0
    %v2544 = vadd.f32 %v2455, %v2543
    %2545 = vmatprep.mubr.f32.mxu0 %v2119
    %2546 = vmatmul.mubr.f32.gmra.mxu0 %v2118
    %v2547 = vpop.f32.mrf.mxu0
    %v2548 = vadd.f32 %v2459, %v2547
    %v2549 = vpop.f32.mrf.mxu0
    %v2550 = vadd.f32 %v2461, %v2549
    %2551 = vmatprep.mubr.f32.mxu0 %v2123
    %2552 = vmatmul.mubr.f32.gmra.mxu0 %v2122
    %v2553 = vpop.f32.mrf.mxu0
    %v2554 = vadd.f32 %v2465, %v2553
    %v2555 = vpop.f32.mrf.mxu0
    %v2556 = vadd.f32 %v2467, %v2555
    %2557 = vdwg.mxu0
    %2558 = vmatprep.subr.mxu0 %v2187
    %2559 = vmatpush1.msra.mxu0 %v2186
    %2560 = vmatprep.subr.mxu0 %v2183
    %2561 = vmatpush1.msra.mxu0 %v2182
    %2562 = vmatprep.subr.mxu0 %v2179
    %2563 = vmatpush1.msra.mxu0 %v2178
    %2564 = vmatprep.subr.mxu0 %v2175
    %2565 = vmatpush1.msra.mxu0 %v2174
    %2566 = vmatprep.subr.mxu0 %v2171
    %2567 = vmatpush1.msra.mxu0 %v2170
    %2568 = vmatprep.subr.mxu0 %v2167
    %2569 = vmatpush1.msra.mxu0 %v2166
    %2570 = vmatprep.subr.mxu0 %v2163
    %2571 = vmatpush1.msra.mxu0 %v2162
    %2572 = vmatprep.subr.mxu0 %v2159
    %2573 = vmatpush1.msra.mxu0 %v2158
    %2574 = vmatprep.subr.mxu0 %v2155
    %2575 = vmatpush1.msra.mxu0 %v2154
    %2576 = vmatprep.subr.mxu0 %v2151
    %2577 = vmatpush1.msra.mxu0 %v2150
    %2578 = vmatprep.subr.mxu0 %v2147
    %2579 = vmatpush1.msra.mxu0 %v2146
    %2580 = vmatprep.subr.mxu0 %v2143
    %2581 = vmatpush1.msra.mxu0 %v2142
    %2582 = vmatprep.subr.mxu0 %v2139
    %2583 = vmatpush1.msra.mxu0 %v2138
    %2584 = vmatprep.subr.mxu0 %v2135
    %2585 = vmatpush1.msra.mxu0 %v2134
    %2586 = vmatprep.subr.mxu0 %v2131
    %2587 = vmatpush1.msra.mxu0 %v2130
    %2588 = vmatprep.subr.mxu0 %v2127
    %2589 = vmatpush1.msra.mxu0 %v2126
    %2590 = vmatprep.subr.mxu0 %v2251
    %2591 = vmatpush2.msra.mxu0 %v2250
    %2592 = vmatprep.subr.mxu0 %v2247
    %2593 = vmatpush2.msra.mxu0 %v2246
    %2594 = vmatprep.subr.mxu0 %v2243
    %2595 = vmatpush2.msra.mxu0 %v2242
    %2596 = vmatprep.subr.mxu0 %v2239
    %2597 = vmatpush2.msra.mxu0 %v2238
    %2598 = vmatprep.subr.mxu0 %v2235
    %2599 = vmatpush2.msra.mxu0 %v2234
    %2600 = vmatprep.subr.mxu0 %v2231
    %2601 = vmatpush2.msra.mxu0 %v2230
    %2602 = vmatprep.subr.mxu0 %v2227
    %2603 = vmatpush2.msra.mxu0 %v2226
    %2604 = vmatprep.subr.mxu0 %v2223
    %2605 = vmatpush2.msra.mxu0 %v2222
    %2606 = vmatprep.subr.mxu0 %v2219
    %2607 = vmatpush2.msra.mxu0 %v2218
    %2608 = vmatprep.subr.mxu0 %v2215
    %2609 = vmatpush2.msra.mxu0 %v2214
    %2610 = vmatprep.subr.mxu0 %v2211
    %2611 = vmatpush2.msra.mxu0 %v2210
    %2612 = vmatprep.subr.mxu0 %v2207
    %2613 = vmatpush2.msra.mxu0 %v2206
    %2614 = vmatprep.subr.mxu0 %v2203
    %2615 = vmatpush2.msra.mxu0 %v2202
    %2616 = vmatprep.subr.mxu0 %v2199
    %2617 = vmatpush2.msra.mxu0 %v2198
    %2618 = vmatprep.subr.mxu0 %v2195
    %2619 = vmatpush2.msra.mxu0 %v2194
    %2620 = vmatprep.subr.mxu0 %v2191
    %2621 = vmatpush2.msra.mxu0 %v2190
    %2622 = vmatprep.mubr.f32.mxu0 %v2109
    %2623 = vmatmul.mubr.f32.gmra.mxu0 %v2108
    %v2624 = vpop.f32.mrf.mxu0
    %v2625 = vadd.f32 0.0, %v2624
    %v2626 = vpop.f32.mrf.mxu0
    %v2627 = vadd.f32 0.0, %v2626
    %2628 = vmatprep.mubr.f32.mxu0 %v2113
    %2629 = vmatmul.mubr.f32.gmra.mxu0 %v2112
    %v2630 = vpop.f32.mrf.mxu0
    %v2631 = vadd.f32 0.0, %v2630
    %v2632 = vpop.f32.mrf.mxu0
    %v2633 = vadd.f32 0.0, %v2632
    %2634 = vmatprep.mubr.f32.mxu0 %v2117
    %2635 = vmatmul.mubr.f32.gmra.mxu0 %v2116
    %v2636 = vpop.f32.mrf.mxu0
    %v2637 = vadd.f32 0.0, %v2636
    %v2638 = vpop.f32.mrf.mxu0
    %v2639 = vadd.f32 0.0, %v2638
    %2640 = vmatprep.mubr.f32.mxu0 %v2121
    %2641 = vmatmul.mubr.f32.gmra.mxu0 %v2120
    %v2642 = vpop.f32.mrf.mxu0
    %v2643 = vadd.f32 0.0, %v2642
    %v2644 = vpop.f32.mrf.mxu0
    %v2645 = vadd.f32 0.0, %v2644
    %2646 = vdwg.mxu0
    %2647 = vmatprep.subr.mxu0 %v2315
    %2648 = vmatpush1.msra.mxu0 %v2314
    %2649 = vmatprep.subr.mxu0 %v2311
    %2650 = vmatpush1.msra.mxu0 %v2310
    %2651 = vmatprep.subr.mxu0 %v2307
    %2652 = vmatpush1.msra.mxu0 %v2306
    %2653 = vmatprep.subr.mxu0 %v2303
    %2654 = vmatpush1.msra.mxu0 %v2302
    %2655 = vmatprep.subr.mxu0 %v2299
    %2656 = vmatpush1.msra.mxu0 %v2298
    %2657 = vmatprep.subr.mxu0 %v2295
    %2658 = vmatpush1.msra.mxu0 %v2294
    %2659 = vmatprep.subr.mxu0 %v2291
    %2660 = vmatpush1.msra.mxu0 %v2290
    %2661 = vmatprep.subr.mxu0 %v2287
    %2662 = vmatpush1.msra.mxu0 %v2286
    %2663 = vmatprep.subr.mxu0 %v2283
    %2664 = vmatpush1.msra.mxu0 %v2282
    %2665 = vmatprep.subr.mxu0 %v2279
    %2666 = vmatpush1.msra.mxu0 %v2278
    %2667 = vmatprep.subr.mxu0 %v2275
    %2668 = vmatpush1.msra.mxu0 %v2274
    %2669 = vmatprep.subr.mxu0 %v2271
    %2670 = vmatpush1.msra.mxu0 %v2270
    %2671 = vmatprep.subr.mxu0 %v2267
    %2672 = vmatpush1.msra.mxu0 %v2266
    %2673 = vmatprep.subr.mxu0 %v2263
    %2674 = vmatpush1.msra.mxu0 %v2262
    %2675 = vmatprep.subr.mxu0 %v2259
    %2676 = vmatpush1.msra.mxu0 %v2258
    %2677 = vmatprep.subr.mxu0 %v2255
    %2678 = vmatpush1.msra.mxu0 %v2254
    %2679 = vmatprep.subr.mxu0 %v2379
    %2680 = vmatpush2.msra.mxu0 %v2378
    %2681 = vmatprep.subr.mxu0 %v2375
    %2682 = vmatpush2.msra.mxu0 %v2374
    %2683 = vmatprep.subr.mxu0 %v2371
    %2684 = vmatpush2.msra.mxu0 %v2370
    %2685 = vmatprep.subr.mxu0 %v2367
    %2686 = vmatpush2.msra.mxu0 %v2366
    %2687 = vmatprep.subr.mxu0 %v2363
    %2688 = vmatpush2.msra.mxu0 %v2362
    %2689 = vmatprep.subr.mxu0 %v2359
    %2690 = vmatpush2.msra.mxu0 %v2358
    %2691 = vmatprep.subr.mxu0 %v2355
    %2692 = vmatpush2.msra.mxu0 %v2354
    %2693 = vmatprep.subr.mxu0 %v2351
    %2694 = vmatpush2.msra.mxu0 %v2350
    %2695 = vmatprep.subr.mxu0 %v2347
    %2696 = vmatpush2.msra.mxu0 %v2346
    %2697 = vmatprep.subr.mxu0 %v2343
    %2698 = vmatpush2.msra.mxu0 %v2342
    %2699 = vmatprep.subr.mxu0 %v2339
    %2700 = vmatpush2.msra.mxu0 %v2338
    %2701 = vmatprep.subr.mxu0 %v2335
    %2702 = vmatpush2.msra.mxu0 %v2334
    %2703 = vmatprep.subr.mxu0 %v2331
    %2704 = vmatpush2.msra.mxu0 %v2330
    %2705 = vmatprep.subr.mxu0 %v2327
    %2706 = vmatpush2.msra.mxu0 %v2326
    %2707 = vmatprep.subr.mxu0 %v2323
    %2708 = vmatpush2.msra.mxu0 %v2322
    %2709 = vmatprep.subr.mxu0 %v2319
    %2710 = vmatpush2.msra.mxu0 %v2318
    %2711 = vmatprep.mubr.f32.mxu0 %v2111
    %2712 = vmatmul.mubr.f32.gmra.mxu0 %v2110
    %v2713 = vpop.f32.mrf.mxu0
    %v2714 = vadd.f32 %v2625, %v2713
    %v2715 = vpop.f32.mrf.mxu0
    %v2716 = vadd.f32 %v2627, %v2715
    %2717 = vmatprep.mubr.f32.mxu0 %v2115
    %2718 = vmatmul.mubr.f32.gmra.mxu0 %v2114
    %v2719 = vpop.f32.mrf.mxu0
    %v2720 = vadd.f32 %v2631, %v2719
    %v2721 = vpop.f32.mrf.mxu0
    %v2722 = vadd.f32 %v2633, %v2721
    %2723 = vmatprep.mubr.f32.mxu0 %v2119
    %2724 = vmatmul.mubr.f32.gmra.mxu0 %v2118
    %v2725 = vpop.f32.mrf.mxu0
    %v2726 = vadd.f32 %v2637, %v2725
    %v2727 = vpop.f32.mrf.mxu0
    %v2728 = vadd.f32 %v2639, %v2727
    %2729 = vmatprep.mubr.f32.mxu0 %v2123
    %2730 = vmatmul.mubr.f32.gmra.mxu0 %v2122
    %v2731 = vpop.f32.mrf.mxu0
    %v2732 = vadd.f32 %v2643, %v2731
    %v2733 = vpop.f32.mrf.mxu0
    %v2734 = vadd.f32 %v2645, %v2733
    %2735 = vdwg.mxu0
    %s2736 = scalar_lea.vmem [#allocation4], 2048
    %v2737 = vld [vmem:[%s2736] sm:$0xff]
    %v2738 = vld [vmem:[%s2736 + $0x8] sm:$0xff]
    %v2739 = vld [vmem:[%s2736 + $0x10] sm:$0xff]
    %v2740 = vld [vmem:[%s2736 + $0x18] sm:$0xff]
    %v2741 = vld [vmem:[%s2736 + $0x20] sm:$0xff]
    %v2742 = vld [vmem:[%s2736 + $0x28] sm:$0xff]
    %v2743 = vld [vmem:[%s2736 + $0x30] sm:$0xff]
    %v2744 = vld [vmem:[%s2736 + $0x38] sm:$0xff]
    %v2745 = vld [vmem:[%s2736 + $0x40] sm:$0xff]
    %v2746 = vld [vmem:[%s2736 + $0x48] sm:$0xff]
    %v2747 = vld [vmem:[%s2736 + $0x50] sm:$0xff]
    %v2748 = vld [vmem:[%s2736 + $0x58] sm:$0xff]
    %v2749 = vld [vmem:[%s2736 + $0x60] sm:$0xff]
    %v2750 = vld [vmem:[%s2736 + $0x68] sm:$0xff]
    %v2751 = vld [vmem:[%s2736 + $0x70] sm:$0xff]
    %v2752 = vld [vmem:[%s2736 + $0x78] sm:$0xff]
    %v2753 = vld [vmem:[%s2736 + $0x80] sm:$0xff]
    %v2754 = vld [vmem:[%s2736 + $0x88] sm:$0xff]
    %v2755 = vld [vmem:[%s2736 + $0x90] sm:$0xff]
    %v2756 = vld [vmem:[%s2736 + $0x98] sm:$0xff]
    %v2757 = vld [vmem:[%s2736 + $0xa0] sm:$0xff]
    %v2758 = vld [vmem:[%s2736 + $0xa8] sm:$0xff]
    %v2759 = vld [vmem:[%s2736 + $0xb0] sm:$0xff]
    %v2760 = vld [vmem:[%s2736 + $0xb8] sm:$0xff]
    %v2761 = vld [vmem:[%s2736 + $0xc0] sm:$0xff]
    %v2762 = vld [vmem:[%s2736 + $0xc8] sm:$0xff]
    %v2763 = vld [vmem:[%s2736 + $0xd0] sm:$0xff]
    %v2764 = vld [vmem:[%s2736 + $0xd8] sm:$0xff]
    %v2765 = vld [vmem:[%s2736 + $0xe0] sm:$0xff]
    %v2766 = vld [vmem:[%s2736 + $0xe8] sm:$0xff]
    %v2767 = vld [vmem:[%s2736 + $0xf0] sm:$0xff]
    %v2768 = vld [vmem:[%s2736 + $0xf8] sm:$0xff]
    %v2769 = vld [vmem:[%s2736 + $0x100] sm:$0xff]
    %v2770 = vld [vmem:[%s2736 + $0x108] sm:$0xff]
    %v2771 = vld [vmem:[%s2736 + $0x110] sm:$0xff]
    %v2772 = vld [vmem:[%s2736 + $0x118] sm:$0xff]
    %v2773 = vld [vmem:[%s2736 + $0x120] sm:$0xff]
    %v2774 = vld [vmem:[%s2736 + $0x128] sm:$0xff]
    %v2775 = vld [vmem:[%s2736 + $0x130] sm:$0xff]
    %v2776 = vld [vmem:[%s2736 + $0x138] sm:$0xff]
    %v2777 = vld [vmem:[%s2736 + $0x140] sm:$0xff]
    %v2778 = vld [vmem:[%s2736 + $0x148] sm:$0xff]
    %v2779 = vld [vmem:[%s2736 + $0x150] sm:$0xff]
    %v2780 = vld [vmem:[%s2736 + $0x158] sm:$0xff]
    %v2781 = vld [vmem:[%s2736 + $0x160] sm:$0xff]
    %v2782 = vld [vmem:[%s2736 + $0x168] sm:$0xff]
    %v2783 = vld [vmem:[%s2736 + $0x170] sm:$0xff]
    %v2784 = vld [vmem:[%s2736 + $0x178] sm:$0xff]
    %v2785 = vld [vmem:[%s2736 + $0x180] sm:$0xff]
    %v2786 = vld [vmem:[%s2736 + $0x188] sm:$0xff]
    %v2787 = vld [vmem:[%s2736 + $0x190] sm:$0xff]
    %v2788 = vld [vmem:[%s2736 + $0x198] sm:$0xff]
    %v2789 = vld [vmem:[%s2736 + $0x1a0] sm:$0xff]
    %v2790 = vld [vmem:[%s2736 + $0x1a8] sm:$0xff]
    %v2791 = vld [vmem:[%s2736 + $0x1b0] sm:$0xff]
    %v2792 = vld [vmem:[%s2736 + $0x1b8] sm:$0xff]
    %v2793 = vld [vmem:[%s2736 + $0x1c0] sm:$0xff]
    %v2794 = vld [vmem:[%s2736 + $0x1c8] sm:$0xff]
    %v2795 = vld [vmem:[%s2736 + $0x1d0] sm:$0xff]
    %v2796 = vld [vmem:[%s2736 + $0x1d8] sm:$0xff]
    %v2797 = vld [vmem:[%s2736 + $0x1e0] sm:$0xff]
    %v2798 = vld [vmem:[%s2736 + $0x1e8] sm:$0xff]
    %v2799 = vld [vmem:[%s2736 + $0x1f0] sm:$0xff]
    %v2800 = vld [vmem:[%s2736 + $0x1f8] sm:$0xff]
    %v2801 = vld [vmem:[%s2736 + $0x200] sm:$0xff]
    %v2802 = vld [vmem:[%s2736 + $0x208] sm:$0xff]
    %v2803 = vld [vmem:[%s2736 + $0x210] sm:$0xff]
    %v2804 = vld [vmem:[%s2736 + $0x218] sm:$0xff]
    %v2805 = vld [vmem:[%s2736 + $0x220] sm:$0xff]
    %v2806 = vld [vmem:[%s2736 + $0x228] sm:$0xff]
    %v2807 = vld [vmem:[%s2736 + $0x230] sm:$0xff]
    %v2808 = vld [vmem:[%s2736 + $0x238] sm:$0xff]
    %v2809 = vld [vmem:[%s2736 + $0x240] sm:$0xff]
    %v2810 = vld [vmem:[%s2736 + $0x248] sm:$0xff]
    %v2811 = vld [vmem:[%s2736 + $0x250] sm:$0xff]
    %v2812 = vld [vmem:[%s2736 + $0x258] sm:$0xff]
    %v2813 = vld [vmem:[%s2736 + $0x260] sm:$0xff]
    %v2814 = vld [vmem:[%s2736 + $0x268] sm:$0xff]
    %v2815 = vld [vmem:[%s2736 + $0x270] sm:$0xff]
    %v2816 = vld [vmem:[%s2736 + $0x278] sm:$0xff]
    %v2817 = vld [vmem:[%s2736 + $0x280] sm:$0xff]
    %v2818 = vld [vmem:[%s2736 + $0x288] sm:$0xff]
    %v2819 = vld [vmem:[%s2736 + $0x290] sm:$0xff]
    %v2820 = vld [vmem:[%s2736 + $0x298] sm:$0xff]
    %v2821 = vld [vmem:[%s2736 + $0x2a0] sm:$0xff]
    %v2822 = vld [vmem:[%s2736 + $0x2a8] sm:$0xff]
    %v2823 = vld [vmem:[%s2736 + $0x2b0] sm:$0xff]
    %v2824 = vld [vmem:[%s2736 + $0x2b8] sm:$0xff]
    %v2825 = vld [vmem:[%s2736 + $0x2c0] sm:$0xff]
    %v2826 = vld [vmem:[%s2736 + $0x2c8] sm:$0xff]
    %v2827 = vld [vmem:[%s2736 + $0x2d0] sm:$0xff]
    %v2828 = vld [vmem:[%s2736 + $0x2d8] sm:$0xff]
    %v2829 = vld [vmem:[%s2736 + $0x2e0] sm:$0xff]
    %v2830 = vld [vmem:[%s2736 + $0x2e8] sm:$0xff]
    %v2831 = vld [vmem:[%s2736 + $0x2f0] sm:$0xff]
    %v2832 = vld [vmem:[%s2736 + $0x2f8] sm:$0xff]
    %v2833 = vld [vmem:[%s2736 + $0x300] sm:$0xff]
    %v2834 = vld [vmem:[%s2736 + $0x308] sm:$0xff]
    %v2835 = vld [vmem:[%s2736 + $0x310] sm:$0xff]
    %v2836 = vld [vmem:[%s2736 + $0x318] sm:$0xff]
    %v2837 = vld [vmem:[%s2736 + $0x320] sm:$0xff]
    %v2838 = vld [vmem:[%s2736 + $0x328] sm:$0xff]
    %v2839 = vld [vmem:[%s2736 + $0x330] sm:$0xff]
    %v2840 = vld [vmem:[%s2736 + $0x338] sm:$0xff]
    %v2841 = vld [vmem:[%s2736 + $0x340] sm:$0xff]
    %v2842 = vld [vmem:[%s2736 + $0x348] sm:$0xff]
    %v2843 = vld [vmem:[%s2736 + $0x350] sm:$0xff]
    %v2844 = vld [vmem:[%s2736 + $0x358] sm:$0xff]
    %v2845 = vld [vmem:[%s2736 + $0x360] sm:$0xff]
    %v2846 = vld [vmem:[%s2736 + $0x368] sm:$0xff]
    %v2847 = vld [vmem:[%s2736 + $0x370] sm:$0xff]
    %v2848 = vld [vmem:[%s2736 + $0x378] sm:$0xff]
    %v2849 = vld [vmem:[%s2736 + $0x380] sm:$0xff]
    %v2850 = vld [vmem:[%s2736 + $0x388] sm:$0xff]
    %v2851 = vld [vmem:[%s2736 + $0x390] sm:$0xff]
    %v2852 = vld [vmem:[%s2736 + $0x398] sm:$0xff]
    %v2853 = vld [vmem:[%s2736 + $0x3a0] sm:$0xff]
    %v2854 = vld [vmem:[%s2736 + $0x3a8] sm:$0xff]
    %v2855 = vld [vmem:[%s2736 + $0x3b0] sm:$0xff]
    %v2856 = vld [vmem:[%s2736 + $0x3b8] sm:$0xff]
    %v2857 = vld [vmem:[%s2736 + $0x3c0] sm:$0xff]
    %v2858 = vld [vmem:[%s2736 + $0x3c8] sm:$0xff]
    %v2859 = vld [vmem:[%s2736 + $0x3d0] sm:$0xff]
    %v2860 = vld [vmem:[%s2736 + $0x3d8] sm:$0xff]
    %v2861 = vld [vmem:[%s2736 + $0x3e0] sm:$0xff]
    %v2862 = vld [vmem:[%s2736 + $0x3e8] sm:$0xff]
    %v2863 = vld [vmem:[%s2736 + $0x3f0] sm:$0xff]
    %v2864 = vld [vmem:[%s2736 + $0x3f8] sm:$0xff]
    %v2865 = vld [vmem:[%s2736 + $0x400] sm:$0xff]
    %v2866 = vld [vmem:[%s2736 + $0x408] sm:$0xff]
    %v2867 = vld [vmem:[%s2736 + $0x410] sm:$0xff]
    %v2868 = vld [vmem:[%s2736 + $0x418] sm:$0xff]
    %v2869 = vld [vmem:[%s2736 + $0x420] sm:$0xff]
    %v2870 = vld [vmem:[%s2736 + $0x428] sm:$0xff]
    %v2871 = vld [vmem:[%s2736 + $0x430] sm:$0xff]
    %v2872 = vld [vmem:[%s2736 + $0x438] sm:$0xff]
    %v2873 = vld [vmem:[%s2736 + $0x440] sm:$0xff]
    %v2874 = vld [vmem:[%s2736 + $0x448] sm:$0xff]
    %v2875 = vld [vmem:[%s2736 + $0x450] sm:$0xff]
    %v2876 = vld [vmem:[%s2736 + $0x458] sm:$0xff]
    %v2877 = vld [vmem:[%s2736 + $0x460] sm:$0xff]
    %v2878 = vld [vmem:[%s2736 + $0x468] sm:$0xff]
    %v2879 = vld [vmem:[%s2736 + $0x470] sm:$0xff]
    %v2880 = vld [vmem:[%s2736 + $0x478] sm:$0xff]
    %v2881 = vld [vmem:[%s2736 + $0x480] sm:$0xff]
    %v2882 = vld [vmem:[%s2736 + $0x488] sm:$0xff]
    %v2883 = vld [vmem:[%s2736 + $0x490] sm:$0xff]
    %v2884 = vld [vmem:[%s2736 + $0x498] sm:$0xff]
    %v2885 = vld [vmem:[%s2736 + $0x4a0] sm:$0xff]
    %v2886 = vld [vmem:[%s2736 + $0x4a8] sm:$0xff]
    %v2887 = vld [vmem:[%s2736 + $0x4b0] sm:$0xff]
    %v2888 = vld [vmem:[%s2736 + $0x4b8] sm:$0xff]
    %v2889 = vld [vmem:[%s2736 + $0x4c0] sm:$0xff]
    %v2890 = vld [vmem:[%s2736 + $0x4c8] sm:$0xff]
    %v2891 = vld [vmem:[%s2736 + $0x4d0] sm:$0xff]
    %v2892 = vld [vmem:[%s2736 + $0x4d8] sm:$0xff]
    %v2893 = vld [vmem:[%s2736 + $0x4e0] sm:$0xff]
    %v2894 = vld [vmem:[%s2736 + $0x4e8] sm:$0xff]
    %v2895 = vld [vmem:[%s2736 + $0x4f0] sm:$0xff]
    %v2896 = vld [vmem:[%s2736 + $0x4f8] sm:$0xff]
    %v2897 = vld [vmem:[%s2736 + $0x500] sm:$0xff]
    %v2898 = vld [vmem:[%s2736 + $0x508] sm:$0xff]
    %v2899 = vld [vmem:[%s2736 + $0x510] sm:$0xff]
    %v2900 = vld [vmem:[%s2736 + $0x518] sm:$0xff]
    %v2901 = vld [vmem:[%s2736 + $0x520] sm:$0xff]
    %v2902 = vld [vmem:[%s2736 + $0x528] sm:$0xff]
    %v2903 = vld [vmem:[%s2736 + $0x530] sm:$0xff]
    %v2904 = vld [vmem:[%s2736 + $0x538] sm:$0xff]
    %v2905 = vld [vmem:[%s2736 + $0x540] sm:$0xff]
    %v2906 = vld [vmem:[%s2736 + $0x548] sm:$0xff]
    %v2907 = vld [vmem:[%s2736 + $0x550] sm:$0xff]
    %v2908 = vld [vmem:[%s2736 + $0x558] sm:$0xff]
    %v2909 = vld [vmem:[%s2736 + $0x560] sm:$0xff]
    %v2910 = vld [vmem:[%s2736 + $0x568] sm:$0xff]
    %v2911 = vld [vmem:[%s2736 + $0x570] sm:$0xff]
    %v2912 = vld [vmem:[%s2736 + $0x578] sm:$0xff]
    %v2913 = vld [vmem:[%s2736 + $0x580] sm:$0xff]
    %v2914 = vld [vmem:[%s2736 + $0x588] sm:$0xff]
    %v2915 = vld [vmem:[%s2736 + $0x590] sm:$0xff]
    %v2916 = vld [vmem:[%s2736 + $0x598] sm:$0xff]
    %v2917 = vld [vmem:[%s2736 + $0x5a0] sm:$0xff]
    %v2918 = vld [vmem:[%s2736 + $0x5a8] sm:$0xff]
    %v2919 = vld [vmem:[%s2736 + $0x5b0] sm:$0xff]
    %v2920 = vld [vmem:[%s2736 + $0x5b8] sm:$0xff]
    %v2921 = vld [vmem:[%s2736 + $0x5c0] sm:$0xff]
    %v2922 = vld [vmem:[%s2736 + $0x5c8] sm:$0xff]
    %v2923 = vld [vmem:[%s2736 + $0x5d0] sm:$0xff]
    %v2924 = vld [vmem:[%s2736 + $0x5d8] sm:$0xff]
    %v2925 = vld [vmem:[%s2736 + $0x5e0] sm:$0xff]
    %v2926 = vld [vmem:[%s2736 + $0x5e8] sm:$0xff]
    %v2927 = vld [vmem:[%s2736 + $0x5f0] sm:$0xff]
    %v2928 = vld [vmem:[%s2736 + $0x5f8] sm:$0xff]
    %v2929 = vld [vmem:[%s2736 + $0x600] sm:$0xff]
    %v2930 = vld [vmem:[%s2736 + $0x608] sm:$0xff]
    %v2931 = vld [vmem:[%s2736 + $0x610] sm:$0xff]
    %v2932 = vld [vmem:[%s2736 + $0x618] sm:$0xff]
    %v2933 = vld [vmem:[%s2736 + $0x620] sm:$0xff]
    %v2934 = vld [vmem:[%s2736 + $0x628] sm:$0xff]
    %v2935 = vld [vmem:[%s2736 + $0x630] sm:$0xff]
    %v2936 = vld [vmem:[%s2736 + $0x638] sm:$0xff]
    %v2937 = vld [vmem:[%s2736 + $0x640] sm:$0xff]
    %v2938 = vld [vmem:[%s2736 + $0x648] sm:$0xff]
    %v2939 = vld [vmem:[%s2736 + $0x650] sm:$0xff]
    %v2940 = vld [vmem:[%s2736 + $0x658] sm:$0xff]
    %v2941 = vld [vmem:[%s2736 + $0x660] sm:$0xff]
    %v2942 = vld [vmem:[%s2736 + $0x668] sm:$0xff]
    %v2943 = vld [vmem:[%s2736 + $0x670] sm:$0xff]
    %v2944 = vld [vmem:[%s2736 + $0x678] sm:$0xff]
    %v2945 = vld [vmem:[%s2736 + $0x680] sm:$0xff]
    %v2946 = vld [vmem:[%s2736 + $0x688] sm:$0xff]
    %v2947 = vld [vmem:[%s2736 + $0x690] sm:$0xff]
    %v2948 = vld [vmem:[%s2736 + $0x698] sm:$0xff]
    %v2949 = vld [vmem:[%s2736 + $0x6a0] sm:$0xff]
    %v2950 = vld [vmem:[%s2736 + $0x6a8] sm:$0xff]
    %v2951 = vld [vmem:[%s2736 + $0x6b0] sm:$0xff]
    %v2952 = vld [vmem:[%s2736 + $0x6b8] sm:$0xff]
    %v2953 = vld [vmem:[%s2736 + $0x6c0] sm:$0xff]
    %v2954 = vld [vmem:[%s2736 + $0x6c8] sm:$0xff]
    %v2955 = vld [vmem:[%s2736 + $0x6d0] sm:$0xff]
    %v2956 = vld [vmem:[%s2736 + $0x6d8] sm:$0xff]
    %v2957 = vld [vmem:[%s2736 + $0x6e0] sm:$0xff]
    %v2958 = vld [vmem:[%s2736 + $0x6e8] sm:$0xff]
    %v2959 = vld [vmem:[%s2736 + $0x6f0] sm:$0xff]
    %v2960 = vld [vmem:[%s2736 + $0x6f8] sm:$0xff]
    %v2961 = vld [vmem:[%s2736 + $0x700] sm:$0xff]
    %v2962 = vld [vmem:[%s2736 + $0x708] sm:$0xff]
    %v2963 = vld [vmem:[%s2736 + $0x710] sm:$0xff]
    %v2964 = vld [vmem:[%s2736 + $0x718] sm:$0xff]
    %v2965 = vld [vmem:[%s2736 + $0x720] sm:$0xff]
    %v2966 = vld [vmem:[%s2736 + $0x728] sm:$0xff]
    %v2967 = vld [vmem:[%s2736 + $0x730] sm:$0xff]
    %v2968 = vld [vmem:[%s2736 + $0x738] sm:$0xff]
    %v2969 = vld [vmem:[%s2736 + $0x740] sm:$0xff]
    %v2970 = vld [vmem:[%s2736 + $0x748] sm:$0xff]
    %v2971 = vld [vmem:[%s2736 + $0x750] sm:$0xff]
    %v2972 = vld [vmem:[%s2736 + $0x758] sm:$0xff]
    %v2973 = vld [vmem:[%s2736 + $0x760] sm:$0xff]
    %v2974 = vld [vmem:[%s2736 + $0x768] sm:$0xff]
    %v2975 = vld [vmem:[%s2736 + $0x770] sm:$0xff]
    %v2976 = vld [vmem:[%s2736 + $0x778] sm:$0xff]
    %v2977 = vld [vmem:[%s2736 + $0x780] sm:$0xff]
    %v2978 = vld [vmem:[%s2736 + $0x788] sm:$0xff]
    %v2979 = vld [vmem:[%s2736 + $0x790] sm:$0xff]
    %v2980 = vld [vmem:[%s2736 + $0x798] sm:$0xff]
    %v2981 = vld [vmem:[%s2736 + $0x7a0] sm:$0xff]
    %v2982 = vld [vmem:[%s2736 + $0x7a8] sm:$0xff]
    %v2983 = vld [vmem:[%s2736 + $0x7b0] sm:$0xff]
    %v2984 = vld [vmem:[%s2736 + $0x7b8] sm:$0xff]
    %v2985 = vld [vmem:[%s2736 + $0x7c0] sm:$0xff]
    %v2986 = vld [vmem:[%s2736 + $0x7c8] sm:$0xff]
    %v2987 = vld [vmem:[%s2736 + $0x7d0] sm:$0xff]
    %v2988 = vld [vmem:[%s2736 + $0x7d8] sm:$0xff]
    %v2989 = vld [vmem:[%s2736 + $0x7e0] sm:$0xff]
    %v2990 = vld [vmem:[%s2736 + $0x7e8] sm:$0xff]
    %v2991 = vld [vmem:[%s2736 + $0x7f0] sm:$0xff]
    %v2992 = vld [vmem:[%s2736 + $0x7f8] sm:$0xff]
    %2993 = vmatprep.subr.mxu0 %v2798
    %2994 = vmatpush1.msra.mxu0 %v2797
    %2995 = vmatprep.subr.mxu0 %v2794
    %2996 = vmatpush1.msra.mxu0 %v2793
    %2997 = vmatprep.subr.mxu0 %v2790
    %2998 = vmatpush1.msra.mxu0 %v2789
    %2999 = vmatprep.subr.mxu0 %v2786
    %3000 = vmatpush1.msra.mxu0 %v2785
    %3001 = vmatprep.subr.mxu0 %v2782
    %3002 = vmatpush1.msra.mxu0 %v2781
    %3003 = vmatprep.subr.mxu0 %v2778
    %3004 = vmatpush1.msra.mxu0 %v2777
    %3005 = vmatprep.subr.mxu0 %v2774
    %3006 = vmatpush1.msra.mxu0 %v2773
    %3007 = vmatprep.subr.mxu0 %v2770
    %3008 = vmatpush1.msra.mxu0 %v2769
    %3009 = vmatprep.subr.mxu0 %v2766
    %3010 = vmatpush1.msra.mxu0 %v2765
    %3011 = vmatprep.subr.mxu0 %v2762
    %3012 = vmatpush1.msra.mxu0 %v2761
    %3013 = vmatprep.subr.mxu0 %v2758
    %3014 = vmatpush1.msra.mxu0 %v2757
    %3015 = vmatprep.subr.mxu0 %v2754
    %3016 = vmatpush1.msra.mxu0 %v2753
    %3017 = vmatprep.subr.mxu0 %v2750
    %3018 = vmatpush1.msra.mxu0 %v2749
    %3019 = vmatprep.subr.mxu0 %v2746
    %3020 = vmatpush1.msra.mxu0 %v2745
    %3021 = vmatprep.subr.mxu0 %v2742
    %3022 = vmatpush1.msra.mxu0 %v2741
    %3023 = vmatprep.subr.mxu0 %v2738
    %3024 = vmatpush1.msra.mxu0 %v2737
    %3025 = vmatprep.subr.mxu0 %v2862
    %3026 = vmatpush2.msra.mxu0 %v2861
    %3027 = vmatprep.subr.mxu0 %v2858
    %3028 = vmatpush2.msra.mxu0 %v2857
    %3029 = vmatprep.subr.mxu0 %v2854
    %3030 = vmatpush2.msra.mxu0 %v2853
    %3031 = vmatprep.subr.mxu0 %v2850
    %3032 = vmatpush2.msra.mxu0 %v2849
    %3033 = vmatprep.subr.mxu0 %v2846
    %3034 = vmatpush2.msra.mxu0 %v2845
    %3035 = vmatprep.subr.mxu0 %v2842
    %3036 = vmatpush2.msra.mxu0 %v2841
    %3037 = vmatprep.subr.mxu0 %v2838
    %3038 = vmatpush2.msra.mxu0 %v2837
    %3039 = vmatprep.subr.mxu0 %v2834
    %3040 = vmatpush2.msra.mxu0 %v2833
    %3041 = vmatprep.subr.mxu0 %v2830
    %3042 = vmatpush2.msra.mxu0 %v2829
    %3043 = vmatprep.subr.mxu0 %v2826
    %3044 = vmatpush2.msra.mxu0 %v2825
    %3045 = vmatprep.subr.mxu0 %v2822
    %3046 = vmatpush2.msra.mxu0 %v2821
    %3047 = vmatprep.subr.mxu0 %v2818
    %3048 = vmatpush2.msra.mxu0 %v2817
    %3049 = vmatprep.subr.mxu0 %v2814
    %3050 = vmatpush2.msra.mxu0 %v2813
    %3051 = vmatprep.subr.mxu0 %v2810
    %3052 = vmatpush2.msra.mxu0 %v2809
    %3053 = vmatprep.subr.mxu0 %v2806
    %3054 = vmatpush2.msra.mxu0 %v2805
    %3055 = vmatprep.subr.mxu0 %v2802
    %3056 = vmatpush2.msra.mxu0 %v2801
    %3057 = vmatprep.mubr.f32.mxu0 %v2109
    %3058 = vmatmul.mubr.f32.gmra.mxu0 %v2108
    %v3059 = vpop.f32.mrf.mxu0
    %v3060 = vadd.f32 0.0, %v3059
    %v3061 = vpop.f32.mrf.mxu0
    %v3062 = vadd.f32 0.0, %v3061
    %3063 = vmatprep.mubr.f32.mxu0 %v2113
    %3064 = vmatmul.mubr.f32.gmra.mxu0 %v2112
    %v3065 = vpop.f32.mrf.mxu0
    %v3066 = vadd.f32 0.0, %v3065
    %v3067 = vpop.f32.mrf.mxu0
    %v3068 = vadd.f32 0.0, %v3067
    %3069 = vmatprep.mubr.f32.mxu0 %v2117
    %3070 = vmatmul.mubr.f32.gmra.mxu0 %v2116
    %v3071 = vpop.f32.mrf.mxu0
    %v3072 = vadd.f32 0.0, %v3071
    %v3073 = vpop.f32.mrf.mxu0
    %v3074 = vadd.f32 0.0, %v3073
    %3075 = vmatprep.mubr.f32.mxu0 %v2121
    %3076 = vmatmul.mubr.f32.gmra.mxu0 %v2120
    %v3077 = vpop.f32.mrf.mxu0
    %v3078 = vadd.f32 0.0, %v3077
    %v3079 = vpop.f32.mrf.mxu0
    %v3080 = vadd.f32 0.0, %v3079
    %3081 = vdwg.mxu0
    %3082 = vmatprep.subr.mxu0 %v2926
    %3083 = vmatpush1.msra.mxu0 %v2925
    %3084 = vmatprep.subr.mxu0 %v2922
    %3085 = vmatpush1.msra.mxu0 %v2921
    %3086 = vmatprep.subr.mxu0 %v2918
    %3087 = vmatpush1.msra.mxu0 %v2917
    %3088 = vmatprep.subr.mxu0 %v2914
    %3089 = vmatpush1.msra.mxu0 %v2913
    %3090 = vmatprep.subr.mxu0 %v2910
    %3091 = vmatpush1.msra.mxu0 %v2909
    %3092 = vmatprep.subr.mxu0 %v2906
    %3093 = vmatpush1.msra.mxu0 %v2905
    %3094 = vmatprep.subr.mxu0 %v2902
    %3095 = vmatpush1.msra.mxu0 %v2901
    %3096 = vmatprep.subr.mxu0 %v2898
    %3097 = vmatpush1.msra.mxu0 %v2897
    %3098 = vmatprep.subr.mxu0 %v2894
    %3099 = vmatpush1.msra.mxu0 %v2893
    %3100 = vmatprep.subr.mxu0 %v2890
    %3101 = vmatpush1.msra.mxu0 %v2889
    %3102 = vmatprep.subr.mxu0 %v2886
    %3103 = vmatpush1.msra.mxu0 %v2885
    %3104 = vmatprep.subr.mxu0 %v2882
    %3105 = vmatpush1.msra.mxu0 %v2881
    %3106 = vmatprep.subr.mxu0 %v2878
    %3107 = vmatpush1.msra.mxu0 %v2877
    %3108 = vmatprep.subr.mxu0 %v2874
    %3109 = vmatpush1.msra.mxu0 %v2873
    %3110 = vmatprep.subr.mxu0 %v2870
    %3111 = vmatpush1.msra.mxu0 %v2869
    %3112 = vmatprep.subr.mxu0 %v2866
    %3113 = vmatpush1.msra.mxu0 %v2865
    %3114 = vmatprep.subr.mxu0 %v2990
    %3115 = vmatpush2.msra.mxu0 %v2989
    %3116 = vmatprep.subr.mxu0 %v2986
    %3117 = vmatpush2.msra.mxu0 %v2985
    %3118 = vmatprep.subr.mxu0 %v2982
    %3119 = vmatpush2.msra.mxu0 %v2981
    %3120 = vmatprep.subr.mxu0 %v2978
    %3121 = vmatpush2.msra.mxu0 %v2977
    %3122 = vmatprep.subr.mxu0 %v2974
    %3123 = vmatpush2.msra.mxu0 %v2973
    %3124 = vmatprep.subr.mxu0 %v2970
    %3125 = vmatpush2.msra.mxu0 %v2969
    %3126 = vmatprep.subr.mxu0 %v2966
    %3127 = vmatpush2.msra.mxu0 %v2965
    %3128 = vmatprep.subr.mxu0 %v2962
    %3129 = vmatpush2.msra.mxu0 %v2961
    %3130 = vmatprep.subr.mxu0 %v2958
    %3131 = vmatpush2.msra.mxu0 %v2957
    %3132 = vmatprep.subr.mxu0 %v2954
    %3133 = vmatpush2.msra.mxu0 %v2953
    %3134 = vmatprep.subr.mxu0 %v2950
    %3135 = vmatpush2.msra.mxu0 %v2949
    %3136 = vmatprep.subr.mxu0 %v2946
    %3137 = vmatpush2.msra.mxu0 %v2945
    %3138 = vmatprep.subr.mxu0 %v2942
    %3139 = vmatpush2.msra.mxu0 %v2941
    %3140 = vmatprep.subr.mxu0 %v2938
    %3141 = vmatpush2.msra.mxu0 %v2937
    %3142 = vmatprep.subr.mxu0 %v2934
    %3143 = vmatpush2.msra.mxu0 %v2933
    %3144 = vmatprep.subr.mxu0 %v2930
    %3145 = vmatpush2.msra.mxu0 %v2929
    %3146 = vmatprep.mubr.f32.mxu0 %v2111
    %3147 = vmatmul.mubr.f32.gmra.mxu0 %v2110
    %v3148 = vpop.f32.mrf.mxu0
    %v3149 = vadd.f32 %v3060, %v3148
    %v3150 = vpop.f32.mrf.mxu0
    %v3151 = vadd.f32 %v3062, %v3150
    %3152 = vmatprep.mubr.f32.mxu0 %v2115
    %3153 = vmatmul.mubr.f32.gmra.mxu0 %v2114
    %v3154 = vpop.f32.mrf.mxu0
    %v3155 = vadd.f32 %v3066, %v3154
    %v3156 = vpop.f32.mrf.mxu0
    %v3157 = vadd.f32 %v3068, %v3156
    %3158 = vmatprep.mubr.f32.mxu0 %v2119
    %3159 = vmatmul.mubr.f32.gmra.mxu0 %v2118
    %v3160 = vpop.f32.mrf.mxu0
    %v3161 = vadd.f32 %v3072, %v3160
    %v3162 = vpop.f32.mrf.mxu0
    %v3163 = vadd.f32 %v3074, %v3162
    %3164 = vmatprep.mubr.f32.mxu0 %v2123
    %3165 = vmatmul.mubr.f32.gmra.mxu0 %v2122
    %v3166 = vpop.f32.mrf.mxu0
    %v3167 = vadd.f32 %v3078, %v3166
    %v3168 = vpop.f32.mrf.mxu0
    %v3169 = vadd.f32 %v3080, %v3168
    %3170 = vdwg.mxu0
    %3171 = vmatprep.subr.mxu0 %v2800
    %3172 = vmatpush1.msra.mxu0 %v2799
    %3173 = vmatprep.subr.mxu0 %v2796
    %3174 = vmatpush1.msra.mxu0 %v2795
    %3175 = vmatprep.subr.mxu0 %v2792
    %3176 = vmatpush1.msra.mxu0 %v2791
    %3177 = vmatprep.subr.mxu0 %v2788
    %3178 = vmatpush1.msra.mxu0 %v2787
    %3179 = vmatprep.subr.mxu0 %v2784
    %3180 = vmatpush1.msra.mxu0 %v2783
    %3181 = vmatprep.subr.mxu0 %v2780
    %3182 = vmatpush1.msra.mxu0 %v2779
    %3183 = vmatprep.subr.mxu0 %v2776
    %3184 = vmatpush1.msra.mxu0 %v2775
    %3185 = vmatprep.subr.mxu0 %v2772
    %3186 = vmatpush1.msra.mxu0 %v2771
    %3187 = vmatprep.subr.mxu0 %v2768
    %3188 = vmatpush1.msra.mxu0 %v2767
    %3189 = vmatprep.subr.mxu0 %v2764
    %3190 = vmatpush1.msra.mxu0 %v2763
    %3191 = vmatprep.subr.mxu0 %v2760
    %3192 = vmatpush1.msra.mxu0 %v2759
    %3193 = vmatprep.subr.mxu0 %v2756
    %3194 = vmatpush1.msra.mxu0 %v2755
    %3195 = vmatprep.subr.mxu0 %v2752
    %3196 = vmatpush1.msra.mxu0 %v2751
    %3197 = vmatprep.subr.mxu0 %v2748
    %3198 = vmatpush1.msra.mxu0 %v2747
    %3199 = vmatprep.subr.mxu0 %v2744
    %3200 = vmatpush1.msra.mxu0 %v2743
    %3201 = vmatprep.subr.mxu0 %v2740
    %3202 = vmatpush1.msra.mxu0 %v2739
    %3203 = vmatprep.subr.mxu0 %v2864
    %3204 = vmatpush2.msra.mxu0 %v2863
    %3205 = vmatprep.subr.mxu0 %v2860
    %3206 = vmatpush2.msra.mxu0 %v2859
    %3207 = vmatprep.subr.mxu0 %v2856
    %3208 = vmatpush2.msra.mxu0 %v2855
    %3209 = vmatprep.subr.mxu0 %v2852
    %3210 = vmatpush2.msra.mxu0 %v2851
    %3211 = vmatprep.subr.mxu0 %v2848
    %3212 = vmatpush2.msra.mxu0 %v2847
    %3213 = vmatprep.subr.mxu0 %v2844
    %3214 = vmatpush2.msra.mxu0 %v2843
    %3215 = vmatprep.subr.mxu0 %v2840
    %3216 = vmatpush2.msra.mxu0 %v2839
    %3217 = vmatprep.subr.mxu0 %v2836
    %3218 = vmatpush2.msra.mxu0 %v2835
    %3219 = vmatprep.subr.mxu0 %v2832
    %3220 = vmatpush2.msra.mxu0 %v2831
    %3221 = vmatprep.subr.mxu0 %v2828
    %3222 = vmatpush2.msra.mxu0 %v2827
    %3223 = vmatprep.subr.mxu0 %v2824
    %3224 = vmatpush2.msra.mxu0 %v2823
    %3225 = vmatprep.subr.mxu0 %v2820
    %3226 = vmatpush2.msra.mxu0 %v2819
    %3227 = vmatprep.subr.mxu0 %v2816
    %3228 = vmatpush2.msra.mxu0 %v2815
    %3229 = vmatprep.subr.mxu0 %v2812
    %3230 = vmatpush2.msra.mxu0 %v2811
    %3231 = vmatprep.subr.mxu0 %v2808
    %3232 = vmatpush2.msra.mxu0 %v2807
    %3233 = vmatprep.subr.mxu0 %v2804
    %3234 = vmatpush2.msra.mxu0 %v2803
    %3235 = vmatprep.mubr.f32.mxu0 %v2109
    %3236 = vmatmul.mubr.f32.gmra.mxu0 %v2108
    %v3237 = vpop.f32.mrf.mxu0
    %v3238 = vadd.f32 0.0, %v3237
    %v3239 = vpop.f32.mrf.mxu0
    %v3240 = vadd.f32 0.0, %v3239
    %3241 = vmatprep.mubr.f32.mxu0 %v2113
    %3242 = vmatmul.mubr.f32.gmra.mxu0 %v2112
    %v3243 = vpop.f32.mrf.mxu0
    %v3244 = vadd.f32 0.0, %v3243
    %v3245 = vpop.f32.mrf.mxu0
    %v3246 = vadd.f32 0.0, %v3245
    %3247 = vmatprep.mubr.f32.mxu0 %v2117
    %3248 = vmatmul.mubr.f32.gmra.mxu0 %v2116
    %v3249 = vpop.f32.mrf.mxu0
    %v3250 = vadd.f32 0.0, %v3249
    %v3251 = vpop.f32.mrf.mxu0
    %v3252 = vadd.f32 0.0, %v3251
    %3253 = vmatprep.mubr.f32.mxu0 %v2121
    %3254 = vmatmul.mubr.f32.gmra.mxu0 %v2120
    %v3255 = vpop.f32.mrf.mxu0
    %v3256 = vadd.f32 0.0, %v3255
    %v3257 = vpop.f32.mrf.mxu0
    %v3258 = vadd.f32 0.0, %v3257
    %3259 = vdwg.mxu0
    %3260 = vmatprep.subr.mxu0 %v2928
    %3261 = vmatpush1.msra.mxu0 %v2927
    %3262 = vmatprep.subr.mxu0 %v2924
    %3263 = vmatpush1.msra.mxu0 %v2923
    %3264 = vmatprep.subr.mxu0 %v2920
    %3265 = vmatpush1.msra.mxu0 %v2919
    %3266 = vmatprep.subr.mxu0 %v2916
    %3267 = vmatpush1.msra.mxu0 %v2915
    %3268 = vmatprep.subr.mxu0 %v2912
    %3269 = vmatpush1.msra.mxu0 %v2911
    %3270 = vmatprep.subr.mxu0 %v2908
    %3271 = vmatpush1.msra.mxu0 %v2907
    %3272 = vmatprep.subr.mxu0 %v2904
    %3273 = vmatpush1.msra.mxu0 %v2903
    %3274 = vmatprep.subr.mxu0 %v2900
    %3275 = vmatpush1.msra.mxu0 %v2899
    %3276 = vmatprep.subr.mxu0 %v2896
    %3277 = vmatpush1.msra.mxu0 %v2895
    %3278 = vmatprep.subr.mxu0 %v2892
    %3279 = vmatpush1.msra.mxu0 %v2891
    %3280 = vmatprep.subr.mxu0 %v2888
    %3281 = vmatpush1.msra.mxu0 %v2887
    %3282 = vmatprep.subr.mxu0 %v2884
    %3283 = vmatpush1.msra.mxu0 %v2883
    %3284 = vmatprep.subr.mxu0 %v2880
    %3285 = vmatpush1.msra.mxu0 %v2879
    %3286 = vmatprep.subr.mxu0 %v2876
    %3287 = vmatpush1.msra.mxu0 %v2875
    %3288 = vmatprep.subr.mxu0 %v2872
    %3289 = vmatpush1.msra.mxu0 %v2871
    %3290 = vmatprep.subr.mxu0 %v2868
    %3291 = vmatpush1.msra.mxu0 %v2867
    %3292 = vmatprep.subr.mxu0 %v2992
    %3293 = vmatpush2.msra.mxu0 %v2991
    %3294 = vmatprep.subr.mxu0 %v2988
    %3295 = vmatpush2.msra.mxu0 %v2987
    %3296 = vmatprep.subr.mxu0 %v2984
    %3297 = vmatpush2.msra.mxu0 %v2983
    %3298 = vmatprep.subr.mxu0 %v2980
    %3299 = vmatpush2.msra.mxu0 %v2979
    %3300 = vmatprep.subr.mxu0 %v2976
    %3301 = vmatpush2.msra.mxu0 %v2975
    %3302 = vmatprep.subr.mxu0 %v2972
    %3303 = vmatpush2.msra.mxu0 %v2971
    %3304 = vmatprep.subr.mxu0 %v2968
    %3305 = vmatpush2.msra.mxu0 %v2967
    %3306 = vmatprep.subr.mxu0 %v2964
    %3307 = vmatpush2.msra.mxu0 %v2963
    %3308 = vmatprep.subr.mxu0 %v2960
    %3309 = vmatpush2.msra.mxu0 %v2959
    %3310 = vmatprep.subr.mxu0 %v2956
    %3311 = vmatpush2.msra.mxu0 %v2955
    %3312 = vmatprep.subr.mxu0 %v2952
    %3313 = vmatpush2.msra.mxu0 %v2951
    %3314 = vmatprep.subr.mxu0 %v2948
    %3315 = vmatpush2.msra.mxu0 %v2947
    %3316 = vmatprep.subr.mxu0 %v2944
    %3317 = vmatpush2.msra.mxu0 %v2943
    %3318 = vmatprep.subr.mxu0 %v2940
    %3319 = vmatpush2.msra.mxu0 %v2939
    %3320 = vmatprep.subr.mxu0 %v2936
    %3321 = vmatpush2.msra.mxu0 %v2935
    %3322 = vmatprep.subr.mxu0 %v2932
    %3323 = vmatpush2.msra.mxu0 %v2931
    %3324 = vmatprep.mubr.f32.mxu0 %v2111
    %3325 = vmatmul.mubr.f32.gmra.mxu0 %v2110
    %v3326 = vpop.f32.mrf.mxu0
    %v3327 = vadd.f32 %v3238, %v3326
    %v3328 = vpop.f32.mrf.mxu0
    %v3329 = vadd.f32 %v3240, %v3328
    %3330 = vmatprep.mubr.f32.mxu0 %v2115
    %3331 = vmatmul.mubr.f32.gmra.mxu0 %v2114
    %v3332 = vpop.f32.mrf.mxu0
    %v3333 = vadd.f32 %v3244, %v3332
    %v3334 = vpop.f32.mrf.mxu0
    %v3335 = vadd.f32 %v3246, %v3334
    %3336 = vmatprep.mubr.f32.mxu0 %v2119
    %3337 = vmatmul.mubr.f32.gmra.mxu0 %v2118
    %v3338 = vpop.f32.mrf.mxu0
    %v3339 = vadd.f32 %v3250, %v3338
    %v3340 = vpop.f32.mrf.mxu0
    %v3341 = vadd.f32 %v3252, %v3340
    %3342 = vmatprep.mubr.f32.mxu0 %v2123
    %3343 = vmatmul.mubr.f32.gmra.mxu0 %v2122
    %v3344 = vpop.f32.mrf.mxu0
    %v3345 = vadd.f32 %v3256, %v3344
    %v3346 = vpop.f32.mrf.mxu0
    %v3347 = vadd.f32 %v3258, %v3346
    %3348 = vdwg.mxu0
    %s3349 = scalar_lea.vmem [#allocation4], 4096
    %v3350 = vld [vmem:[%s3349] sm:$0xff]
    %v3351 = vld [vmem:[%s3349 + $0x8] sm:$0xff]
    %v3352 = vld [vmem:[%s3349 + $0x10] sm:$0xff]
    %v3353 = vld [vmem:[%s3349 + $0x18] sm:$0xff]
    %v3354 = vld [vmem:[%s3349 + $0x20] sm:$0xff]
    %v3355 = vld [vmem:[%s3349 + $0x28] sm:$0xff]
    %v3356 = vld [vmem:[%s3349 + $0x30] sm:$0xff]
    %v3357 = vld [vmem:[%s3349 + $0x38] sm:$0xff]
    %v3358 = vld [vmem:[%s3349 + $0x40] sm:$0xff]
    %v3359 = vld [vmem:[%s3349 + $0x48] sm:$0xff]
    %v3360 = vld [vmem:[%s3349 + $0x50] sm:$0xff]
    %v3361 = vld [vmem:[%s3349 + $0x58] sm:$0xff]
    %v3362 = vld [vmem:[%s3349 + $0x60] sm:$0xff]
    %v3363 = vld [vmem:[%s3349 + $0x68] sm:$0xff]
    %v3364 = vld [vmem:[%s3349 + $0x70] sm:$0xff]
    %v3365 = vld [vmem:[%s3349 + $0x78] sm:$0xff]
    %v3366 = vld [vmem:[%s3349 + $0x80] sm:$0xff]
    %v3367 = vld [vmem:[%s3349 + $0x88] sm:$0xff]
    %v3368 = vld [vmem:[%s3349 + $0x90] sm:$0xff]
    %v3369 = vld [vmem:[%s3349 + $0x98] sm:$0xff]
    %v3370 = vld [vmem:[%s3349 + $0xa0] sm:$0xff]
    %v3371 = vld [vmem:[%s3349 + $0xa8] sm:$0xff]
    %v3372 = vld [vmem:[%s3349 + $0xb0] sm:$0xff]
    %v3373 = vld [vmem:[%s3349 + $0xb8] sm:$0xff]
    %v3374 = vld [vmem:[%s3349 + $0xc0] sm:$0xff]
    %v3375 = vld [vmem:[%s3349 + $0xc8] sm:$0xff]
    %v3376 = vld [vmem:[%s3349 + $0xd0] sm:$0xff]
    %v3377 = vld [vmem:[%s3349 + $0xd8] sm:$0xff]
    %v3378 = vld [vmem:[%s3349 + $0xe0] sm:$0xff]
    %v3379 = vld [vmem:[%s3349 + $0xe8] sm:$0xff]
    %v3380 = vld [vmem:[%s3349 + $0xf0] sm:$0xff]
    %v3381 = vld [vmem:[%s3349 + $0xf8] sm:$0xff]
    %v3382 = vld [vmem:[%s3349 + $0x100] sm:$0xff]
    %v3383 = vld [vmem:[%s3349 + $0x108] sm:$0xff]
    %v3384 = vld [vmem:[%s3349 + $0x110] sm:$0xff]
    %v3385 = vld [vmem:[%s3349 + $0x118] sm:$0xff]
    %v3386 = vld [vmem:[%s3349 + $0x120] sm:$0xff]
    %v3387 = vld [vmem:[%s3349 + $0x128] sm:$0xff]
    %v3388 = vld [vmem:[%s3349 + $0x130] sm:$0xff]
    %v3389 = vld [vmem:[%s3349 + $0x138] sm:$0xff]
    %v3390 = vld [vmem:[%s3349 + $0x140] sm:$0xff]
    %v3391 = vld [vmem:[%s3349 + $0x148] sm:$0xff]
    %v3392 = vld [vmem:[%s3349 + $0x150] sm:$0xff]
    %v3393 = vld [vmem:[%s3349 + $0x158] sm:$0xff]
    %v3394 = vld [vmem:[%s3349 + $0x160] sm:$0xff]
    %v3395 = vld [vmem:[%s3349 + $0x168] sm:$0xff]
    %v3396 = vld [vmem:[%s3349 + $0x170] sm:$0xff]
    %v3397 = vld [vmem:[%s3349 + $0x178] sm:$0xff]
    %v3398 = vld [vmem:[%s3349 + $0x180] sm:$0xff]
    %v3399 = vld [vmem:[%s3349 + $0x188] sm:$0xff]
    %v3400 = vld [vmem:[%s3349 + $0x190] sm:$0xff]
    %v3401 = vld [vmem:[%s3349 + $0x198] sm:$0xff]
    %v3402 = vld [vmem:[%s3349 + $0x1a0] sm:$0xff]
    %v3403 = vld [vmem:[%s3349 + $0x1a8] sm:$0xff]
    %v3404 = vld [vmem:[%s3349 + $0x1b0] sm:$0xff]
    %v3405 = vld [vmem:[%s3349 + $0x1b8] sm:$0xff]
    %v3406 = vld [vmem:[%s3349 + $0x1c0] sm:$0xff]
    %v3407 = vld [vmem:[%s3349 + $0x1c8] sm:$0xff]
    %v3408 = vld [vmem:[%s3349 + $0x1d0] sm:$0xff]
    %v3409 = vld [vmem:[%s3349 + $0x1d8] sm:$0xff]
    %v3410 = vld [vmem:[%s3349 + $0x1e0] sm:$0xff]
    %v3411 = vld [vmem:[%s3349 + $0x1e8] sm:$0xff]
    %v3412 = vld [vmem:[%s3349 + $0x1f0] sm:$0xff]
    %v3413 = vld [vmem:[%s3349 + $0x1f8] sm:$0xff]
    %v3414 = vld [vmem:[%s3349 + $0x200] sm:$0xff]
    %v3415 = vld [vmem:[%s3349 + $0x208] sm:$0xff]
    %v3416 = vld [vmem:[%s3349 + $0x210] sm:$0xff]
    %v3417 = vld [vmem:[%s3349 + $0x218] sm:$0xff]
    %v3418 = vld [vmem:[%s3349 + $0x220] sm:$0xff]
    %v3419 = vld [vmem:[%s3349 + $0x228] sm:$0xff]
    %v3420 = vld [vmem:[%s3349 + $0x230] sm:$0xff]
    %v3421 = vld [vmem:[%s3349 + $0x238] sm:$0xff]
    %v3422 = vld [vmem:[%s3349 + $0x240] sm:$0xff]
    %v3423 = vld [vmem:[%s3349 + $0x248] sm:$0xff]
    %v3424 = vld [vmem:[%s3349 + $0x250] sm:$0xff]
    %v3425 = vld [vmem:[%s3349 + $0x258] sm:$0xff]
    %v3426 = vld [vmem:[%s3349 + $0x260] sm:$0xff]
    %v3427 = vld [vmem:[%s3349 + $0x268] sm:$0xff]
    %v3428 = vld [vmem:[%s3349 + $0x270] sm:$0xff]
    %v3429 = vld [vmem:[%s3349 + $0x278] sm:$0xff]
    %v3430 = vld [vmem:[%s3349 + $0x280] sm:$0xff]
    %v3431 = vld [vmem:[%s3349 + $0x288] sm:$0xff]
    %v3432 = vld [vmem:[%s3349 + $0x290] sm:$0xff]
    %v3433 = vld [vmem:[%s3349 + $0x298] sm:$0xff]
    %v3434 = vld [vmem:[%s3349 + $0x2a0] sm:$0xff]
    %v3435 = vld [vmem:[%s3349 + $0x2a8] sm:$0xff]
    %v3436 = vld [vmem:[%s3349 + $0x2b0] sm:$0xff]
    %v3437 = vld [vmem:[%s3349 + $0x2b8] sm:$0xff]
    %v3438 = vld [vmem:[%s3349 + $0x2c0] sm:$0xff]
    %v3439 = vld [vmem:[%s3349 + $0x2c8] sm:$0xff]
    %v3440 = vld [vmem:[%s3349 + $0x2d0] sm:$0xff]
    %v3441 = vld [vmem:[%s3349 + $0x2d8] sm:$0xff]
    %v3442 = vld [vmem:[%s3349 + $0x2e0] sm:$0xff]
    %v3443 = vld [vmem:[%s3349 + $0x2e8] sm:$0xff]
    %v3444 = vld [vmem:[%s3349 + $0x2f0] sm:$0xff]
    %v3445 = vld [vmem:[%s3349 + $0x2f8] sm:$0xff]
    %v3446 = vld [vmem:[%s3349 + $0x300] sm:$0xff]
    %v3447 = vld [vmem:[%s3349 + $0x308] sm:$0xff]
    %v3448 = vld [vmem:[%s3349 + $0x310] sm:$0xff]
    %v3449 = vld [vmem:[%s3349 + $0x318] sm:$0xff]
    %v3450 = vld [vmem:[%s3349 + $0x320] sm:$0xff]
    %v3451 = vld [vmem:[%s3349 + $0x328] sm:$0xff]
    %v3452 = vld [vmem:[%s3349 + $0x330] sm:$0xff]
    %v3453 = vld [vmem:[%s3349 + $0x338] sm:$0xff]
    %v3454 = vld [vmem:[%s3349 + $0x340] sm:$0xff]
    %v3455 = vld [vmem:[%s3349 + $0x348] sm:$0xff]
    %v3456 = vld [vmem:[%s3349 + $0x350] sm:$0xff]
    %v3457 = vld [vmem:[%s3349 + $0x358] sm:$0xff]
    %v3458 = vld [vmem:[%s3349 + $0x360] sm:$0xff]
    %v3459 = vld [vmem:[%s3349 + $0x368] sm:$0xff]
    %v3460 = vld [vmem:[%s3349 + $0x370] sm:$0xff]
    %v3461 = vld [vmem:[%s3349 + $0x378] sm:$0xff]
    %v3462 = vld [vmem:[%s3349 + $0x380] sm:$0xff]
    %v3463 = vld [vmem:[%s3349 + $0x388] sm:$0xff]
    %v3464 = vld [vmem:[%s3349 + $0x390] sm:$0xff]
    %v3465 = vld [vmem:[%s3349 + $0x398] sm:$0xff]
    %v3466 = vld [vmem:[%s3349 + $0x3a0] sm:$0xff]
    %v3467 = vld [vmem:[%s3349 + $0x3a8] sm:$0xff]
    %v3468 = vld [vmem:[%s3349 + $0x3b0] sm:$0xff]
    %v3469 = vld [vmem:[%s3349 + $0x3b8] sm:$0xff]
    %v3470 = vld [vmem:[%s3349 + $0x3c0] sm:$0xff]
    %v3471 = vld [vmem:[%s3349 + $0x3c8] sm:$0xff]
    %v3472 = vld [vmem:[%s3349 + $0x3d0] sm:$0xff]
    %v3473 = vld [vmem:[%s3349 + $0x3d8] sm:$0xff]
    %v3474 = vld [vmem:[%s3349 + $0x3e0] sm:$0xff]
    %v3475 = vld [vmem:[%s3349 + $0x3e8] sm:$0xff]
    %v3476 = vld [vmem:[%s3349 + $0x3f0] sm:$0xff]
    %v3477 = vld [vmem:[%s3349 + $0x3f8] sm:$0xff]
    %v3478 = vld [vmem:[%s3349 + $0x400] sm:$0xff]
    %v3479 = vld [vmem:[%s3349 + $0x408] sm:$0xff]
    %v3480 = vld [vmem:[%s3349 + $0x410] sm:$0xff]
    %v3481 = vld [vmem:[%s3349 + $0x418] sm:$0xff]
    %v3482 = vld [vmem:[%s3349 + $0x420] sm:$0xff]
    %v3483 = vld [vmem:[%s3349 + $0x428] sm:$0xff]
    %v3484 = vld [vmem:[%s3349 + $0x430] sm:$0xff]
    %v3485 = vld [vmem:[%s3349 + $0x438] sm:$0xff]
    %v3486 = vld [vmem:[%s3349 + $0x440] sm:$0xff]
    %v3487 = vld [vmem:[%s3349 + $0x448] sm:$0xff]
    %v3488 = vld [vmem:[%s3349 + $0x450] sm:$0xff]
    %v3489 = vld [vmem:[%s3349 + $0x458] sm:$0xff]
    %v3490 = vld [vmem:[%s3349 + $0x460] sm:$0xff]
    %v3491 = vld [vmem:[%s3349 + $0x468] sm:$0xff]
    %v3492 = vld [vmem:[%s3349 + $0x470] sm:$0xff]
    %v3493 = vld [vmem:[%s3349 + $0x478] sm:$0xff]
    %v3494 = vld [vmem:[%s3349 + $0x480] sm:$0xff]
    %v3495 = vld [vmem:[%s3349 + $0x488] sm:$0xff]
    %v3496 = vld [vmem:[%s3349 + $0x490] sm:$0xff]
    %v3497 = vld [vmem:[%s3349 + $0x498] sm:$0xff]
    %v3498 = vld [vmem:[%s3349 + $0x4a0] sm:$0xff]
    %v3499 = vld [vmem:[%s3349 + $0x4a8] sm:$0xff]
    %v3500 = vld [vmem:[%s3349 + $0x4b0] sm:$0xff]
    %v3501 = vld [vmem:[%s3349 + $0x4b8] sm:$0xff]
    %v3502 = vld [vmem:[%s3349 + $0x4c0] sm:$0xff]
    %v3503 = vld [vmem:[%s3349 + $0x4c8] sm:$0xff]
    %v3504 = vld [vmem:[%s3349 + $0x4d0] sm:$0xff]
    %v3505 = vld [vmem:[%s3349 + $0x4d8] sm:$0xff]
    %v3506 = vld [vmem:[%s3349 + $0x4e0] sm:$0xff]
    %v3507 = vld [vmem:[%s3349 + $0x4e8] sm:$0xff]
    %v3508 = vld [vmem:[%s3349 + $0x4f0] sm:$0xff]
    %v3509 = vld [vmem:[%s3349 + $0x4f8] sm:$0xff]
    %v3510 = vld [vmem:[%s3349 + $0x500] sm:$0xff]
    %v3511 = vld [vmem:[%s3349 + $0x508] sm:$0xff]
    %v3512 = vld [vmem:[%s3349 + $0x510] sm:$0xff]
    %v3513 = vld [vmem:[%s3349 + $0x518] sm:$0xff]
    %v3514 = vld [vmem:[%s3349 + $0x520] sm:$0xff]
    %v3515 = vld [vmem:[%s3349 + $0x528] sm:$0xff]
    %v3516 = vld [vmem:[%s3349 + $0x530] sm:$0xff]
    %v3517 = vld [vmem:[%s3349 + $0x538] sm:$0xff]
    %v3518 = vld [vmem:[%s3349 + $0x540] sm:$0xff]
    %v3519 = vld [vmem:[%s3349 + $0x548] sm:$0xff]
    %v3520 = vld [vmem:[%s3349 + $0x550] sm:$0xff]
    %v3521 = vld [vmem:[%s3349 + $0x558] sm:$0xff]
    %v3522 = vld [vmem:[%s3349 + $0x560] sm:$0xff]
    %v3523 = vld [vmem:[%s3349 + $0x568] sm:$0xff]
    %v3524 = vld [vmem:[%s3349 + $0x570] sm:$0xff]
    %v3525 = vld [vmem:[%s3349 + $0x578] sm:$0xff]
    %v3526 = vld [vmem:[%s3349 + $0x580] sm:$0xff]
    %v3527 = vld [vmem:[%s3349 + $0x588] sm:$0xff]
    %v3528 = vld [vmem:[%s3349 + $0x590] sm:$0xff]
    %v3529 = vld [vmem:[%s3349 + $0x598] sm:$0xff]
    %v3530 = vld [vmem:[%s3349 + $0x5a0] sm:$0xff]
    %v3531 = vld [vmem:[%s3349 + $0x5a8] sm:$0xff]
    %v3532 = vld [vmem:[%s3349 + $0x5b0] sm:$0xff]
    %v3533 = vld [vmem:[%s3349 + $0x5b8] sm:$0xff]
    %v3534 = vld [vmem:[%s3349 + $0x5c0] sm:$0xff]
    %v3535 = vld [vmem:[%s3349 + $0x5c8] sm:$0xff]
    %v3536 = vld [vmem:[%s3349 + $0x5d0] sm:$0xff]
    %v3537 = vld [vmem:[%s3349 + $0x5d8] sm:$0xff]
    %v3538 = vld [vmem:[%s3349 + $0x5e0] sm:$0xff]
    %v3539 = vld [vmem:[%s3349 + $0x5e8] sm:$0xff]
    %v3540 = vld [vmem:[%s3349 + $0x5f0] sm:$0xff]
    %v3541 = vld [vmem:[%s3349 + $0x5f8] sm:$0xff]
    %v3542 = vld [vmem:[%s3349 + $0x600] sm:$0xff]
    %v3543 = vld [vmem:[%s3349 + $0x608] sm:$0xff]
    %v3544 = vld [vmem:[%s3349 + $0x610] sm:$0xff]
    %v3545 = vld [vmem:[%s3349 + $0x618] sm:$0xff]
    %v3546 = vld [vmem:[%s3349 + $0x620] sm:$0xff]
    %v3547 = vld [vmem:[%s3349 + $0x628] sm:$0xff]
    %v3548 = vld [vmem:[%s3349 + $0x630] sm:$0xff]
    %v3549 = vld [vmem:[%s3349 + $0x638] sm:$0xff]
    %v3550 = vld [vmem:[%s3349 + $0x640] sm:$0xff]
    %v3551 = vld [vmem:[%s3349 + $0x648] sm:$0xff]
    %v3552 = vld [vmem:[%s3349 + $0x650] sm:$0xff]
    %v3553 = vld [vmem:[%s3349 + $0x658] sm:$0xff]
    %v3554 = vld [vmem:[%s3349 + $0x660] sm:$0xff]
    %v3555 = vld [vmem:[%s3349 + $0x668] sm:$0xff]
    %v3556 = vld [vmem:[%s3349 + $0x670] sm:$0xff]
    %v3557 = vld [vmem:[%s3349 + $0x678] sm:$0xff]
    %v3558 = vld [vmem:[%s3349 + $0x680] sm:$0xff]
    %v3559 = vld [vmem:[%s3349 + $0x688] sm:$0xff]
    %v3560 = vld [vmem:[%s3349 + $0x690] sm:$0xff]
    %v3561 = vld [vmem:[%s3349 + $0x698] sm:$0xff]
    %v3562 = vld [vmem:[%s3349 + $0x6a0] sm:$0xff]
    %v3563 = vld [vmem:[%s3349 + $0x6a8] sm:$0xff]
    %v3564 = vld [vmem:[%s3349 + $0x6b0] sm:$0xff]
    %v3565 = vld [vmem:[%s3349 + $0x6b8] sm:$0xff]
    %v3566 = vld [vmem:[%s3349 + $0x6c0] sm:$0xff]
    %v3567 = vld [vmem:[%s3349 + $0x6c8] sm:$0xff]
    %v3568 = vld [vmem:[%s3349 + $0x6d0] sm:$0xff]
    %v3569 = vld [vmem:[%s3349 + $0x6d8] sm:$0xff]
    %v3570 = vld [vmem:[%s3349 + $0x6e0] sm:$0xff]
    %v3571 = vld [vmem:[%s3349 + $0x6e8] sm:$0xff]
    %v3572 = vld [vmem:[%s3349 + $0x6f0] sm:$0xff]
    %v3573 = vld [vmem:[%s3349 + $0x6f8] sm:$0xff]
    %v3574 = vld [vmem:[%s3349 + $0x700] sm:$0xff]
    %v3575 = vld [vmem:[%s3349 + $0x708] sm:$0xff]
    %v3576 = vld [vmem:[%s3349 + $0x710] sm:$0xff]
    %v3577 = vld [vmem:[%s3349 + $0x718] sm:$0xff]
    %v3578 = vld [vmem:[%s3349 + $0x720] sm:$0xff]
    %v3579 = vld [vmem:[%s3349 + $0x728] sm:$0xff]
    %v3580 = vld [vmem:[%s3349 + $0x730] sm:$0xff]
    %v3581 = vld [vmem:[%s3349 + $0x738] sm:$0xff]
    %v3582 = vld [vmem:[%s3349 + $0x740] sm:$0xff]
    %v3583 = vld [vmem:[%s3349 + $0x748] sm:$0xff]
    %v3584 = vld [vmem:[%s3349 + $0x750] sm:$0xff]
    %v3585 = vld [vmem:[%s3349 + $0x758] sm:$0xff]
    %v3586 = vld [vmem:[%s3349 + $0x760] sm:$0xff]
    %v3587 = vld [vmem:[%s3349 + $0x768] sm:$0xff]
    %v3588 = vld [vmem:[%s3349 + $0x770] sm:$0xff]
    %v3589 = vld [vmem:[%s3349 + $0x778] sm:$0xff]
    %v3590 = vld [vmem:[%s3349 + $0x780] sm:$0xff]
    %v3591 = vld [vmem:[%s3349 + $0x788] sm:$0xff]
    %v3592 = vld [vmem:[%s3349 + $0x790] sm:$0xff]
    %v3593 = vld [vmem:[%s3349 + $0x798] sm:$0xff]
    %v3594 = vld [vmem:[%s3349 + $0x7a0] sm:$0xff]
    %v3595 = vld [vmem:[%s3349 + $0x7a8] sm:$0xff]
    %v3596 = vld [vmem:[%s3349 + $0x7b0] sm:$0xff]
    %v3597 = vld [vmem:[%s3349 + $0x7b8] sm:$0xff]
    %v3598 = vld [vmem:[%s3349 + $0x7c0] sm:$0xff]
    %v3599 = vld [vmem:[%s3349 + $0x7c8] sm:$0xff]
    %v3600 = vld [vmem:[%s3349 + $0x7d0] sm:$0xff]
    %v3601 = vld [vmem:[%s3349 + $0x7d8] sm:$0xff]
    %v3602 = vld [vmem:[%s3349 + $0x7e0] sm:$0xff]
    %v3603 = vld [vmem:[%s3349 + $0x7e8] sm:$0xff]
    %v3604 = vld [vmem:[%s3349 + $0x7f0] sm:$0xff]
    %v3605 = vld [vmem:[%s3349 + $0x7f8] sm:$0xff]
    %3606 = vmatprep.subr.mxu0 %v3411
    %3607 = vmatpush1.msra.mxu0 %v3410
    %3608 = vmatprep.subr.mxu0 %v3407
    %3609 = vmatpush1.msra.mxu0 %v3406
    %3610 = vmatprep.subr.mxu0 %v3403
    %3611 = vmatpush1.msra.mxu0 %v3402
    %3612 = vmatprep.subr.mxu0 %v3399
    %3613 = vmatpush1.msra.mxu0 %v3398
    %3614 = vmatprep.subr.mxu0 %v3395
    %3615 = vmatpush1.msra.mxu0 %v3394
    %3616 = vmatprep.subr.mxu0 %v3391
    %3617 = vmatpush1.msra.mxu0 %v3390
    %3618 = vmatprep.subr.mxu0 %v3387
    %3619 = vmatpush1.msra.mxu0 %v3386
    %3620 = vmatprep.subr.mxu0 %v3383
    %3621 = vmatpush1.msra.mxu0 %v3382
    %3622 = vmatprep.subr.mxu0 %v3379
    %3623 = vmatpush1.msra.mxu0 %v3378
    %3624 = vmatprep.subr.mxu0 %v3375
    %3625 = vmatpush1.msra.mxu0 %v3374
    %3626 = vmatprep.subr.mxu0 %v3371
    %3627 = vmatpush1.msra.mxu0 %v3370
    %3628 = vmatprep.subr.mxu0 %v3367
    %3629 = vmatpush1.msra.mxu0 %v3366
    %3630 = vmatprep.subr.mxu0 %v3363
    %3631 = vmatpush1.msra.mxu0 %v3362
    %3632 = vmatprep.subr.mxu0 %v3359
    %3633 = vmatpush1.msra.mxu0 %v3358
    %3634 = vmatprep.subr.mxu0 %v3355
    %3635 = vmatpush1.msra.mxu0 %v3354
    %3636 = vmatprep.subr.mxu0 %v3351
    %3637 = vmatpush1.msra.mxu0 %v3350
    %3638 = vmatprep.subr.mxu0 %v3475
    %3639 = vmatpush2.msra.mxu0 %v3474
    %3640 = vmatprep.subr.mxu0 %v3471
    %3641 = vmatpush2.msra.mxu0 %v3470
    %3642 = vmatprep.subr.mxu0 %v3467
    %3643 = vmatpush2.msra.mxu0 %v3466
    %3644 = vmatprep.subr.mxu0 %v3463
    %3645 = vmatpush2.msra.mxu0 %v3462
    %3646 = vmatprep.subr.mxu0 %v3459
    %3647 = vmatpush2.msra.mxu0 %v3458
    %3648 = vmatprep.subr.mxu0 %v3455
    %3649 = vmatpush2.msra.mxu0 %v3454
    %3650 = vmatprep.subr.mxu0 %v3451
    %3651 = vmatpush2.msra.mxu0 %v3450
    %3652 = vmatprep.subr.mxu0 %v3447
    %3653 = vmatpush2.msra.mxu0 %v3446
    %3654 = vmatprep.subr.mxu0 %v3443
    %3655 = vmatpush2.msra.mxu0 %v3442
    %3656 = vmatprep.subr.mxu0 %v3439
    %3657 = vmatpush2.msra.mxu0 %v3438
    %3658 = vmatprep.subr.mxu0 %v3435
    %3659 = vmatpush2.msra.mxu0 %v3434
    %3660 = vmatprep.subr.mxu0 %v3431
    %3661 = vmatpush2.msra.mxu0 %v3430
    %3662 = vmatprep.subr.mxu0 %v3427
    %3663 = vmatpush2.msra.mxu0 %v3426
    %3664 = vmatprep.subr.mxu0 %v3423
    %3665 = vmatpush2.msra.mxu0 %v3422
    %3666 = vmatprep.subr.mxu0 %v3419
    %3667 = vmatpush2.msra.mxu0 %v3418
    %3668 = vmatprep.subr.mxu0 %v3415
    %3669 = vmatpush2.msra.mxu0 %v3414
    %3670 = vmatprep.mubr.f32.mxu0 %v2109
    %3671 = vmatmul.mubr.f32.gmra.mxu0 %v2108
    %v3672 = vpop.f32.mrf.mxu0
    %v3673 = vadd.f32 0.0, %v3672
    %v3674 = vpop.f32.mrf.mxu0
    %v3675 = vadd.f32 0.0, %v3674
    %3676 = vmatprep.mubr.f32.mxu0 %v2113
    %3677 = vmatmul.mubr.f32.gmra.mxu0 %v2112
    %v3678 = vpop.f32.mrf.mxu0
    %v3679 = vadd.f32 0.0, %v3678
    %v3680 = vpop.f32.mrf.mxu0
    %v3681 = vadd.f32 0.0, %v3680
    %3682 = vmatprep.mubr.f32.mxu0 %v2117
    %3683 = vmatmul.mubr.f32.gmra.mxu0 %v2116
    %v3684 = vpop.f32.mrf.mxu0
    %v3685 = vadd.f32 0.0, %v3684
    %v3686 = vpop.f32.mrf.mxu0
    %v3687 = vadd.f32 0.0, %v3686
    %3688 = vmatprep.mubr.f32.mxu0 %v2121
    %3689 = vmatmul.mubr.f32.gmra.mxu0 %v2120
    %v3690 = vpop.f32.mrf.mxu0
    %v3691 = vadd.f32 0.0, %v3690
    %v3692 = vpop.f32.mrf.mxu0
    %v3693 = vadd.f32 0.0, %v3692
    %3694 = vdwg.mxu0
    %3695 = vmatprep.subr.mxu0 %v3539
    %3696 = vmatpush1.msra.mxu0 %v3538
    %3697 = vmatprep.subr.mxu0 %v3535
    %3698 = vmatpush1.msra.mxu0 %v3534
    %3699 = vmatprep.subr.mxu0 %v3531
    %3700 = vmatpush1.msra.mxu0 %v3530
    %3701 = vmatprep.subr.mxu0 %v3527
    %3702 = vmatpush1.msra.mxu0 %v3526
    %3703 = vmatprep.subr.mxu0 %v3523
    %3704 = vmatpush1.msra.mxu0 %v3522
    %3705 = vmatprep.subr.mxu0 %v3519
    %3706 = vmatpush1.msra.mxu0 %v3518
    %3707 = vmatprep.subr.mxu0 %v3515
    %3708 = vmatpush1.msra.mxu0 %v3514
    %3709 = vmatprep.subr.mxu0 %v3511
    %3710 = vmatpush1.msra.mxu0 %v3510
    %3711 = vmatprep.subr.mxu0 %v3507
    %3712 = vmatpush1.msra.mxu0 %v3506
    %3713 = vmatprep.subr.mxu0 %v3503
    %3714 = vmatpush1.msra.mxu0 %v3502
    %3715 = vmatprep.subr.mxu0 %v3499
    %3716 = vmatpush1.msra.mxu0 %v3498
    %3717 = vmatprep.subr.mxu0 %v3495
    %3718 = vmatpush1.msra.mxu0 %v3494
    %3719 = vmatprep.subr.mxu0 %v3491
    %3720 = vmatpush1.msra.mxu0 %v3490
    %3721 = vmatprep.subr.mxu0 %v3487
    %3722 = vmatpush1.msra.mxu0 %v3486
    %3723 = vmatprep.subr.mxu0 %v3483
    %3724 = vmatpush1.msra.mxu0 %v3482
    %3725 = vmatprep.subr.mxu0 %v3479
    %3726 = vmatpush1.msra.mxu0 %v3478
    %3727 = vmatprep.subr.mxu0 %v3603
    %3728 = vmatpush2.msra.mxu0 %v3602
    %3729 = vmatprep.subr.mxu0 %v3599
    %3730 = vmatpush2.msra.mxu0 %v3598
    %3731 = vmatprep.subr.mxu0 %v3595
    %3732 = vmatpush2.msra.mxu0 %v3594
    %3733 = vmatprep.subr.mxu0 %v3591
    %3734 = vmatpush2.msra.mxu0 %v3590
    %3735 = vmatprep.subr.mxu0 %v3587
    %3736 = vmatpush2.msra.mxu0 %v3586
    %3737 = vmatprep.subr.mxu0 %v3583
    %3738 = vmatpush2.msra.mxu0 %v3582
    %3739 = vmatprep.subr.mxu0 %v3579
    %3740 = vmatpush2.msra.mxu0 %v3578
    %3741 = vmatprep.subr.mxu0 %v3575
    %3742 = vmatpush2.msra.mxu0 %v3574
    %3743 = vmatprep.subr.mxu0 %v3571
    %3744 = vmatpush2.msra.mxu0 %v3570
    %3745 = vmatprep.subr.mxu0 %v3567
    %3746 = vmatpush2.msra.mxu0 %v3566
    %3747 = vmatprep.subr.mxu0 %v3563
    %3748 = vmatpush2.msra.mxu0 %v3562
    %3749 = vmatprep.subr.mxu0 %v3559
    %3750 = vmatpush2.msra.mxu0 %v3558
    %3751 = vmatprep.subr.mxu0 %v3555
    %3752 = vmatpush2.msra.mxu0 %v3554
    %3753 = vmatprep.subr.mxu0 %v3551
    %3754 = vmatpush2.msra.mxu0 %v3550
    %3755 = vmatprep.subr.mxu0 %v3547
    %3756 = vmatpush2.msra.mxu0 %v3546
    %3757 = vmatprep.subr.mxu0 %v3543
    %3758 = vmatpush2.msra.mxu0 %v3542
    %3759 = vmatprep.mubr.f32.mxu0 %v2111
    %3760 = vmatmul.mubr.f32.gmra.mxu0 %v2110
    %v3761 = vpop.f32.mrf.mxu0
    %v3762 = vadd.f32 %v3673, %v3761
    %v3763 = vpop.f32.mrf.mxu0
    %v3764 = vadd.f32 %v3675, %v3763
    %3765 = vmatprep.mubr.f32.mxu0 %v2115
    %3766 = vmatmul.mubr.f32.gmra.mxu0 %v2114
    %v3767 = vpop.f32.mrf.mxu0
    %v3768 = vadd.f32 %v3679, %v3767
    %v3769 = vpop.f32.mrf.mxu0
    %v3770 = vadd.f32 %v3681, %v3769
    %3771 = vmatprep.mubr.f32.mxu0 %v2119
    %3772 = vmatmul.mubr.f32.gmra.mxu0 %v2118
    %v3773 = vpop.f32.mrf.mxu0
    %v3774 = vadd.f32 %v3685, %v3773
    %v3775 = vpop.f32.mrf.mxu0
    %v3776 = vadd.f32 %v3687, %v3775
    %3777 = vmatprep.mubr.f32.mxu0 %v2123
    %3778 = vmatmul.mubr.f32.gmra.mxu0 %v2122
    %v3779 = vpop.f32.mrf.mxu0
    %v3780 = vadd.f32 %v3691, %v3779
    %v3781 = vpop.f32.mrf.mxu0
    %v3782 = vadd.f32 %v3693, %v3781
    %3783 = vdwg.mxu0
    %3784 = vmatprep.subr.mxu0 %v3413
    %3785 = vmatpush1.msra.mxu0 %v3412
    %3786 = vmatprep.subr.mxu0 %v3409
    %3787 = vmatpush1.msra.mxu0 %v3408
    %3788 = vmatprep.subr.mxu0 %v3405
    %3789 = vmatpush1.msra.mxu0 %v3404
    %3790 = vmatprep.subr.mxu0 %v3401
    %3791 = vmatpush1.msra.mxu0 %v3400
    %3792 = vmatprep.subr.mxu0 %v3397
    %3793 = vmatpush1.msra.mxu0 %v3396
    %3794 = vmatprep.subr.mxu0 %v3393
    %3795 = vmatpush1.msra.mxu0 %v3392
    %3796 = vmatprep.subr.mxu0 %v3389
    %3797 = vmatpush1.msra.mxu0 %v3388
    %3798 = vmatprep.subr.mxu0 %v3385
    %3799 = vmatpush1.msra.mxu0 %v3384
    %3800 = vmatprep.subr.mxu0 %v3381
    %3801 = vmatpush1.msra.mxu0 %v3380
    %3802 = vmatprep.subr.mxu0 %v3377
    %3803 = vmatpush1.msra.mxu0 %v3376
    %3804 = vmatprep.subr.mxu0 %v3373
    %3805 = vmatpush1.msra.mxu0 %v3372
    %3806 = vmatprep.subr.mxu0 %v3369
    %3807 = vmatpush1.msra.mxu0 %v3368
    %3808 = vmatprep.subr.mxu0 %v3365
    %3809 = vmatpush1.msra.mxu0 %v3364
    %3810 = vmatprep.subr.mxu0 %v3361
    %3811 = vmatpush1.msra.mxu0 %v3360
    %3812 = vmatprep.subr.mxu0 %v3357
    %3813 = vmatpush1.msra.mxu0 %v3356
    %3814 = vmatprep.subr.mxu0 %v3353
    %3815 = vmatpush1.msra.mxu0 %v3352
    %3816 = vmatprep.subr.mxu0 %v3477
    %3817 = vmatpush2.msra.mxu0 %v3476
    %3818 = vmatprep.subr.mxu0 %v3473
    %3819 = vmatpush2.msra.mxu0 %v3472
    %3820 = vmatprep.subr.mxu0 %v3469
    %3821 = vmatpush2.msra.mxu0 %v3468
    %3822 = vmatprep.subr.mxu0 %v3465
    %3823 = vmatpush2.msra.mxu0 %v3464
    %3824 = vmatprep.subr.mxu0 %v3461
    %3825 = vmatpush2.msra.mxu0 %v3460
    %3826 = vmatprep.subr.mxu0 %v3457
    %3827 = vmatpush2.msra.mxu0 %v3456
    %3828 = vmatprep.subr.mxu0 %v3453
    %3829 = vmatpush2.msra.mxu0 %v3452
    %3830 = vmatprep.subr.mxu0 %v3449
    %3831 = vmatpush2.msra.mxu0 %v3448
    %3832 = vmatprep.subr.mxu0 %v3445
    %3833 = vmatpush2.msra.mxu0 %v3444
    %3834 = vmatprep.subr.mxu0 %v3441
    %3835 = vmatpush2.msra.mxu0 %v3440
    %3836 = vmatprep.subr.mxu0 %v3437
    %3837 = vmatpush2.msra.mxu0 %v3436
    %3838 = vmatprep.subr.mxu0 %v3433
    %3839 = vmatpush2.msra.mxu0 %v3432
    %3840 = vmatprep.subr.mxu0 %v3429
    %3841 = vmatpush2.msra.mxu0 %v3428
    %3842 = vmatprep.subr.mxu0 %v3425
    %3843 = vmatpush2.msra.mxu0 %v3424
    %3844 = vmatprep.subr.mxu0 %v3421
    %3845 = vmatpush2.msra.mxu0 %v3420
    %3846 = vmatprep.subr.mxu0 %v3417
    %3847 = vmatpush2.msra.mxu0 %v3416
    %3848 = vmatprep.mubr.f32.mxu0 %v2109
    %3849 = vmatmul.mubr.f32.gmra.mxu0 %v2108
    %v3850 = vpop.f32.mrf.mxu0
    %v3851 = vadd.f32 0.0, %v3850
    %v3852 = vpop.f32.mrf.mxu0
    %v3853 = vadd.f32 0.0, %v3852
    %3854 = vmatprep.mubr.f32.mxu0 %v2113
    %3855 = vmatmul.mubr.f32.gmra.mxu0 %v2112
    %v3856 = vpop.f32.mrf.mxu0
    %v3857 = vadd.f32 0.0, %v3856
    %v3858 = vpop.f32.mrf.mxu0
    %v3859 = vadd.f32 0.0, %v3858
    %3860 = vmatprep.mubr.f32.mxu0 %v2117
    %3861 = vmatmul.mubr.f32.gmra.mxu0 %v2116
    %v3862 = vpop.f32.mrf.mxu0
    %v3863 = vadd.f32 0.0, %v3862
    %v3864 = vpop.f32.mrf.mxu0
    %v3865 = vadd.f32 0.0, %v3864
    %3866 = vmatprep.mubr.f32.mxu0 %v2121
    %3867 = vmatmul.mubr.f32.gmra.mxu0 %v2120
    %v3868 = vpop.f32.mrf.mxu0
    %v3869 = vadd.f32 0.0, %v3868
    %v3870 = vpop.f32.mrf.mxu0
    %v3871 = vadd.f32 0.0, %v3870
    %3872 = vdwg.mxu0
    %3873 = vmatprep.subr.mxu0 %v3541
    %3874 = vmatpush1.msra.mxu0 %v3540
    %3875 = vmatprep.subr.mxu0 %v3537
    %3876 = vmatpush1.msra.mxu0 %v3536
    %3877 = vmatprep.subr.mxu0 %v3533
    %3878 = vmatpush1.msra.mxu0 %v3532
    %3879 = vmatprep.subr.mxu0 %v3529
    %3880 = vmatpush1.msra.mxu0 %v3528
    %3881 = vmatprep.subr.mxu0 %v3525
    %3882 = vmatpush1.msra.mxu0 %v3524
    %3883 = vmatprep.subr.mxu0 %v3521
    %3884 = vmatpush1.msra.mxu0 %v3520
    %3885 = vmatprep.subr.mxu0 %v3517
    %3886 = vmatpush1.msra.mxu0 %v3516
    %3887 = vmatprep.subr.mxu0 %v3513
    %3888 = vmatpush1.msra.mxu0 %v3512
    %3889 = vmatprep.subr.mxu0 %v3509
    %3890 = vmatpush1.msra.mxu0 %v3508
    %3891 = vmatprep.subr.mxu0 %v3505
    %3892 = vmatpush1.msra.mxu0 %v3504
    %3893 = vmatprep.subr.mxu0 %v3501
    %3894 = vmatpush1.msra.mxu0 %v3500
    %3895 = vmatprep.subr.mxu0 %v3497
    %3896 = vmatpush1.msra.mxu0 %v3496
    %3897 = vmatprep.subr.mxu0 %v3493
    %3898 = vmatpush1.msra.mxu0 %v3492
    %3899 = vmatprep.subr.mxu0 %v3489
    %3900 = vmatpush1.msra.mxu0 %v3488
    %3901 = vmatprep.subr.mxu0 %v3485
    %3902 = vmatpush1.msra.mxu0 %v3484
    %3903 = vmatprep.subr.mxu0 %v3481
    %3904 = vmatpush1.msra.mxu0 %v3480
    %3905 = vmatprep.subr.mxu0 %v3605
    %3906 = vmatpush2.msra.mxu0 %v3604
    %3907 = vmatprep.subr.mxu0 %v3601
    %3908 = vmatpush2.msra.mxu0 %v3600
    %3909 = vmatprep.subr.mxu0 %v3597
    %3910 = vmatpush2.msra.mxu0 %v3596
    %3911 = vmatprep.subr.mxu0 %v3593
    %3912 = vmatpush2.msra.mxu0 %v3592
    %3913 = vmatprep.subr.mxu0 %v3589
    %3914 = vmatpush2.msra.mxu0 %v3588
    %3915 = vmatprep.subr.mxu0 %v3585
    %3916 = vmatpush2.msra.mxu0 %v3584
    %3917 = vmatprep.subr.mxu0 %v3581
    %3918 = vmatpush2.msra.mxu0 %v3580
    %3919 = vmatprep.subr.mxu0 %v3577
    %3920 = vmatpush2.msra.mxu0 %v3576
    %3921 = vmatprep.subr.mxu0 %v3573
    %3922 = vmatpush2.msra.mxu0 %v3572
    %3923 = vmatprep.subr.mxu0 %v3569
    %3924 = vmatpush2.msra.mxu0 %v3568
    %3925 = vmatprep.subr.mxu0 %v3565
    %3926 = vmatpush2.msra.mxu0 %v3564
    %3927 = vmatprep.subr.mxu0 %v3561
    %3928 = vmatpush2.msra.mxu0 %v3560
    %3929 = vmatprep.subr.mxu0 %v3557
    %3930 = vmatpush2.msra.mxu0 %v3556
    %3931 = vmatprep.subr.mxu0 %v3553
    %3932 = vmatpush2.msra.mxu0 %v3552
    %3933 = vmatprep.subr.mxu0 %v3549
    %3934 = vmatpush2.msra.mxu0 %v3548
    %3935 = vmatprep.subr.mxu0 %v3545
    %3936 = vmatpush2.msra.mxu0 %v3544
    %3937 = vmatprep.mubr.f32.mxu0 %v2111
    %3938 = vmatmul.mubr.f32.gmra.mxu0 %v2110
    %v3939 = vpop.f32.mrf.mxu0
    %v3940 = vadd.f32 %v3851, %v3939
    %v3941 = vpop.f32.mrf.mxu0
    %v3942 = vadd.f32 %v3853, %v3941
    %3943 = vmatprep.mubr.f32.mxu0 %v2115
    %3944 = vmatmul.mubr.f32.gmra.mxu0 %v2114
    %v3945 = vpop.f32.mrf.mxu0
    %v3946 = vadd.f32 %v3857, %v3945
    %v3947 = vpop.f32.mrf.mxu0
    %v3948 = vadd.f32 %v3859, %v3947
    %3949 = vmatprep.mubr.f32.mxu0 %v2119
    %3950 = vmatmul.mubr.f32.gmra.mxu0 %v2118
    %v3951 = vpop.f32.mrf.mxu0
    %v3952 = vadd.f32 %v3863, %v3951
    %v3953 = vpop.f32.mrf.mxu0
    %v3954 = vadd.f32 %v3865, %v3953
    %3955 = vmatprep.mubr.f32.mxu0 %v2123
    %3956 = vmatmul.mubr.f32.gmra.mxu0 %v2122
    %v3957 = vpop.f32.mrf.mxu0
    %v3958 = vadd.f32 %v3869, %v3957
    %v3959 = vpop.f32.mrf.mxu0
    %v3960 = vadd.f32 %v3871, %v3959
    %3961 = vdwg.mxu0
    %v3978 = vrot.slane %v2536, 7
    %v3979 = vrot.slane %v2538, 7
    %v3980 = vrot.slane %v2714, 7
    %v3981 = vrot.slane %v2716, 7
    %v3982 = vrot.slane %v2542, 7
    %v3983 = vsel %vm1930, %v3978, %v3982
    %v3984 = vrot.slane %v2544, 7
    %v3985 = vsel %vm1930, %v3979, %v3984
    %v3986 = vrot.slane %v2720, 7
    %v3987 = vsel %vm1930, %v3980, %v3986
    %v3988 = vrot.slane %v2722, 7
    %v3989 = vsel %vm1930, %v3981, %v3988
    %v3990 = vrot.slane %v2548, 7
    %v3991 = vrot.slane %v2550, 7
    %v3992 = vrot.slane %v2726, 7
    %v3993 = vrot.slane %v2728, 7
    %v3994 = vrot.slane %v2554, 7
    %v3995 = vsel %vm1930, %v3990, %v3994
    %v3996 = vrot.slane %v2556, 7
    %v3997 = vsel %vm1930, %v3991, %v3996
    %v3998 = vrot.slane %v2732, 7
    %v3999 = vsel %vm1930, %v3992, %v3998
    %v4000 = vrot.slane %v2734, 7
    %v4001 = vsel %vm1930, %v3993, %v4000
    %v4018 = vsel %vm1930, 0.0, %v3978
    %v4019 = vsel %vm1930, 0.0, %v3979
    %v4020 = vsel %vm1930, 0.0, %v3980
    %v4021 = vsel %vm1930, 0.0, %v3981
    %v4022 = vsel %vm1930, 0.0, %v3990
    %v4023 = vsel %vm1930, 0.0, %v3991
    %v4024 = vsel %vm1930, 0.0, %v3992
    %v4025 = vsel %vm1930, 0.0, %v3993
    %v4042 = vrot.slane %v3762, 1
    %v4043 = vrot.slane %v3768, 1
    %v4044 = vsel %vm1995, %v4042, %v4043
    %v4045 = vrot.slane %v3764, 1
    %v4046 = vrot.slane %v3770, 1
    %v4047 = vsel %vm1995, %v4045, %v4046
    %v4048 = vrot.slane %v3940, 1
    %v4049 = vrot.slane %v3946, 1
    %v4050 = vsel %vm1995, %v4048, %v4049
    %v4051 = vrot.slane %v3942, 1
    %v4052 = vrot.slane %v3948, 1
    %v4053 = vsel %vm1995, %v4051, %v4052
    %v4054 = vrot.slane %v3774, 1
    %v4055 = vrot.slane %v3780, 1
    %v4056 = vsel %vm1995, %v4054, %v4055
    %v4057 = vrot.slane %v3776, 1
    %v4058 = vrot.slane %v3782, 1
    %v4059 = vsel %vm1995, %v4057, %v4058
    %v4060 = vrot.slane %v3952, 1
    %v4061 = vrot.slane %v3958, 1
    %v4062 = vsel %vm1995, %v4060, %v4061
    %v4063 = vrot.slane %v3954, 1
    %v4064 = vrot.slane %v3960, 1
    %v4065 = vsel %vm1995, %v4063, %v4064
    %v4082 = vsel %vm1995, %v4043, 0.0
    %v4083 = vsel %vm1995, %v4046, 0.0
    %v4084 = vsel %vm1995, %v4049, 0.0
    %v4085 = vsel %vm1995, %v4052, 0.0
    %v4086 = vsel %vm1995, %v4055, 0.0
    %v4087 = vsel %vm1995, %v4058, 0.0
    %v4088 = vsel %vm1995, %v4061, 0.0
    %v4089 = vsel %vm1995, %v4064, 0.0
    %v4090 = vadd.f32 %v4018, %v4044
    %v4091 = vadd.f32 %v4019, %v4047
    %v4092 = vadd.f32 %v4020, %v4050
    %v4093 = vadd.f32 %v4021, %v4053
    %v4094 = vadd.f32 %v3983, %v4082
    %v4095 = vadd.f32 %v3985, %v4083
    %v4096 = vadd.f32 %v3987, %v4084
    %v4097 = vadd.f32 %v3989, %v4085
    %v4098 = vadd.f32 %v4022, %v4056
    %v4099 = vadd.f32 %v4023, %v4059
    %v4100 = vadd.f32 %v4024, %v4062
    %v4101 = vadd.f32 %v4025, %v4065
    %v4102 = vadd.f32 %v3995, %v4086
    %v4103 = vadd.f32 %v3997, %v4087
    %v4104 = vadd.f32 %v3999, %v4088
    %v4105 = vadd.f32 %v4001, %v4089
    %v4106 = vadd.f32 %v4090, %v3149
    %v4107 = vadd.f32 %v4091, %v3151
    %v4108 = vadd.f32 %v4092, %v3327
    %v4109 = vadd.f32 %v4093, %v3329
    %v4110 = vadd.f32 %v4094, %v3155
    %v4111 = vadd.f32 %v4095, %v3157
    %v4112 = vadd.f32 %v4096, %v3333
    %v4113 = vadd.f32 %v4097, %v3335
    %v4114 = vadd.f32 %v4098, %v3161
    %v4115 = vadd.f32 %v4099, %v3163
    %v4116 = vadd.f32 %v4100, %v3339
    %v4117 = vadd.f32 %v4101, %v3341
    %v4118 = vadd.f32 %v4102, %v3167
    %v4119 = vadd.f32 %v4103, %v3169
    %v4120 = vadd.f32 %v4104, %v3345
    %v4121 = vadd.f32 %v4105, %v3347
    %v4122 = vlaneseq
    %v4123 = vshrl.u32 %v4122, 7
    %v4124 = vsub.s32 1, %v4123
    %v4125 = vrot.slane %v72, %v4124
    %v4126 = vlaneseq
    %v4127 = vshrl.u32 %v4126, 7
    %v4128 = vsub.s32 1, %v4127
    %v4129 = vrot.slane %v73, %v4128
    %v4130 = vlaneseq
    %v4131 = vshrl.u32 %v4130, 7
    %v4132 = vsub.s32 1, %v4131
    %v4133 = vrot.slane %v74, %v4132
    %v4134 = vlaneseq
    %v4135 = vshrl.u32 %v4134, 7
    %v4136 = vsub.s32 1, %v4135
    %v4137 = vrot.slane %v75, %v4136
    %v4138 = vadd.f32 %v4106, %v4125
    %v4139 = vadd.f32 %v4107, %v4129
    %v4140 = vadd.f32 %v4108, %v4133
    %v4141 = vadd.f32 %v4109, %v4137
    %v4142 = vadd.f32 %v4110, %v4125
    %v4143 = vadd.f32 %v4111, %v4129
    %v4144 = vadd.f32 %v4112, %v4133
    %v4145 = vadd.f32 %v4113, %v4137
    %v4146 = vadd.f32 %v4114, %v4125
    %v4147 = vadd.f32 %v4115, %v4129
    %v4148 = vadd.f32 %v4116, %v4133
    %v4149 = vadd.f32 %v4117, %v4137
    %v4150 = vadd.f32 %v4118, %v4125
    %v4151 = vadd.f32 %v4119, %v4129
    %v4152 = vadd.f32 %v4120, %v4133
    %v4153 = vadd.f32 %v4121, %v4137
    %v4154 = vadd.f32 %v4138, %v4142
    %v4155 = vrot.slane %v4154, 4
    %v4156 = vadd.f32 %v4154, %v4155
    %v4157 = vrot.slane %v4156, 2
    %v4158 = vadd.f32 %v4156, %v4157
    %v4159 = vrot.slane %v4158, 1
    %v4160 = vadd.f32 %v4158, %v4159
    %v4161 = vadd.f32 %v4139, %v4143
    %v4162 = vrot.slane %v4161, 4
    %v4163 = vadd.f32 %v4161, %v4162
    %v4164 = vrot.slane %v4163, 2
    %v4165 = vadd.f32 %v4163, %v4164
    %v4166 = vrot.slane %v4165, 1
    %v4167 = vadd.f32 %v4165, %v4166
    %v4168 = vadd.f32 %v4140, %v4144
    %v4169 = vrot.slane %v4168, 4
    %v4170 = vadd.f32 %v4168, %v4169
    %v4171 = vrot.slane %v4170, 2
    %v4172 = vadd.f32 %v4170, %v4171
    %v4173 = vrot.slane %v4172, 1
    %v4174 = vadd.f32 %v4172, %v4173
    %v4175 = vadd.f32 %v4141, %v4145
    %v4176 = vrot.slane %v4175, 4
    %v4177 = vadd.f32 %v4175, %v4176
    %v4178 = vrot.slane %v4177, 2
    %v4179 = vadd.f32 %v4177, %v4178
    %v4180 = vrot.slane %v4179, 1
    %v4181 = vadd.f32 %v4179, %v4180
    %v4182 = vadd.f32 %v4146, %v4150
    %v4183 = vrot.slane %v4182, 4
    %v4184 = vadd.f32 %v4182, %v4183
    %v4185 = vrot.slane %v4184, 2
    %v4186 = vadd.f32 %v4184, %v4185
    %v4187 = vrot.slane %v4186, 1
    %v4188 = vadd.f32 %v4186, %v4187
    %v4189 = vadd.f32 %v4147, %v4151
    %v4190 = vrot.slane %v4189, 4
    %v4191 = vadd.f32 %v4189, %v4190
    %v4192 = vrot.slane %v4191, 2
    %v4193 = vadd.f32 %v4191, %v4192
    %v4194 = vrot.slane %v4193, 1
    %v4195 = vadd.f32 %v4193, %v4194
    %v4196 = vadd.f32 %v4148, %v4152
    %v4197 = vrot.slane %v4196, 4
    %v4198 = vadd.f32 %v4196, %v4197
    %v4199 = vrot.slane %v4198, 2
    %v4200 = vadd.f32 %v4198, %v4199
    %v4201 = vrot.slane %v4200, 1
    %v4202 = vadd.f32 %v4200, %v4201
    %v4203 = vadd.f32 %v4149, %v4153
    %v4204 = vrot.slane %v4203, 4
    %v4205 = vadd.f32 %v4203, %v4204
    %v4206 = vrot.slane %v4205, 2
    %v4207 = vadd.f32 %v4205, %v4206
    %v4208 = vrot.slane %v4207, 1
    %v4209 = vadd.f32 %v4207, %v4208
    %v4210 = vlaneseq
    %v4211 = vshrl.u32 %v4210, 7
    %v4212 = vsub.s32 2, %v4211
    %v4213 = vrot.slane %v72, %v4212
    %v4214 = vlaneseq
    %v4215 = vshrl.u32 %v4214, 7
    %v4216 = vsub.s32 2, %v4215
    %v4217 = vrot.slane %v73, %v4216
    %v4218 = vlaneseq
    %v4219 = vshrl.u32 %v4218, 7
    %v4220 = vsub.s32 2, %v4219
    %v4221 = vrot.slane %v74, %v4220
    %v4222 = vlaneseq
    %v4223 = vshrl.u32 %v4222, 7
    %v4224 = vsub.s32 2, %v4223
    %v4225 = vrot.slane %v75, %v4224
    %v4226 = vmul.f32 %v4160, %v4213
    %v4227 = vmul.f32 %v4167, %v4217
    %v4228 = vmul.f32 %v4174, %v4221
    %v4229 = vmul.f32 %v4181, %v4225
    %v4230 = vmul.f32 %v4188, %v4213
    %v4231 = vmul.f32 %v4195, %v4217
    %v4232 = vmul.f32 %v4202, %v4221
    %v4233 = vmul.f32 %v4209, %v4225
    %v4242 = vrot.slane %v4230, 7
    %vm4243 = vcmask 1041409
    %v4244 = vsel %vm4243, %v4242, %v4226
    %v4245 = vrot.slane %v4231, 7
    %v4246 = vsel %vm4243, %v4245, %v4227
    %v4247 = vrot.slane %v4232, 7
    %v4248 = vsel %vm4243, %v4247, %v4228
    %v4249 = vrot.slane %v4233, 7
    %v4250 = vsel %vm4243, %v4249, %v4229
    %vm4255 = vcmask 1041408
    %v4256 = vsel %vm4255, %v4244, 0.0
    %v4257 = vsel %vm4255, %v4246, 0.0
    %v4258 = vadd.f32 %v4256, %v4257
    %v4259 = vsel %vm4255, %v4248, 0.0
    %v4260 = vadd.f32 %v4258, %v4259
    %v4261 = vsel %vm4255, %v4250, 0.0
    %v4262 = vadd.f32 %v4260, %v4261
    %4263 = vadd.xlane.f32.xlu0 %v4262
    %v4264 = vpop.xlane.xlu0 %4263
    %v4265 = vlaneseq
    %v4266 = vshrl.u32 %v4265, 7
    %v4267 = vsub.s32 6, %v4266
    %v4268 = vrot.slane %v72, %v4267
    %v4269 = vadd.f32 %v4264, %v4268
    %v4270 = vmax.f32 %v4269, 0.0
    %4272 = vset.pattern.permute.xlu0 0
    %4273 = vperm.xlu0 %4272, %v4270
    %v4274 = vpop.permute.xlu0 %4273
    %v4276 = vlaneseq
    %v4277 = vshrl.u32 %v4276, 7
    %v4278 = vsub.s32 4, %v4277
    %v4279 = vrot.slane %v72, %v4278
    %v4280 = vmul.f32 %v4274, %v4279
    %v4281 = vlaneseq
    %v4282 = vshrl.u32 %v4281, 7
    %v4283 = vsub.s32 3, %v4282
    %v4284 = vrot.slane %v72, %v4283
    %v4285 = vlaneseq
    %v4286 = vshrl.u32 %v4285, 7
    %v4287 = vsub.s32 3, %v4286
    %v4288 = vrot.slane %v73, %v4287
    %v4289 = vlaneseq
    %v4290 = vshrl.u32 %v4289, 7
    %v4291 = vsub.s32 3, %v4290
    %v4292 = vrot.slane %v74, %v4291
    %v4293 = vlaneseq
    %v4294 = vshrl.u32 %v4293, 7
    %v4295 = vsub.s32 3, %v4294
    %v4296 = vrot.slane %v75, %v4295
    %v4297 = vmul.f32 %v4160, %v4284
    %v4298 = vmul.f32 %v4167, %v4288
    %v4299 = vmul.f32 %v4174, %v4292
    %v4300 = vmul.f32 %v4181, %v4296
    %v4301 = vmul.f32 %v4188, %v4284
    %v4302 = vmul.f32 %v4195, %v4288
    %v4303 = vmul.f32 %v4202, %v4292
    %v4304 = vmul.f32 %v4209, %v4296
    %v4313 = vrot.slane %v4301, 7
    %v4314 = vsel %vm4243, %v4313, %v4297
    %v4315 = vrot.slane %v4302, 7
    %v4316 = vsel %vm4243, %v4315, %v4298
    %v4317 = vrot.slane %v4303, 7
    %v4318 = vsel %vm4243, %v4317, %v4299
    %v4319 = vrot.slane %v4304, 7
    %v4320 = vsel %vm4243, %v4319, %v4300
    %v4325 = vsel %vm4255, %v4314, 0.0
    %v4326 = vsel %vm4255, %v4316, 0.0
    %v4327 = vadd.f32 %v4325, %v4326
    %v4328 = vsel %vm4255, %v4318, 0.0
    %v4329 = vadd.f32 %v4327, %v4328
    %v4330 = vsel %vm4255, %v4320, 0.0
    %v4331 = vadd.f32 %v4329, %v4330
    %4332 = vadd.xlane.f32.xlu0 %v4331
    %v4333 = vpop.xlane.xlu0 %4332
    %v4334 = vadd.f32 %v4333, %v4268
    %v4335 = vmax.f32 %v4334, 0.0
    %4337 = vset.pattern.permute.xlu0 1
    %4338 = vperm.xlu0 %4337, %v4335
    %v4339 = vpop.permute.xlu0 %4338
    %v4341 = vlaneseq
    %v4342 = vshrl.u32 %v4341, 7
    %v4343 = vsub.s32 5, %v4342
    %v4344 = vrot.slane %v72, %v4343
    %v4345 = vmul.f32 %v4339, %v4344
    %v4346 = vadd.f32 %v4280, %v4345
    %v4347 = vlaneseq
    %v4348 = vshrl.u32 %v4347, 7
    %v4349 = vsub.s32 7, %v4348
    %v4350 = vrot.slane %v72, %v4349
    %v4351 = vadd.f32 %v4346, %v4350
    %v4352 = vxor.u32 %v4351, 2147483648
    %v4353 = vmul.f32 %v4352, 1.442695
    %v4354 = vpow.pop %v4353
    %v4355 = vadd.f32 %v4354, 1.0
    %v4356 = vrcp.pop %v4355
    %v4357 = vmul.f32 1.0, %v4356
    %4359 = vrot.lane.b32.xlu0 %v4357, 32
    %v4360 = vpop.permute.xlu0 %4359
    %4362 = vrot.lane.b32.xlu0 %v4357, 64
    %v4363 = vpop.permute.xlu0 %4362
    %4365 = vrot.lane.b32.xlu0 %v4357, 96
    %v4366 = vpop.permute.xlu0 %4365
    %vm4368 = vcmask 261120
    %v4369 = vsel %vm4368, %v4357, %v4360
    %vm4370 = vcmask 523264
    %v4371 = vsel %vm4370, %v4369, %v4363
    %vm4372 = vcmask 785408
    %v4373 = vsel %vm4372, %v4371, %v4366
    %v4375 = vcombine.low %v4373, %v4373
    %v4377 = vunpack.c.l.s4 1966171168
    %v4378 = vunpack.c.0.s8 %v4377
    %v4379 = vlaneseq
    %v4380 = vshrl.u32 %v4379, 7
    %v4381 = vsub.s32 %v4378, %v4380
    %v4382 = vrot.slane %v4375, %v4381
    %v4383 = vcombine.low %v4382, %v4382
    %v4384 = vcombine.high %v4382, %v4382
    %v4386 = vunpack.c.l.s4 1966171168
    %v4387 = vunpack.c.0.s8 %v4386
    %v4388 = vlaneseq
    %v4389 = vshrl.u32 %v4388, 7
    %v4390 = vsub.s32 %v4387, %v4389
    %v4391 = vrot.slane %v4383, %v4390
    %v4393 = vunpack.c.l.s4 1966171168
    %v4394 = vunpack.c.0.s8 %v4393
    %v4395 = vlaneseq
    %v4396 = vshrl.u32 %v4395, 7
    %v4397 = vsub.s32 %v4394, %v4396
    %v4398 = vrot.slane %v4384, %v4397
    %v4399 = vlaneseq
    %v4400 = vshrl.u32 %v4399, 7
    %v4401 = vsub.s32 0, %v4400
    %v4402 = vrot.slane %v4391, %v4401
    %v4403 = vlaneseq
    %v4404 = vshrl.u32 %v4403, 7
    %v4405 = vsub.s32 1, %v4404
    %v4406 = vrot.slane %v4391, %v4405
    %v4407 = vlaneseq
    %v4408 = vshrl.u32 %v4407, 7
    %v4409 = vsub.s32 2, %v4408
    %v4410 = vrot.slane %v4391, %v4409
    %v4411 = vlaneseq
    %v4412 = vshrl.u32 %v4411, 7
    %v4413 = vsub.s32 3, %v4412
    %v4414 = vrot.slane %v4391, %v4413
    %v4415 = vlaneseq
    %v4416 = vshrl.u32 %v4415, 7
    %v4417 = vsub.s32 0, %v4416
    %v4418 = vrot.slane %v4398, %v4417
    %v4419 = vlaneseq
    %v4420 = vshrl.u32 %v4419, 7
    %v4421 = vsub.s32 1, %v4420
    %v4422 = vrot.slane %v4398, %v4421
    %v4423 = vlaneseq
    %v4424 = vshrl.u32 %v4423, 7
    %v4425 = vsub.s32 2, %v4424
    %v4426 = vrot.slane %v4398, %v4425
    %v4427 = vlaneseq
    %v4428 = vshrl.u32 %v4427, 7
    %v4429 = vsub.s32 3, %v4428
    %v4430 = vrot.slane %v4398, %v4429
    %v4439 = vmul.f32 %v4138, %v4402
    %v4440 = vmul.f32 %v4139, %v4406
    %v4441 = vmul.f32 %v4140, %v4410
    %v4442 = vmul.f32 %v4141, %v4414
    %v4443 = vmul.f32 %v4142, %v4402
    %v4444 = vmul.f32 %v4143, %v4406
    %v4445 = vmul.f32 %v4144, %v4410
    %v4446 = vmul.f32 %v4145, %v4414
    %v4447 = vmul.f32 %v4146, %v4418
    %v4448 = vmul.f32 %v4147, %v4422
    %v4449 = vmul.f32 %v4148, %v4426
    %v4450 = vmul.f32 %v4149, %v4430
    %v4451 = vmul.f32 %v4150, %v4418
    %v4452 = vmul.f32 %v4151, %v4422
    %v4453 = vmul.f32 %v4152, %v4426
    %v4454 = vmul.f32 %v4153, %v4430
    %v4455 = vadd.f32 %v4439, %v56
    %v4456 = vadd.f32 %v4440, %v57
    %v4457 = vadd.f32 %v4441, %v58
    %v4458 = vadd.f32 %v4442, %v59
    %v4459 = vadd.f32 %v4443, %v60
    %v4460 = vadd.f32 %v4444, %v61
    %v4461 = vadd.f32 %v4445, %v62
    %v4462 = vadd.f32 %v4446, %v63
    %v4463 = vadd.f32 %v4447, %v64
    %v4464 = vadd.f32 %v4448, %v65
    %v4465 = vadd.f32 %v4449, %v66
    %v4466 = vadd.f32 %v4450, %v67
    %v4467 = vadd.f32 %v4451, %v68
    %v4468 = vadd.f32 %v4452, %v69
    %v4469 = vadd.f32 %v4453, %v70
    %v4470 = vadd.f32 %v4454, %v71
    %4471 = vst [vmem:[%s4] sm:$0xff] %v4455
    %4472 = vst [vmem:[%s4 + $0x8] sm:$0xff] %v4456
    %4473 = vst [vmem:[%s4 + $0x10] sm:$0xff] %v4457
    %4474 = vst [vmem:[%s4 + $0x18] sm:$0xff] %v4458
    %4475 = vst [vmem:[%s4 + $0x20] sm:$0xff] %v4459
    %4476 = vst [vmem:[%s4 + $0x28] sm:$0xff] %v4460
    %4477 = vst [vmem:[%s4 + $0x30] sm:$0xff] %v4461
    %4478 = vst [vmem:[%s4 + $0x38] sm:$0xff] %v4462
    %4479 = vst [vmem:[%s4 + $0x40] sm:$0xff] %v4463
    %4480 = vst [vmem:[%s4 + $0x48] sm:$0xff] %v4464
    %4481 = vst [vmem:[%s4 + $0x50] sm:$0xff] %v4465
    %4482 = vst [vmem:[%s4 + $0x58] sm:$0xff] %v4466
    %4483 = vst [vmem:[%s4 + $0x60] sm:$0xff] %v4467
    %4484 = vst [vmem:[%s4 + $0x68] sm:$0xff] %v4468
    %4485 = vst [vmem:[%s4 + $0x70] sm:$0xff] %v4469
    %4486 = vst [vmem:[%s4 + $0x78] sm:$0xff] %v4470
    // Predicated region
    $region30: #{rcab_forward.1} parent=1 // pred_check
      _
    $region31: #{rcab_forward.1} parent=1 // pred_check_branch
      %4488 = sbr.rel (0) target = $region33
    $region32: #{rcab_forward.1} parent=1 // pred_region
      _
    $region33: #{rcab_forward.1} parent=1 // pred_fallthru
      _
    // Predicated region
    $region34: #{rcab_forward.1} parent=1 // pred_check
      _
    $region35: #{rcab_forward.1} parent=1 // pred_check_branch
      %4490 = sbr.rel (0) target = $region37
    $region36: #{rcab_forward.1} parent=1 // pred_region
      _
    $region37: #{rcab_forward.1} parent=1 // pred_fallthru
      _
    %4491 = vsyncpa [#allocation3], 1
    %4492 = vsyncpa [#allocation5], 1

</llo_original>
